<compile_context>
chip_gen: v6e
topology: v6e:2x2x1
jax: 0.10.0
libtpu: 0.0.40
codegen_flags: <defaults>
</compile_context>

<pallas_src>
import functools

import jax
import jax.numpy as jnp
import numpy as np
from jax.experimental import pallas as pl
from jax.experimental.pallas import tpu as pltpu

BN_EPS = 1e-5
_VMEM_LIMIT = 64 * 1024 * 1024


def _round_up(x, m):
    return (x + m - 1) // m * m


def _choose_row_block(Lp, L, cin, cpad):
    """Pick the R tile so (input + output blocks, double-buffered) <= ~12 MiB."""
    per_row = 2 * (Lp * cin * 2) + 2 * (L * cpad * 4) + L * cpad * 4
    budget = 12 << 20                       # headroom under v7x's scoped VMEM
    blk = (budget // max(per_row, 1)) // 16 * 16
    return int(max(16, min(512, blk)))


# ------------------------------- kernels ------------------------------------

def _conv_tile(x_ref, w_ref):
    """Single fused im2col matmul for the current row tile.

    x_ref: (Lp, rows, Cin) bf16, Lp = L + K - 1 (halo along the slide axis)
    w_ref: (K*Cin, Cpad)   bf16, tap-major flattened conv weights
    returns (L*rows, Cpad) float32 conv output.
    """
    Lp, rows, cin = x_ref.shape
    kcin, _ = w_ref.shape
    K = kcin // cin
    L = Lp - (K - 1)
    # 7 cheap leading-axis slices -> one (rows, K*Cin) im2col tile -> one MXU dot.
    cols = [x_ref[k:k + L].reshape(L * rows, cin) for k in range(K)]
    im2col = jnp.concatenate(cols, axis=-1)                  # (L*rows, K*Cin)
    return jnp.dot(im2col, w_ref[...], preferred_element_type=jnp.float32)


def _cbr_stats_kernel(x_ref, w_ref, stat_ref):
    """Pass 1: accumulate global per-channel sum / sum-of-squares of conv(x)."""
    y = _conv_tile(x_ref, w_ref)                             # (rows, Cpad) f32
    s = jnp.sum(y, axis=0, keepdims=True)                    # (1, Cpad)
    s2 = jnp.sum(y * y, axis=0, keepdims=True)               # (1, Cpad)

    @pl.when(pl.program_id(0) == 0)
    def _init():
        stat_ref[...] = jnp.zeros_like(stat_ref)

    stat_ref[...] += jnp.concatenate([s, s2], axis=0)        # (2, Cpad)


def _cbr_apply_kernel(x_ref, w_ref, scale_ref, shift_ref, o_ref):
    """Pass 2: recompute conv tile, apply BN scale/shift, ReLU, store."""
    y = _conv_tile(x_ref, w_ref)                             # (rows, Cpad) f32
    y = y * scale_ref[...] + shift_ref[...]
    y = jnp.maximum(y, 0.0)
    o_ref[...] = y.reshape(o_ref.shape)                      # (L, rows, Cpad)


# --------------------- one CBR op (conv + BN + ReLU) ------------------------

def _cbr1d_conv_bn_relu(x_lrc, w_kio, gamma, beta, row_block=None):
    """Fused 1-D 'same' conv along the leading axis + train-mode BN + ReLU.

    x_lrc : (L, R, Cin) activations; w_kio : (K, Cin, Cout).
    Returns (L, R, Cout) float32.
    """
    L, R, Cin = x_lrc.shape
    K, _, Cout = w_kio.shape
    pad = (K - 1) // 2
    Lp = L + K - 1
    Cpad = _round_up(Cout, 128)             # lane-dense output stores / stats

    if row_block is None:
        row_block = _choose_row_block(Lp, L, Cin, Cpad)
    row_block = max(16, _round_up(row_block, 16))
    row_block = min(row_block, _round_up(R, 16))
    R_pad = _round_up(R, row_block)
    n_tiles = R_pad // row_block

    # Halo padding along the slide axis + zero rows up to the tile multiple.
    # Zero rows / zero-weight padded channels contribute exactly 0 to the sums.
    x_p = jnp.pad(x_lrc.astype(jnp.bfloat16),
                  ((pad, pad), (0, R_pad - R), (0, 0)))
    # (K, Cin, Cout) -> (K*Cin, Cpad), tap-major, matching the im2col layout.
    w_flat = jnp.pad(w_kio.reshape(K * Cin, Cout).astype(jnp.bfloat16),
                     ((0, 0), (0, Cpad - Cout)))
    g_p = jnp.pad(gamma.astype(jnp.float32), (0, Cpad - Cout), constant_values=1.0)
    b_p = jnp.pad(beta.astype(jnp.float32), (0, Cpad - Cout))

    x_spec = pl.BlockSpec((Lp, row_block, Cin), lambda r: (0, r, 0))
    w_spec = pl.BlockSpec((K * Cin, Cpad), lambda r: (0, 0))

    # ---- pass 1: global per-channel conv statistics (reduction over R tiles).
    stats = pl.pallas_call(
        _cbr_stats_kernel,
        out_shape=jax.ShapeDtypeStruct((2, Cpad), jnp.float32),
        grid=(n_tiles,),
        in_specs=[x_spec, w_spec],
        out_specs=pl.BlockSpec((2, Cpad), lambda r: (0, 0)),
        compiler_params=pltpu.CompilerParams(
            dimension_semantics=("arbitrary",),
            vmem_limit_bytes=_VMEM_LIMIT),
    )(x_p, w_flat)

    cnt = jnp.float32(L * R)                # real (unpadded) element count
    mean = stats[0] / cnt
    var = jnp.maximum(stats[1] / cnt - mean * mean, 0.0)
    # TODO(synk): sum/sumsq can lose precision for very large activations;
    # switch to a centred second pass (or Welford) if that regime matters.
    inv = jax.lax.rsqrt(var + BN_EPS)
    scale = (g_p * inv).reshape(1, Cpad)
    shift = (b_p - mean * g_p * inv).reshape(1, Cpad)

    # ---- pass 2: conv + BN scale/shift + ReLU; independent ('parallel') tiles.
    y = pl.pallas_call(
        _cbr_apply_kernel,
        out_shape=jax.ShapeDtypeStruct((L, R_pad, Cpad), jnp.float32),
        grid=(n_tiles,),
        in_specs=[x_spec, w_spec,
                  pl.BlockSpec((1, Cpad), lambda r: (0, 0)),
                  pl.BlockSpec((1, Cpad), lambda r: (0, 0))],
        out_specs=pl.BlockSpec((L, row_block, Cpad), lambda r: (0, r, 0)),
        compiler_params=pltpu.CompilerParams(
            dimension_semantics=("parallel",),
            vmem_limit_bytes=_VMEM_LIMIT),
    )(x_p, w_flat, scale, shift)

    return y[:, :R, :Cout]


def _cbr_op(x_nchw, kind, w_oihw, gamma, beta, row_block=None):
    """One Block op: Conv2d((1,7) or (7,1)) + BatchNorm2d(train) + ReLU."""
    N, Cin, H, W = x_nchw.shape
    Cout = w_oihw.shape[0]
    x_nchw = x_nchw.astype(jnp.bfloat16)          # feed the MXU bf16
    if kind == "1x7":   # Conv2d(Cin, Cout, (1, 7), padding=(0, 3)): slide along W
        w_kio = jnp.transpose(w_oihw[:, :, 0, :], (2, 1, 0))            # (7, Cin, Cout)
        x_lrc = jnp.transpose(x_nchw, (3, 0, 2, 1)).reshape(W, N * H, Cin)
        y = _cbr1d_conv_bn_relu(x_lrc, w_kio, gamma, beta, row_block)   # (W, N*H, Cout)
        y = y.reshape(W, N, H, Cout)
        return jnp.transpose(y, (1, 3, 2, 0))                           # (N, Cout, H, W)
    if kind == "7x1":   # Conv2d(Cin, Cout, (7, 1), padding=(3, 0)): slide along H
        w_kio = jnp.transpose(w_oihw[:, :, :, 0], (2, 1, 0))            # (7, Cin, Cout)
        x_lrc = jnp.transpose(x_nchw, (2, 0, 3, 1)).reshape(H, N * W, Cin)
        y = _cbr1d_conv_bn_relu(x_lrc, w_kio, gamma, beta, row_block)   # (H, N*W, Cout)
        y = y.reshape(H, N, W, Cout)
        return jnp.transpose(y, (1, 3, 0, 2))                           # (N, Cout, H, W)
    raise ValueError(f"unknown op kind: {kind}")


def block_forward(x, ops, aggr="avg", row_block=None):
    """Block.forward: apply each op to x (or x[i] if x is a list), aggregate.

    ops: list of (kind, conv_weight_OIHW, bn_gamma, bn_beta) tuples.
    """
    assert isinstance(ops, (list, tuple)) and len(ops) > 1, "oops"
    xs = list(x) if isinstance(x, (list, tuple)) else [x] * len(ops)
    outs = [_cbr_op(xi, kind, w, g, b, row_block)
            for xi, (kind, w, g, b) in zip(xs, ops)]
    if aggr == "avg":
        return sum(outs) / len(outs)
    if aggr == "cat":
        return jnp.concatenate(outs, axis=1)
    raise ValueError(aggr)


# -------------------- pure-JAX reference (torch semantics) ------------------

def _bn_relu_ref(y, gamma, beta):
    mean = jnp.mean(y, axis=(0, 2, 3), keepdims=True)
    var = jnp.mean(jnp.square(y - mean), axis=(0, 2, 3), keepdims=True)
    y = (y - mean) * jax.lax.rsqrt(var + BN_EPS)
    y = y * gamma.reshape(1, -1, 1, 1) + beta.reshape(1, -1, 1, 1)
    return jnp.maximum(y, 0.0)


def block_ref(x, w1, g1, b1, w2, g2, b2):
    """Same math with XLA convs; matches the kernel's bf16-input / f32-accum."""
    dn = ("NCHW", "OIHW", "NCHW")
    xb = x.astype(jnp.bfloat16)
    conv = functools.partial(jax.lax.conv_general_dilated,
                             window_strides=(1, 1), dimension_numbers=dn,
                             preferred_element_type=jnp.float32)
    ya = _bn_relu_ref(conv(xb, w1.astype(jnp.bfloat16), padding=((0, 0), (3, 3))), g1, b1)
    yb = _bn_relu_ref(conv(xb, w2.astype(jnp.bfloat16), padding=((3, 3), (0, 0))), g2, b2)
    return (ya + yb) / 2


if __name__ == "__main__":
    N, Cin, Cout, H, W = 2, 4, 8, 16, 16

    key = jax.random.PRNGKey(0)
    kx, kw1, kw2, kg1, kb1, kg2, kb2 = jax.random.split(key, 7)
    x = jax.random.normal(kx, (N, Cin, H, W), jnp.float32)
    w1 = jax.random.normal(kw1, (Cout, Cin, 1, 7), jnp.float32) * 0.2
    w2 = jax.random.normal(kw2, (Cout, Cin, 7, 1), jnp.float32) * 0.2
    g1 = jax.random.uniform(kg1, (Cout,), jnp.float32, 0.5, 1.5)
    b1 = jax.random.normal(kb1, (Cout,), jnp.float32) * 0.1
    g2 = jax.random.uniform(kg2, (Cout,), jnp.float32, 0.5, 1.5)
    b2 = jax.random.normal(kb2, (Cout,), jnp.float32) * 0.1

    @jax.jit
    def run(x, w1, g1, b1, w2, g2, b2):
        ops = [("1x7", w1, g1, b1), ("7x1", w2, g2, b2)]
        # row_block=16 keeps >1 grid step at this toy size so the cross-tile
        # BN accumulation path is exercised; pass None to auto-size from VMEM.
        return block_forward(x, ops, aggr="avg", row_block=16)

    out = jax.block_until_ready(run(x, w1, g1, b1, w2, g2, b2))
    assert out.shape == (N, Cout, H, W), out.shape

    ref = jax.block_until_ready(block_ref(x, w1, g1, b1, w2, g2, b2))
    np.testing.assert_allclose(np.asarray(out), np.asarray(ref),
                               atol=2e-3, rtol=2e-3)
    print("KERNEL_OK")
</pallas_src>

<mosaic_0001>
module attributes {stable_mosaic.version = 11 : i64} {
  func.func @_cbr_apply_kernel(%arg0: i32, %arg1: memref<22x16x4xbf16, #tpu.memory_space<vmem>>, %arg2: memref<28x128xbf16, #tpu.memory_space<vmem>>, %arg3: memref<1x128xf32, #tpu.memory_space<vmem>>, %arg4: memref<1x128xf32, #tpu.memory_space<vmem>>, %arg5: memref<16x16x128xf32, #tpu.memory_space<vmem>>) attributes {dimension_semantics = [#tpu.dimension_semantics<parallel>], iteration_bounds = array<i64: 2>, scalar_prefetch = 0 : i64, scratch_operands = 0 : i64, tpu.core_type = #tpu.core_type<tc>, window_params = [{transform_indices = @transform_0, window_bounds = array<i64: 22, 16, 4>}, {pipeline_mode = #tpu.pipeline_mode<synchronous>, transform_indices = @transform_1, window_bounds = array<i64: 28, 128>}, {pipeline_mode = #tpu.pipeline_mode<synchronous>, transform_indices = @transform_2, window_bounds = array<i64: 1, 128>}, {pipeline_mode = #tpu.pipeline_mode<synchronous>, transform_indices = @transform_3, window_bounds = array<i64: 1, 128>}, {transform_indices = @transform_4, window_bounds = array<i64: 16, 16, 128>}]} {
    %c0 = arith.constant 0 : index
    %c0_0 = arith.constant 0 : index
    %c0_1 = arith.constant 0 : index
    %0 = vector.load %arg1[%c0, %c0_0, %c0_1] : memref<22x16x4xbf16, #tpu.memory_space<vmem>>, vector<16x16x4xbf16>
    %1 = vector.shape_cast %0 : vector<16x16x4xbf16> to vector<256x4xbf16>
    %c1 = arith.constant 1 : index
    %c0_2 = arith.constant 0 : index
    %c0_3 = arith.constant 0 : index
    %2 = vector.load %arg1[%c1, %c0_2, %c0_3] : memref<22x16x4xbf16, #tpu.memory_space<vmem>>, vector<16x16x4xbf16>
    %3 = vector.shape_cast %2 : vector<16x16x4xbf16> to vector<256x4xbf16>
    %c2 = arith.constant 2 : index
    %c0_4 = arith.constant 0 : index
    %c0_5 = arith.constant 0 : index
    %4 = vector.load %arg1[%c2, %c0_4, %c0_5] : memref<22x16x4xbf16, #tpu.memory_space<vmem>>, vector<16x16x4xbf16>
    %5 = vector.shape_cast %4 : vector<16x16x4xbf16> to vector<256x4xbf16>
    %c3 = arith.constant 3 : index
    %c0_6 = arith.constant 0 : index
    %c0_7 = arith.constant 0 : index
    %6 = vector.load %arg1[%c3, %c0_6, %c0_7] : memref<22x16x4xbf16, #tpu.memory_space<vmem>>, vector<16x16x4xbf16>
    %7 = vector.shape_cast %6 : vector<16x16x4xbf16> to vector<256x4xbf16>
    %c4 = arith.constant 4 : index
    %c0_8 = arith.constant 0 : index
    %c0_9 = arith.constant 0 : index
    %8 = vector.load %arg1[%c4, %c0_8, %c0_9] : memref<22x16x4xbf16, #tpu.memory_space<vmem>>, vector<16x16x4xbf16>
    %9 = vector.shape_cast %8 : vector<16x16x4xbf16> to vector<256x4xbf16>
    %c5 = arith.constant 5 : index
    %c0_10 = arith.constant 0 : index
    %c0_11 = arith.constant 0 : index
    %10 = vector.load %arg1[%c5, %c0_10, %c0_11] : memref<22x16x4xbf16, #tpu.memory_space<vmem>>, vector<16x16x4xbf16>
    %11 = vector.shape_cast %10 : vector<16x16x4xbf16> to vector<256x4xbf16>
    %c6 = arith.constant 6 : index
    %c0_12 = arith.constant 0 : index
    %c0_13 = arith.constant 0 : index
    %12 = vector.load %arg1[%c6, %c0_12, %c0_13] : memref<22x16x4xbf16, #tpu.memory_space<vmem>>, vector<16x16x4xbf16>
    %13 = vector.shape_cast %12 : vector<16x16x4xbf16> to vector<256x4xbf16>
    %14 = tpu.concatenate %1, %3, %5, %7, %9, %11, %13 in 1 : vector<256x4xbf16>, vector<256x4xbf16>, vector<256x4xbf16>, vector<256x4xbf16>, vector<256x4xbf16>, vector<256x4xbf16>, vector<256x4xbf16> -> vector<256x28xbf16>
    %c0_14 = arith.constant 0 : index
    %c0_15 = arith.constant 0 : index
    %15 = vector.load %arg2[%c0_14, %c0_15] : memref<28x128xbf16, #tpu.memory_space<vmem>>, vector<28x128xbf16>
    %cst = arith.constant dense<0.000000e+00> : vector<256x128xf32>
    %16 = tpu.matmul %14, %15, %cst {dimension_numbers = #tpu.dot_dimension_numbers<[1], [0], [0], [1], [0, 0, 1, 1], [], []>} : vector<256x28xbf16>, vector<28x128xbf16>, vector<256x128xf32> -> vector<256x128xf32>
    %c0_16 = arith.constant 0 : index
    %c0_17 = arith.constant 0 : index
    %17 = vector.load %arg3[%c0_16, %c0_17] : memref<1x128xf32, #tpu.memory_space<vmem>>, vector<1x128xf32>
    %18 = vector.broadcast %17 : vector<1x128xf32> to vector<256x128xf32>
    %19 = arith.mulf %16, %18 : vector<256x128xf32>
    %c0_18 = arith.constant 0 : index
    %c0_19 = arith.constant 0 : index
    %20 = vector.load %arg4[%c0_18, %c0_19] : memref<1x128xf32, #tpu.memory_space<vmem>>, vector<1x128xf32>
    %21 = vector.broadcast %20 : vector<1x128xf32> to vector<256x128xf32>
    %22 = arith.addf %19, %21 : vector<256x128xf32>
    %cst_20 = arith.constant 0.000000e+00 : f32
    %23 = vector.broadcast %cst_20 : f32 to vector<256x128xf32>
    %24 = arith.maximumf %22, %23 : vector<256x128xf32>
    %25 = vector.shape_cast %24 : vector<256x128xf32> to vector<16x16x128xf32>
    %c0_21 = arith.constant 0 : index
    %c0_22 = arith.constant 0 : index
    %c0_23 = arith.constant 0 : index
    %26 = vector.load %arg5[%c0_21, %c0_22, %c0_23] : memref<16x16x128xf32, #tpu.memory_space<vmem>>, vector<16x16x128xf32>
    tpu.vector_store %arg5[%c0_21, %c0_22, %c0_23], %25 {strides = array<i32>} : memref<16x16x128xf32, #tpu.memory_space<vmem>>, vector<16x16x128xf32>,
    return
  }
  func.func @transform_0(%arg0: i32) -> (i32, i32, i32) {
    %c0_i32 = arith.constant 0 : i32
    %c0_i32_0 = arith.constant 0 : i32
    %c0_i32_1 = arith.constant 0 : i32
    return %c0_i32, %arg0, %c0_i32_0 : i32, i32, i32
  }
  func.func @transform_1(%arg0: i32) -> (i32, i32) {
    %c0_i32 = arith.constant 0 : i32
    %c0_i32_0 = arith.constant 0 : i32
    %c0_i32_1 = arith.constant 0 : i32
    return %c0_i32, %c0_i32_0 : i32, i32
  }
  func.func @transform_2(%arg0: i32) -> (i32, i32) {
    %c0_i32 = arith.constant 0 : i32
    %c0_i32_0 = arith.constant 0 : i32
    %c0_i32_1 = arith.constant 0 : i32
    return %c0_i32, %c0_i32_0 : i32, i32
  }
  func.func @transform_3(%arg0: i32) -> (i32, i32) {
    %c0_i32 = arith.constant 0 : i32
    %c0_i32_0 = arith.constant 0 : i32
    %c0_i32_1 = arith.constant 0 : i32
    return %c0_i32, %c0_i32_0 : i32, i32
  }
  func.func @transform_4(%arg0: i32) -> (i32, i32, i32) {
    %c0_i32 = arith.constant 0 : i32
    %c0_i32_0 = arith.constant 0 : i32
    %c0_i32_1 = arith.constant 0 : i32
    return %c0_i32, %arg0, %c0_i32_0 : i32, i32, i32
  }
}

module attributes {stable_mosaic.version = 11 : i64} {
  func.func @_cbr_stats_kernel(%arg0: i32, %arg1: memref<22x16x4xbf16, #tpu.memory_space<vmem>>, %arg2: memref<28x128xbf16, #tpu.memory_space<vmem>>, %arg3: memref<2x128xf32, #tpu.memory_space<vmem>>) attributes {dimension_semantics = [#tpu.dimension_semantics<arbitrary>], iteration_bounds = array<i64: 2>, scalar_prefetch = 0 : i64, scratch_operands = 0 : i64, tpu.core_type = #tpu.core_type<tc>, window_params = [{transform_indices = @transform_0, window_bounds = array<i64: 22, 16, 4>}, {pipeline_mode = #tpu.pipeline_mode<synchronous>, transform_indices = @transform_1, window_bounds = array<i64: 28, 128>}, {pipeline_mode = #tpu.pipeline_mode<synchronous>, transform_indices = @transform_2, window_bounds = array<i64: 2, 128>}]} {
    %c0 = arith.constant 0 : index
    %c0_0 = arith.constant 0 : index
    %c0_1 = arith.constant 0 : index
    %0 = vector.load %arg1[%c0, %c0_0, %c0_1] : memref<22x16x4xbf16, #tpu.memory_space<vmem>>, vector<16x16x4xbf16>
    %1 = vector.shape_cast %0 : vector<16x16x4xbf16> to vector<256x4xbf16>
    %c1 = arith.constant 1 : index
    %c0_2 = arith.constant 0 : index
    %c0_3 = arith.constant 0 : index
    %2 = vector.load %arg1[%c1, %c0_2, %c0_3] : memref<22x16x4xbf16, #tpu.memory_space<vmem>>, vector<16x16x4xbf16>
    %3 = vector.shape_cast %2 : vector<16x16x4xbf16> to vector<256x4xbf16>
    %c2 = arith.constant 2 : index
    %c0_4 = arith.constant 0 : index
    %c0_5 = arith.constant 0 : index
    %4 = vector.load %arg1[%c2, %c0_4, %c0_5] : memref<22x16x4xbf16, #tpu.memory_space<vmem>>, vector<16x16x4xbf16>
    %5 = vector.shape_cast %4 : vector<16x16x4xbf16> to vector<256x4xbf16>
    %c3 = arith.constant 3 : index
    %c0_6 = arith.constant 0 : index
    %c0_7 = arith.constant 0 : index
    %6 = vector.load %arg1[%c3, %c0_6, %c0_7] : memref<22x16x4xbf16, #tpu.memory_space<vmem>>, vector<16x16x4xbf16>
    %7 = vector.shape_cast %6 : vector<16x16x4xbf16> to vector<256x4xbf16>
    %c4 = arith.constant 4 : index
    %c0_8 = arith.constant 0 : index
    %c0_9 = arith.constant 0 : index
    %8 = vector.load %arg1[%c4, %c0_8, %c0_9] : memref<22x16x4xbf16, #tpu.memory_space<vmem>>, vector<16x16x4xbf16>
    %9 = vector.shape_cast %8 : vector<16x16x4xbf16> to vector<256x4xbf16>
    %c5 = arith.constant 5 : index
    %c0_10 = arith.constant 0 : index
    %c0_11 = arith.constant 0 : index
    %10 = vector.load %arg1[%c5, %c0_10, %c0_11] : memref<22x16x4xbf16, #tpu.memory_space<vmem>>, vector<16x16x4xbf16>
    %11 = vector.shape_cast %10 : vector<16x16x4xbf16> to vector<256x4xbf16>
    %c6 = arith.constant 6 : index
    %c0_12 = arith.constant 0 : index
    %c0_13 = arith.constant 0 : index
    %12 = vector.load %arg1[%c6, %c0_12, %c0_13] : memref<22x16x4xbf16, #tpu.memory_space<vmem>>, vector<16x16x4xbf16>
    %13 = vector.shape_cast %12 : vector<16x16x4xbf16> to vector<256x4xbf16>
    %14 = tpu.concatenate %1, %3, %5, %7, %9, %11, %13 in 1 : vector<256x4xbf16>, vector<256x4xbf16>, vector<256x4xbf16>, vector<256x4xbf16>, vector<256x4xbf16>, vector<256x4xbf16>, vector<256x4xbf16> -> vector<256x28xbf16>
    %c0_14 = arith.constant 0 : index
    %c0_15 = arith.constant 0 : index
    %15 = vector.load %arg2[%c0_14, %c0_15] : memref<28x128xbf16, #tpu.memory_space<vmem>>, vector<28x128xbf16>
    %cst = arith.constant dense<0.000000e+00> : vector<256x128xf32>
    %16 = tpu.matmul %14, %15, %cst {dimension_numbers = #tpu.dot_dimension_numbers<[1], [0], [0], [1], [0, 0, 1, 1], [], []>} : vector<256x28xbf16>, vector<28x128xbf16>, vector<256x128xf32> -> vector<256x128xf32>
    %cst_16 = arith.constant dense<0.000000e+00> : vector<128xf32>
    %17 = vector.multi_reduction <add>, %16, %cst_16 [0] : vector<256x128xf32> to vector<128xf32>
    %18 = vector.shape_cast %17 : vector<128xf32> to vector<1x128xf32>
    %19 = arith.mulf %16, %16 : vector<256x128xf32>
    %cst_17 = arith.constant dense<0.000000e+00> : vector<128xf32>
    %20 = vector.multi_reduction <add>, %19, %cst_17 [0] : vector<256x128xf32> to vector<128xf32>
    %21 = vector.shape_cast %20 : vector<128xf32> to vector<1x128xf32>
    %c0_i32 = arith.constant 0 : i32
    %22 = arith.cmpi eq, %arg0, %c0_i32 : i32
    %23 = arith.extui %22 : i1 to i32
    %c0_i32_18 = arith.constant 0 : i32
    %24 = arith.cmpi ne, %23, %c0_i32_18 : i32
    scf.if %24 {
      %cst_23 = arith.constant 0.000000e+00 : f32
      %29 = vector.broadcast %cst_23 : f32 to vector<2x128xf32>
      %c0_24 = arith.constant 0 : index
      %c0_25 = arith.constant 0 : index
      %30 = vector.load %arg3[%c0_24, %c0_25] : memref<2x128xf32, #tpu.memory_space<vmem>>, vector<2x128xf32>
      tpu.vector_store %arg3[%c0_24, %c0_25], %29 {strides = array<i32>} : memref<2x128xf32, #tpu.memory_space<vmem>>, vector<2x128xf32>,
    } else {
    }
    %c0_19 = arith.constant 0 : index
    %c0_20 = arith.constant 0 : index
    %25 = vector.load %arg3[%c0_19, %c0_20] : memref<2x128xf32, #tpu.memory_space<vmem>>, vector<2x128xf32>
    %26 = tpu.concatenate %18, %21 in 0 : vector<1x128xf32>, vector<1x128xf32> -> vector<2x128xf32>
    %27 = arith.addf %25, %26 : vector<2x128xf32>
    %c0_21 = arith.constant 0 : index
    %c0_22 = arith.constant 0 : index
    %28 = vector.load %arg3[%c0_21, %c0_22] : memref<2x128xf32, #tpu.memory_space<vmem>>, vector<2x128xf32>
    tpu.vector_store %arg3[%c0_21, %c0_22], %27 {strides = array<i32>} : memref<2x128xf32, #tpu.memory_space<vmem>>, vector<2x128xf32>,
    return
  }
  func.func @transform_0(%arg0: i32) -> (i32, i32, i32) {
    %c0_i32 = arith.constant 0 : i32
    %c0_i32_0 = arith.constant 0 : i32
    %c0_i32_1 = arith.constant 0 : i32
    return %c0_i32, %arg0, %c0_i32_0 : i32, i32, i32
  }
  func.func @transform_1(%arg0: i32) -> (i32, i32) {
    %c0_i32 = arith.constant 0 : i32
    %c0_i32_0 = arith.constant 0 : i32
    %c0_i32_1 = arith.constant 0 : i32
    return %c0_i32, %c0_i32_0 : i32, i32
  }
  func.func @transform_2(%arg0: i32) -> (i32, i32) {
    %c0_i32 = arith.constant 0 : i32
    %c0_i32_0 = arith.constant 0 : i32
    %c0_i32_1 = arith.constant 0 : i32
    return %c0_i32, %c0_i32_0 : i32, i32
  }
}

</mosaic_0001>

<llo_original>
// kernel: run.4
$region0: #{run.4}
  #allocation0 [shape = 'u32[]', space=smem, size = 0x4, offset = 0x4, fixed_abs, tag = 'smem constant byte address 0x4 - core index']
  #allocation1 [shape = 'u32[144,128]{1,0:T(1,128)}', space=vmem, size = 0x12000, scoped, tag = 'internal scratch']
  %s0 = inlined_call_operand.vmem [shape: bf16[22,32,4], index: 0, kind: input, shape index: {}]
  %s1 = inlined_call_operand.vmem [shape: bf16[28,128], index: 1, kind: input, shape index: {}]
  %s2 = inlined_call_operand.vmem [shape: f32[2,128], index: 2, kind: output, shape index: {}]
  %s3 = sld [smem:[#allocation0]]
  $region86: #{run.4} parent=0
    _
  %s5 = ssub.s32 1, %s3
  %s6 = scalar_select 0, %s5, %s3
  $region1: #{run.4} parent=0
    #allocation2 [shape = 'u8[180224]{0}', space=vmem, size = 0x2c000, scoped, tag = 'input window, operand 0']
    loop: start=0, step=1, limit=4
    $region2: #{run.4} parent=1 // loop_pre_header
      _
    $region3: #{run.4} parent=1 // loop_header
      %s8 = sphi 0, %s12
      %p9 = scmp.ge.s32.totalorder %s8, 4
      %s18 = sphi 0, %s20
      %s21 = sphi 0, %s18
      %s22 = sphi 0, %s21
      %s38 = sphi 0, %s22
      %s42 = sphi 0, %s42
      %s44 = sphi 0, %s42
      %s45 = sphi 0, %s44
      %s59 = sphi 0, %s45
      %s63 = sphi 0, %s63
      %s65 = sphi 0, %s63
      %s66 = sphi 0, %s65
      %s80 = sphi 0, %s66
    $region4: #{run.4} parent=1 // loop_header_branch
      %11 = sbr.rel (%p9) target = $region8
    $region5: #{run.4} parent=1 // loop_body
      %s13 = ssub.s32 %s8, 1
      %s14 = ssub.s32 %s8, 2
      %s15 = sadd.s32 %s8, 1
      %s16 = ssub.s32 %s8, %s15
      %p17 = scmp.eq.s32.totalorder %s16, 0
      %s19 = sadd.s32 %s18, 1
      %s20 = scalar_select %p17, %s18, %s19
      %p23 = pneg %p17
      %p24 = scmp.eq.s32.totalorder %s8, 1
      %p25 = por %p23, %p24
      %p26 = scmp.ne.s32.totalorder %s18, %s21
      %p27 = scmp.eq.s32.totalorder %s8, 0
      %p28 = por %p26, %p27
      %p29 = scmp.ne.s32.totalorder %s18, %s21
      %p30 = scmp.eq.s32.totalorder %s13, 1
      %p31 = por %p29, %p30
      %p32 = scmp.ne.s32.totalorder %s21, %s22
      %p33 = scmp.eq.s32.totalorder %s13, 0
      %p34 = por %p32, %p33
      %p35 = scmp.ne.s32.totalorder %s21, %s22
      %p36 = scmp.eq.s32.totalorder %s14, 1
      %p37 = por %p35, %p36
      %p39 = scmp.ne.s32.totalorder %s22, %s38
      %p40 = scmp.eq.s32.totalorder %s14, 0
      %p41 = por %p39, %p40
      %s43 = sadd.s32 %s42, 1
      %p46 = scmp.eq.s32.totalorder %s8, 1
      %p47 = scmp.ne.s32.totalorder %s42, %s44
      %p48 = scmp.eq.s32.totalorder %s8, 0
      %p49 = por %p47, %p48
      %p50 = scmp.ne.s32.totalorder %s42, %s44
      %p51 = scmp.eq.s32.totalorder %s13, 1
      %p52 = por %p50, %p51
      %p53 = scmp.ne.s32.totalorder %s44, %s45
      %p54 = scmp.eq.s32.totalorder %s13, 0
      %p55 = por %p53, %p54
      %p56 = scmp.ne.s32.totalorder %s44, %s45
      %p57 = scmp.eq.s32.totalorder %s14, 1
      %p58 = por %p56, %p57
      %p60 = scmp.ne.s32.totalorder %s45, %s59
      %p61 = scmp.eq.s32.totalorder %s14, 0
      %p62 = por %p60, %p61
      %s64 = sadd.s32 %s63, 1
      %p67 = scmp.eq.s32.totalorder %s8, 1
      %p68 = scmp.ne.s32.totalorder %s63, %s65
      %p69 = scmp.eq.s32.totalorder %s8, 0
      %p70 = por %p68, %p69
      %p71 = scmp.ne.s32.totalorder %s63, %s65
      %p72 = scmp.eq.s32.totalorder %s13, 1
      %p73 = por %p71, %p72
      %p74 = scmp.ne.s32.totalorder %s65, %s66
      %p75 = scmp.eq.s32.totalorder %s13, 0
      %p76 = por %p74, %p75
      %p77 = scmp.ne.s32.totalorder %s65, %s66
      %p78 = scmp.eq.s32.totalorder %s14, 1
      %p79 = por %p77, %p78
      %p81 = scmp.ne.s32.totalorder %s66, %s80
      %p82 = scmp.eq.s32.totalorder %s14, 0
      %p83 = por %p81, %p82
      %p84 = scmp.le.s32.totalorder 1, %s8
      %p85 = scmp.lt.s32.totalorder %s8, 3
      %p86 = pnand %p84, %p85
      %p87 = pneg %p86
      // Predicated region
      $region9: #{run.4} parent=5 // pred_check
        _
      $region10: #{run.4} parent=5 // pred_check_branch
        %89 = sbr.rel (%p86) target = $region12
      $region11: #{run.4} parent=5 // pred_region
        %s90 = ssub.s32 %s8, 1
        // Predicated region
        $region13: #{run.4} parent=11 // pred_check
          %p91 = pneg %p55
        $region14: #{run.4} parent=11 // pred_check_branch
          %93 = sbr.rel (%p91) target = $region16
        $region15: #{run.4} parent=11 // pred_region
          _
        $region16: #{run.4} parent=11 // pred_fallthru
          _
      $region12: #{run.4} parent=5 // pred_fallthru
        _
      %p94 = scmp.lt.s32.totalorder %s8, 2
      // Predicated region
      $region17: #{run.4} parent=5 // pred_check
        %p95 = pneg %p94
      $region18: #{run.4} parent=5 // pred_check_branch
        %97 = sbr.rel (%p95) target = $region20
      $region19: #{run.4} parent=5 // pred_region
        // Predicated region
        $region21: #{run.4} parent=19 // pred_check
          %p98 = pneg %p28
        $region22: #{run.4} parent=19 // pred_check_branch
          %100 = sbr.rel (%p98) target = $region24
        $region23: #{run.4} parent=19 // pred_region
          %s101 = sand.u32 %s18, 1
          %s102 = sand.u32 %s18, 1
          %s103 = smul.addr %s102, 176
          %s104 = scalar_lea.vmem [#allocation2], %s103
          %s105 = smul.u32 2, %s8
          %s106 = smul.addr %s105, 4
          %s107 = scalar_lea.vmem %s0, %s106
          // Predicated region
          $region25: #{run.4} parent=23 // pred_check
            _
          $region26: #{run.4} parent=23 // pred_check_branch
            %109 = sbr.rel (0) target = $region28
          $region27: #{run.4} parent=23 // pred_region
            // Predicated region
            $region29: #{run.4} parent=27 // pred_check
              _
            $region30: #{run.4} parent=27 // pred_check_branch
              %111 = sbr.rel target = $region32
            $region31: #{run.4} parent=27 // pred_region
              // Predicated region
              $region44: #{run.4} parent=31 // pred_check
                _
              $region45: #{run.4} parent=31 // pred_check_branch
                %213 = sbr.rel (0) target = $region47
              $region46: #{run.4} parent=31 // pred_region
                loop: start=0, step=1, limit=1
                $region48: #{run.4} parent=46 // loop_pre_header
                  _
                $region49: #{run.4} parent=46 // loop_header
                  %s215 = sphi 0, %s219
                  %p216 = scmp.ge.s32.totalorder %s215, 1
                  %s220 = sphi %s107, %s107
                  %s221 = sphi %s104, %s104
                $region50: #{run.4} parent=46 // loop_header_branch
                  %218 = sbr.rel (%p216) target = $region54
                $region51: #{run.4} parent=46 // loop_body
                  _
                $region52: #{run.4} parent=46 // loop_footer
                  %s219 = sadd.s32 1, %s215
                $region53: #{run.4} parent=46 // loop_footer_branch
                  %214 = sbr.rel target = $region49
                $region54: #{run.4} parent=46 // loop_exit
                  _
                %s223 = ssub.s32 16, 1
                loop: start=0, step=1, limit=1
                $region55: #{run.4} parent=46 // loop_pre_header
                  _
                $region56: #{run.4} parent=46 // loop_header
                  %s225 = sphi 0, %s229
                  %p226 = scmp.ge.s32.totalorder %s225, 1
                  %s230 = sphi %s107, %s107
                  %s231 = sphi %s104, %s104
                $region57: #{run.4} parent=46 // loop_header_branch
                  %228 = sbr.rel (%p226) target = $region61
                $region58: #{run.4} parent=46 // loop_body
                  %v232 = vld [vmem:[%s230] sm:%s223]
                  %233 = vst [vmem:[%s231] sm:%s223] %v232
                  %v234 = vld [vmem:[%s230 + $0x4] sm:%s223]
                  %235 = vst [vmem:[%s231 + $0x4] sm:%s223] %v234
                  %v236 = vld [vmem:[%s230 + $0x10] sm:%s223]
                  %237 = vst [vmem:[%s231 + $0x8] sm:%s223] %v236
                  %v238 = vld [vmem:[%s230 + $0x14] sm:%s223]
                  %239 = vst [vmem:[%s231 + $0xc] sm:%s223] %v238
                  %v240 = vld [vmem:[%s230 + $0x20] sm:%s223]
                  %241 = vst [vmem:[%s231 + $0x10] sm:%s223] %v240
                  %v242 = vld [vmem:[%s230 + $0x24] sm:%s223]
                  %243 = vst [vmem:[%s231 + $0x14] sm:%s223] %v242
                  %v244 = vld [vmem:[%s230 + $0x30] sm:%s223]
                  %245 = vst [vmem:[%s231 + $0x18] sm:%s223] %v244
                  %v246 = vld [vmem:[%s230 + $0x34] sm:%s223]
                  %247 = vst [vmem:[%s231 + $0x1c] sm:%s223] %v246
                  %v248 = vld [vmem:[%s230 + $0x40] sm:%s223]
                  %249 = vst [vmem:[%s231 + $0x20] sm:%s223] %v248
                  %v250 = vld [vmem:[%s230 + $0x44] sm:%s223]
                  %251 = vst [vmem:[%s231 + $0x24] sm:%s223] %v250
                  %v252 = vld [vmem:[%s230 + $0x50] sm:%s223]
                  %253 = vst [vmem:[%s231 + $0x28] sm:%s223] %v252
                  %v254 = vld [vmem:[%s230 + $0x54] sm:%s223]
                  %255 = vst [vmem:[%s231 + $0x2c] sm:%s223] %v254
                  %v256 = vld [vmem:[%s230 + $0x60] sm:%s223]
                  %257 = vst [vmem:[%s231 + $0x30] sm:%s223] %v256
                  %v258 = vld [vmem:[%s230 + $0x64] sm:%s223]
                  %259 = vst [vmem:[%s231 + $0x34] sm:%s223] %v258
                  %v260 = vld [vmem:[%s230 + $0x70] sm:%s223]
                  %261 = vst [vmem:[%s231 + $0x38] sm:%s223] %v260
                  %v262 = vld [vmem:[%s230 + $0x74] sm:%s223]
                  %263 = vst [vmem:[%s231 + $0x3c] sm:%s223] %v262
                  %v264 = vld [vmem:[%s230 + $0x80] sm:%s223]
                  %265 = vst [vmem:[%s231 + $0x40] sm:%s223] %v264
                  %v266 = vld [vmem:[%s230 + $0x84] sm:%s223]
                  %267 = vst [vmem:[%s231 + $0x44] sm:%s223] %v266
                  %v268 = vld [vmem:[%s230 + $0x90] sm:%s223]
                  %269 = vst [vmem:[%s231 + $0x48] sm:%s223] %v268
                  %v270 = vld [vmem:[%s230 + $0x94] sm:%s223]
                  %271 = vst [vmem:[%s231 + $0x4c] sm:%s223] %v270
                  %v272 = vld [vmem:[%s230 + $0xa0] sm:%s223]
                  %273 = vst [vmem:[%s231 + $0x50] sm:%s223] %v272
                  %v274 = vld [vmem:[%s230 + $0xa4] sm:%s223]
                  %275 = vst [vmem:[%s231 + $0x54] sm:%s223] %v274
                  %v276 = vld [vmem:[%s230 + $0xb0] sm:%s223]
                  %277 = vst [vmem:[%s231 + $0x58] sm:%s223] %v276
                  %v278 = vld [vmem:[%s230 + $0xb4] sm:%s223]
                  %279 = vst [vmem:[%s231 + $0x5c] sm:%s223] %v278
                  %v280 = vld [vmem:[%s230 + $0xc0] sm:%s223]
                  %281 = vst [vmem:[%s231 + $0x60] sm:%s223] %v280
                  %v282 = vld [vmem:[%s230 + $0xc4] sm:%s223]
                  %283 = vst [vmem:[%s231 + $0x64] sm:%s223] %v282
                  %v284 = vld [vmem:[%s230 + $0xd0] sm:%s223]
                  %285 = vst [vmem:[%s231 + $0x68] sm:%s223] %v284
                  %v286 = vld [vmem:[%s230 + $0xd4] sm:%s223]
                  %287 = vst [vmem:[%s231 + $0x6c] sm:%s223] %v286
                  %v288 = vld [vmem:[%s230 + $0xe0] sm:%s223]
                  %289 = vst [vmem:[%s231 + $0x70] sm:%s223] %v288
                  %v290 = vld [vmem:[%s230 + $0xe4] sm:%s223]
                  %291 = vst [vmem:[%s231 + $0x74] sm:%s223] %v290
                  %v292 = vld [vmem:[%s230 + $0xf0] sm:%s223]
                  %293 = vst [vmem:[%s231 + $0x78] sm:%s223] %v292
                  %v294 = vld [vmem:[%s230 + $0xf4] sm:%s223]
                  %295 = vst [vmem:[%s231 + $0x7c] sm:%s223] %v294
                  %v296 = vld [vmem:[%s230 + $0x100] sm:%s223]
                  %297 = vst [vmem:[%s231 + $0x80] sm:%s223] %v296
                  %v298 = vld [vmem:[%s230 + $0x104] sm:%s223]
                  %299 = vst [vmem:[%s231 + $0x84] sm:%s223] %v298
                  %v300 = vld [vmem:[%s230 + $0x110] sm:%s223]
                  %301 = vst [vmem:[%s231 + $0x88] sm:%s223] %v300
                  %v302 = vld [vmem:[%s230 + $0x114] sm:%s223]
                  %303 = vst [vmem:[%s231 + $0x8c] sm:%s223] %v302
                  %v304 = vld [vmem:[%s230 + $0x120] sm:%s223]
                  %305 = vst [vmem:[%s231 + $0x90] sm:%s223] %v304
                  %v306 = vld [vmem:[%s230 + $0x124] sm:%s223]
                  %307 = vst [vmem:[%s231 + $0x94] sm:%s223] %v306
                  %v308 = vld [vmem:[%s230 + $0x130] sm:%s223]
                  %309 = vst [vmem:[%s231 + $0x98] sm:%s223] %v308
                  %v310 = vld [vmem:[%s230 + $0x134] sm:%s223]
                  %311 = vst [vmem:[%s231 + $0x9c] sm:%s223] %v310
                  %v312 = vld [vmem:[%s230 + $0x140] sm:%s223]
                  %313 = vst [vmem:[%s231 + $0xa0] sm:%s223] %v312
                  %v314 = vld [vmem:[%s230 + $0x144] sm:%s223]
                  %315 = vst [vmem:[%s231 + $0xa4] sm:%s223] %v314
                  %v316 = vld [vmem:[%s230 + $0x150] sm:%s223]
                  %317 = vst [vmem:[%s231 + $0xa8] sm:%s223] %v316
                  %v318 = vld [vmem:[%s230 + $0x154] sm:%s223]
                  %319 = vst [vmem:[%s231 + $0xac] sm:%s223] %v318
                $region59: #{run.4} parent=46 // loop_footer
                  %s229 = sadd.s32 1, %s225
                $region60: #{run.4} parent=46 // loop_footer_branch
                  %224 = sbr.rel target = $region56
                $region61: #{run.4} parent=46 // loop_exit
                  _
              $region47: #{run.4} parent=31 // pred_fallthru
                _
            $region32: #{run.4} parent=27 // pred_fallthru
              _
            // Predicated region
            $region33: #{run.4} parent=27 // pred_check
              _
            $region34: #{run.4} parent=27 // pred_check_branch
              %113 = sbr.rel (0) target = $region36
            $region35: #{run.4} parent=27 // pred_region
              %s115 = ssub.s32 16, 1
              loop: start=0, step=1, limit=1
              $region37: #{run.4} parent=35 // loop_pre_header
                _
              $region38: #{run.4} parent=35 // loop_header
                %s117 = sphi 0, %s121
                %p118 = scmp.ge.s32.totalorder %s117, 1
                %s122 = sphi %s107, %s107
                %s123 = sphi %s104, %s104
              $region39: #{run.4} parent=35 // loop_header_branch
                %120 = sbr.rel (%p118) target = $region43
              $region40: #{run.4} parent=35 // loop_body
                %v124 = vld [vmem:[%s122] sm:%s115]
                %125 = vst [vmem:[%s123] sm:%s115] %v124
                %v126 = vld [vmem:[%s122 + $0x4] sm:%s115]
                %127 = vst [vmem:[%s123 + $0x4] sm:%s115] %v126
                %v128 = vld [vmem:[%s122 + $0x10] sm:%s115]
                %129 = vst [vmem:[%s123 + $0x8] sm:%s115] %v128
                %v130 = vld [vmem:[%s122 + $0x14] sm:%s115]
                %131 = vst [vmem:[%s123 + $0xc] sm:%s115] %v130
                %v132 = vld [vmem:[%s122 + $0x20] sm:%s115]
                %133 = vst [vmem:[%s123 + $0x10] sm:%s115] %v132
                %v134 = vld [vmem:[%s122 + $0x24] sm:%s115]
                %135 = vst [vmem:[%s123 + $0x14] sm:%s115] %v134
                %v136 = vld [vmem:[%s122 + $0x30] sm:%s115]
                %137 = vst [vmem:[%s123 + $0x18] sm:%s115] %v136
                %v138 = vld [vmem:[%s122 + $0x34] sm:%s115]
                %139 = vst [vmem:[%s123 + $0x1c] sm:%s115] %v138
                %v140 = vld [vmem:[%s122 + $0x40] sm:%s115]
                %141 = vst [vmem:[%s123 + $0x20] sm:%s115] %v140
                %v142 = vld [vmem:[%s122 + $0x44] sm:%s115]
                %143 = vst [vmem:[%s123 + $0x24] sm:%s115] %v142
                %v144 = vld [vmem:[%s122 + $0x50] sm:%s115]
                %145 = vst [vmem:[%s123 + $0x28] sm:%s115] %v144
                %v146 = vld [vmem:[%s122 + $0x54] sm:%s115]
                %147 = vst [vmem:[%s123 + $0x2c] sm:%s115] %v146
                %v148 = vld [vmem:[%s122 + $0x60] sm:%s115]
                %149 = vst [vmem:[%s123 + $0x30] sm:%s115] %v148
                %v150 = vld [vmem:[%s122 + $0x64] sm:%s115]
                %151 = vst [vmem:[%s123 + $0x34] sm:%s115] %v150
                %v152 = vld [vmem:[%s122 + $0x70] sm:%s115]
                %153 = vst [vmem:[%s123 + $0x38] sm:%s115] %v152
                %v154 = vld [vmem:[%s122 + $0x74] sm:%s115]
                %155 = vst [vmem:[%s123 + $0x3c] sm:%s115] %v154
                %v156 = vld [vmem:[%s122 + $0x80] sm:%s115]
                %157 = vst [vmem:[%s123 + $0x40] sm:%s115] %v156
                %v158 = vld [vmem:[%s122 + $0x84] sm:%s115]
                %159 = vst [vmem:[%s123 + $0x44] sm:%s115] %v158
                %v160 = vld [vmem:[%s122 + $0x90] sm:%s115]
                %161 = vst [vmem:[%s123 + $0x48] sm:%s115] %v160
                %v162 = vld [vmem:[%s122 + $0x94] sm:%s115]
                %163 = vst [vmem:[%s123 + $0x4c] sm:%s115] %v162
                %v164 = vld [vmem:[%s122 + $0xa0] sm:%s115]
                %165 = vst [vmem:[%s123 + $0x50] sm:%s115] %v164
                %v166 = vld [vmem:[%s122 + $0xa4] sm:%s115]
                %167 = vst [vmem:[%s123 + $0x54] sm:%s115] %v166
                %v168 = vld [vmem:[%s122 + $0xb0] sm:%s115]
                %169 = vst [vmem:[%s123 + $0x58] sm:%s115] %v168
                %v170 = vld [vmem:[%s122 + $0xb4] sm:%s115]
                %171 = vst [vmem:[%s123 + $0x5c] sm:%s115] %v170
                %v172 = vld [vmem:[%s122 + $0xc0] sm:%s115]
                %173 = vst [vmem:[%s123 + $0x60] sm:%s115] %v172
                %v174 = vld [vmem:[%s122 + $0xc4] sm:%s115]
                %175 = vst [vmem:[%s123 + $0x64] sm:%s115] %v174
                %v176 = vld [vmem:[%s122 + $0xd0] sm:%s115]
                %177 = vst [vmem:[%s123 + $0x68] sm:%s115] %v176
                %v178 = vld [vmem:[%s122 + $0xd4] sm:%s115]
                %179 = vst [vmem:[%s123 + $0x6c] sm:%s115] %v178
                %v180 = vld [vmem:[%s122 + $0xe0] sm:%s115]
                %181 = vst [vmem:[%s123 + $0x70] sm:%s115] %v180
                %v182 = vld [vmem:[%s122 + $0xe4] sm:%s115]
                %183 = vst [vmem:[%s123 + $0x74] sm:%s115] %v182
                %v184 = vld [vmem:[%s122 + $0xf0] sm:%s115]
                %185 = vst [vmem:[%s123 + $0x78] sm:%s115] %v184
                %v186 = vld [vmem:[%s122 + $0xf4] sm:%s115]
                %187 = vst [vmem:[%s123 + $0x7c] sm:%s115] %v186
                %v188 = vld [vmem:[%s122 + $0x100] sm:%s115]
                %189 = vst [vmem:[%s123 + $0x80] sm:%s115] %v188
                %v190 = vld [vmem:[%s122 + $0x104] sm:%s115]
                %191 = vst [vmem:[%s123 + $0x84] sm:%s115] %v190
                %v192 = vld [vmem:[%s122 + $0x110] sm:%s115]
                %193 = vst [vmem:[%s123 + $0x88] sm:%s115] %v192
                %v194 = vld [vmem:[%s122 + $0x114] sm:%s115]
                %195 = vst [vmem:[%s123 + $0x8c] sm:%s115] %v194
                %v196 = vld [vmem:[%s122 + $0x120] sm:%s115]
                %197 = vst [vmem:[%s123 + $0x90] sm:%s115] %v196
                %v198 = vld [vmem:[%s122 + $0x124] sm:%s115]
                %199 = vst [vmem:[%s123 + $0x94] sm:%s115] %v198
                %v200 = vld [vmem:[%s122 + $0x130] sm:%s115]
                %201 = vst [vmem:[%s123 + $0x98] sm:%s115] %v200
                %v202 = vld [vmem:[%s122 + $0x134] sm:%s115]
                %203 = vst [vmem:[%s123 + $0x9c] sm:%s115] %v202
                %v204 = vld [vmem:[%s122 + $0x140] sm:%s115]
                %205 = vst [vmem:[%s123 + $0xa0] sm:%s115] %v204
                %v206 = vld [vmem:[%s122 + $0x144] sm:%s115]
                %207 = vst [vmem:[%s123 + $0xa4] sm:%s115] %v206
                %v208 = vld [vmem:[%s122 + $0x150] sm:%s115]
                %209 = vst [vmem:[%s123 + $0xa8] sm:%s115] %v208
                %v210 = vld [vmem:[%s122 + $0x154] sm:%s115]
                %211 = vst [vmem:[%s123 + $0xac] sm:%s115] %v210
              $region41: #{run.4} parent=35 // loop_footer
                %s121 = sadd.s32 1, %s117
              $region42: #{run.4} parent=35 // loop_footer_branch
                %116 = sbr.rel target = $region38
              $region43: #{run.4} parent=35 // loop_exit
                _
            $region36: #{run.4} parent=27 // pred_fallthru
              _
          $region28: #{run.4} parent=23 // pred_fallthru
            _
          %320 = vnop
        $region24: #{run.4} parent=19 // pred_fallthru
          _
      $region20: #{run.4} parent=5 // pred_fallthru
        _
      %p321 = scmp.le.s32.totalorder 1, %s8
      %p322 = scmp.lt.s32.totalorder %s8, 3
      %p323 = pnand %p321, %p322
      %p324 = pneg %p323
      // Predicated region
      $region62: #{run.4} parent=5 // pred_check
        _
      $region63: #{run.4} parent=5 // pred_check_branch
        %326 = sbr.rel (%p323) target = $region65
      $region64: #{run.4} parent=5 // pred_region
        %s327 = ssub.s32 %s8, 1
        %s328 = sand.u32 %s21, 1
        %s329 = sand.u32 %s21, 1
        %s330 = smul.addr %s329, 176
        %s331 = scalar_lea.vmem [#allocation2], %s330
        // Predicated region
        $region66: #{run.4} parent=64 // pred_check
          %p332 = pneg %p34
        $region67: #{run.4} parent=64 // pred_check_branch
          %334 = sbr.rel (%p332) target = $region69
        $region68: #{run.4} parent=64 // pred_region
          _
        $region69: #{run.4} parent=64 // pred_fallthru
          _
        %s335 = sand.u32 %s21, 1
        %s336 = sand.u32 %s21, 1
        %s337 = smul.addr %s336, 176
        %s338 = scalar_lea.vmem [#allocation2], %s337
        %p339 = pneg %p34
        %p340 = pneg %p31
        %p341 = pneg %p55
        %p342 = pneg %p52
        %p343 = pneg %p76
        %p344 = pneg %p73
        %s345 = smul.u32 2, %s13
        %v347 = vld [vmem:[%s331] sm:$0xf]
        %v348 = vld [vmem:[%s331 + $0x4] sm:$0xf]
        %v349 = vld [vmem:[%s331 + $0x8] sm:$0xf]
        %v350 = vld [vmem:[%s331 + $0xc] sm:$0xf]
        %v351 = vld [vmem:[%s331 + $0x10] sm:$0xf]
        %v352 = vld [vmem:[%s331 + $0x14] sm:$0xf]
        %v353 = vld [vmem:[%s331 + $0x18] sm:$0xf]
        %v354 = vld [vmem:[%s331 + $0x1c] sm:$0xf]
        %v355 = vld [vmem:[%s331 + $0x20] sm:$0xf]
        %v356 = vld [vmem:[%s331 + $0x24] sm:$0xf]
        %v357 = vld [vmem:[%s331 + $0x28] sm:$0xf]
        %v358 = vld [vmem:[%s331 + $0x2c] sm:$0xf]
        %v359 = vld [vmem:[%s331 + $0x30] sm:$0xf]
        %v360 = vld [vmem:[%s331 + $0x34] sm:$0xf]
        %v361 = vld [vmem:[%s331 + $0x38] sm:$0xf]
        %v362 = vld [vmem:[%s331 + $0x3c] sm:$0xf]
        %v363 = vld [vmem:[%s331 + $0x40] sm:$0xf]
        %v364 = vld [vmem:[%s331 + $0x44] sm:$0xf]
        %v365 = vld [vmem:[%s331 + $0x48] sm:$0xf]
        %v366 = vld [vmem:[%s331 + $0x4c] sm:$0xf]
        %v367 = vld [vmem:[%s331 + $0x50] sm:$0xf]
        %v368 = vld [vmem:[%s331 + $0x54] sm:$0xf]
        %v369 = vld [vmem:[%s331 + $0x58] sm:$0xf]
        %v370 = vld [vmem:[%s331 + $0x5c] sm:$0xf]
        %v371 = vld [vmem:[%s331 + $0x60] sm:$0xf]
        %v372 = vld [vmem:[%s331 + $0x64] sm:$0xf]
        %v373 = vld [vmem:[%s331 + $0x68] sm:$0xf]
        %v374 = vld [vmem:[%s331 + $0x6c] sm:$0xf]
        %v375 = vld [vmem:[%s331 + $0x70] sm:$0xf]
        %v376 = vld [vmem:[%s331 + $0x74] sm:$0xf]
        %v377 = vld [vmem:[%s331 + $0x78] sm:$0xf]
        %v378 = vld [vmem:[%s331 + $0x7c] sm:$0xf]
        %s379 = scalar_lea.vmem %s331, 8 [#allocation2]
        %v380 = vld [vmem:[%s379] sm:$0xf]
        %v381 = vld [vmem:[%s379 + $0x4] sm:$0xf]
        %v382 = vld [vmem:[%s379 + $0x8] sm:$0xf]
        %v383 = vld [vmem:[%s379 + $0xc] sm:$0xf]
        %v384 = vld [vmem:[%s379 + $0x10] sm:$0xf]
        %v385 = vld [vmem:[%s379 + $0x14] sm:$0xf]
        %v386 = vld [vmem:[%s379 + $0x18] sm:$0xf]
        %v387 = vld [vmem:[%s379 + $0x1c] sm:$0xf]
        %v388 = vld [vmem:[%s379 + $0x20] sm:$0xf]
        %v389 = vld [vmem:[%s379 + $0x24] sm:$0xf]
        %v390 = vld [vmem:[%s379 + $0x28] sm:$0xf]
        %v391 = vld [vmem:[%s379 + $0x2c] sm:$0xf]
        %v392 = vld [vmem:[%s379 + $0x30] sm:$0xf]
        %v393 = vld [vmem:[%s379 + $0x34] sm:$0xf]
        %v394 = vld [vmem:[%s379 + $0x38] sm:$0xf]
        %v395 = vld [vmem:[%s379 + $0x3c] sm:$0xf]
        %v396 = vld [vmem:[%s379 + $0x40] sm:$0xf]
        %v397 = vld [vmem:[%s379 + $0x44] sm:$0xf]
        %v398 = vld [vmem:[%s379 + $0x48] sm:$0xf]
        %v399 = vld [vmem:[%s379 + $0x4c] sm:$0xf]
        %v400 = vld [vmem:[%s379 + $0x50] sm:$0xf]
        %v401 = vld [vmem:[%s379 + $0x54] sm:$0xf]
        %v402 = vld [vmem:[%s379 + $0x58] sm:$0xf]
        %v403 = vld [vmem:[%s379 + $0x5c] sm:$0xf]
        %v404 = vld [vmem:[%s379 + $0x60] sm:$0xf]
        %v405 = vld [vmem:[%s379 + $0x64] sm:$0xf]
        %v406 = vld [vmem:[%s379 + $0x68] sm:$0xf]
        %v407 = vld [vmem:[%s379 + $0x6c] sm:$0xf]
        %v408 = vld [vmem:[%s379 + $0x70] sm:$0xf]
        %v409 = vld [vmem:[%s379 + $0x74] sm:$0xf]
        %v410 = vld [vmem:[%s379 + $0x78] sm:$0xf]
        %v411 = vld [vmem:[%s379 + $0x7c] sm:$0xf]
        %s412 = scalar_lea.vmem %s331, 16 [#allocation2]
        %v413 = vld [vmem:[%s412] sm:$0xf]
        %v414 = vld [vmem:[%s412 + $0x4] sm:$0xf]
        %v415 = vld [vmem:[%s412 + $0x8] sm:$0xf]
        %v416 = vld [vmem:[%s412 + $0xc] sm:$0xf]
        %v417 = vld [vmem:[%s412 + $0x10] sm:$0xf]
        %v418 = vld [vmem:[%s412 + $0x14] sm:$0xf]
        %v419 = vld [vmem:[%s412 + $0x18] sm:$0xf]
        %v420 = vld [vmem:[%s412 + $0x1c] sm:$0xf]
        %v421 = vld [vmem:[%s412 + $0x20] sm:$0xf]
        %v422 = vld [vmem:[%s412 + $0x24] sm:$0xf]
        %v423 = vld [vmem:[%s412 + $0x28] sm:$0xf]
        %v424 = vld [vmem:[%s412 + $0x2c] sm:$0xf]
        %v425 = vld [vmem:[%s412 + $0x30] sm:$0xf]
        %v426 = vld [vmem:[%s412 + $0x34] sm:$0xf]
        %v427 = vld [vmem:[%s412 + $0x38] sm:$0xf]
        %v428 = vld [vmem:[%s412 + $0x3c] sm:$0xf]
        %v429 = vld [vmem:[%s412 + $0x40] sm:$0xf]
        %v430 = vld [vmem:[%s412 + $0x44] sm:$0xf]
        %v431 = vld [vmem:[%s412 + $0x48] sm:$0xf]
        %v432 = vld [vmem:[%s412 + $0x4c] sm:$0xf]
        %v433 = vld [vmem:[%s412 + $0x50] sm:$0xf]
        %v434 = vld [vmem:[%s412 + $0x54] sm:$0xf]
        %v435 = vld [vmem:[%s412 + $0x58] sm:$0xf]
        %v436 = vld [vmem:[%s412 + $0x5c] sm:$0xf]
        %v437 = vld [vmem:[%s412 + $0x60] sm:$0xf]
        %v438 = vld [vmem:[%s412 + $0x64] sm:$0xf]
        %v439 = vld [vmem:[%s412 + $0x68] sm:$0xf]
        %v440 = vld [vmem:[%s412 + $0x6c] sm:$0xf]
        %v441 = vld [vmem:[%s412 + $0x70] sm:$0xf]
        %v442 = vld [vmem:[%s412 + $0x74] sm:$0xf]
        %v443 = vld [vmem:[%s412 + $0x78] sm:$0xf]
        %v444 = vld [vmem:[%s412 + $0x7c] sm:$0xf]
        %s445 = scalar_lea.vmem %s331, 24 [#allocation2]
        %v446 = vld [vmem:[%s445] sm:$0xf]
        %v447 = vld [vmem:[%s445 + $0x4] sm:$0xf]
        %v448 = vld [vmem:[%s445 + $0x8] sm:$0xf]
        %v449 = vld [vmem:[%s445 + $0xc] sm:$0xf]
        %v450 = vld [vmem:[%s445 + $0x10] sm:$0xf]
        %v451 = vld [vmem:[%s445 + $0x14] sm:$0xf]
        %v452 = vld [vmem:[%s445 + $0x18] sm:$0xf]
        %v453 = vld [vmem:[%s445 + $0x1c] sm:$0xf]
        %v454 = vld [vmem:[%s445 + $0x20] sm:$0xf]
        %v455 = vld [vmem:[%s445 + $0x24] sm:$0xf]
        %v456 = vld [vmem:[%s445 + $0x28] sm:$0xf]
        %v457 = vld [vmem:[%s445 + $0x2c] sm:$0xf]
        %v458 = vld [vmem:[%s445 + $0x30] sm:$0xf]
        %v459 = vld [vmem:[%s445 + $0x34] sm:$0xf]
        %v460 = vld [vmem:[%s445 + $0x38] sm:$0xf]
        %v461 = vld [vmem:[%s445 + $0x3c] sm:$0xf]
        %v462 = vld [vmem:[%s445 + $0x40] sm:$0xf]
        %v463 = vld [vmem:[%s445 + $0x44] sm:$0xf]
        %v464 = vld [vmem:[%s445 + $0x48] sm:$0xf]
        %v465 = vld [vmem:[%s445 + $0x4c] sm:$0xf]
        %v466 = vld [vmem:[%s445 + $0x50] sm:$0xf]
        %v467 = vld [vmem:[%s445 + $0x54] sm:$0xf]
        %v468 = vld [vmem:[%s445 + $0x58] sm:$0xf]
        %v469 = vld [vmem:[%s445 + $0x5c] sm:$0xf]
        %v470 = vld [vmem:[%s445 + $0x60] sm:$0xf]
        %v471 = vld [vmem:[%s445 + $0x64] sm:$0xf]
        %v472 = vld [vmem:[%s445 + $0x68] sm:$0xf]
        %v473 = vld [vmem:[%s445 + $0x6c] sm:$0xf]
        %v474 = vld [vmem:[%s445 + $0x70] sm:$0xf]
        %v475 = vld [vmem:[%s445 + $0x74] sm:$0xf]
        %v476 = vld [vmem:[%s445 + $0x78] sm:$0xf]
        %v477 = vld [vmem:[%s445 + $0x7c] sm:$0xf]
        %s478 = scalar_lea.vmem %s331, 32 [#allocation2]
        %v479 = vld [vmem:[%s478] sm:$0xf]
        %v480 = vld [vmem:[%s478 + $0x4] sm:$0xf]
        %v481 = vld [vmem:[%s478 + $0x8] sm:$0xf]
        %v482 = vld [vmem:[%s478 + $0xc] sm:$0xf]
        %v483 = vld [vmem:[%s478 + $0x10] sm:$0xf]
        %v484 = vld [vmem:[%s478 + $0x14] sm:$0xf]
        %v485 = vld [vmem:[%s478 + $0x18] sm:$0xf]
        %v486 = vld [vmem:[%s478 + $0x1c] sm:$0xf]
        %v487 = vld [vmem:[%s478 + $0x20] sm:$0xf]
        %v488 = vld [vmem:[%s478 + $0x24] sm:$0xf]
        %v489 = vld [vmem:[%s478 + $0x28] sm:$0xf]
        %v490 = vld [vmem:[%s478 + $0x2c] sm:$0xf]
        %v491 = vld [vmem:[%s478 + $0x30] sm:$0xf]
        %v492 = vld [vmem:[%s478 + $0x34] sm:$0xf]
        %v493 = vld [vmem:[%s478 + $0x38] sm:$0xf]
        %v494 = vld [vmem:[%s478 + $0x3c] sm:$0xf]
        %v495 = vld [vmem:[%s478 + $0x40] sm:$0xf]
        %v496 = vld [vmem:[%s478 + $0x44] sm:$0xf]
        %v497 = vld [vmem:[%s478 + $0x48] sm:$0xf]
        %v498 = vld [vmem:[%s478 + $0x4c] sm:$0xf]
        %v499 = vld [vmem:[%s478 + $0x50] sm:$0xf]
        %v500 = vld [vmem:[%s478 + $0x54] sm:$0xf]
        %v501 = vld [vmem:[%s478 + $0x58] sm:$0xf]
        %v502 = vld [vmem:[%s478 + $0x5c] sm:$0xf]
        %v503 = vld [vmem:[%s478 + $0x60] sm:$0xf]
        %v504 = vld [vmem:[%s478 + $0x64] sm:$0xf]
        %v505 = vld [vmem:[%s478 + $0x68] sm:$0xf]
        %v506 = vld [vmem:[%s478 + $0x6c] sm:$0xf]
        %v507 = vld [vmem:[%s478 + $0x70] sm:$0xf]
        %v508 = vld [vmem:[%s478 + $0x74] sm:$0xf]
        %v509 = vld [vmem:[%s478 + $0x78] sm:$0xf]
        %v510 = vld [vmem:[%s478 + $0x7c] sm:$0xf]
        %s511 = scalar_lea.vmem %s331, 40 [#allocation2]
        %v512 = vld [vmem:[%s511] sm:$0xf]
        %v513 = vld [vmem:[%s511 + $0x4] sm:$0xf]
        %v514 = vld [vmem:[%s511 + $0x8] sm:$0xf]
        %v515 = vld [vmem:[%s511 + $0xc] sm:$0xf]
        %v516 = vld [vmem:[%s511 + $0x10] sm:$0xf]
        %v517 = vld [vmem:[%s511 + $0x14] sm:$0xf]
        %v518 = vld [vmem:[%s511 + $0x18] sm:$0xf]
        %v519 = vld [vmem:[%s511 + $0x1c] sm:$0xf]
        %v520 = vld [vmem:[%s511 + $0x20] sm:$0xf]
        %v521 = vld [vmem:[%s511 + $0x24] sm:$0xf]
        %v522 = vld [vmem:[%s511 + $0x28] sm:$0xf]
        %v523 = vld [vmem:[%s511 + $0x2c] sm:$0xf]
        %v524 = vld [vmem:[%s511 + $0x30] sm:$0xf]
        %v525 = vld [vmem:[%s511 + $0x34] sm:$0xf]
        %v526 = vld [vmem:[%s511 + $0x38] sm:$0xf]
        %v527 = vld [vmem:[%s511 + $0x3c] sm:$0xf]
        %v528 = vld [vmem:[%s511 + $0x40] sm:$0xf]
        %v529 = vld [vmem:[%s511 + $0x44] sm:$0xf]
        %v530 = vld [vmem:[%s511 + $0x48] sm:$0xf]
        %v531 = vld [vmem:[%s511 + $0x4c] sm:$0xf]
        %v532 = vld [vmem:[%s511 + $0x50] sm:$0xf]
        %v533 = vld [vmem:[%s511 + $0x54] sm:$0xf]
        %v534 = vld [vmem:[%s511 + $0x58] sm:$0xf]
        %v535 = vld [vmem:[%s511 + $0x5c] sm:$0xf]
        %v536 = vld [vmem:[%s511 + $0x60] sm:$0xf]
        %v537 = vld [vmem:[%s511 + $0x64] sm:$0xf]
        %v538 = vld [vmem:[%s511 + $0x68] sm:$0xf]
        %v539 = vld [vmem:[%s511 + $0x6c] sm:$0xf]
        %v540 = vld [vmem:[%s511 + $0x70] sm:$0xf]
        %v541 = vld [vmem:[%s511 + $0x74] sm:$0xf]
        %v542 = vld [vmem:[%s511 + $0x78] sm:$0xf]
        %v543 = vld [vmem:[%s511 + $0x7c] sm:$0xf]
        %s544 = scalar_lea.vmem %s331, 48 [#allocation2]
        %v545 = vld [vmem:[%s544] sm:$0xf]
        %v546 = vld [vmem:[%s544 + $0x4] sm:$0xf]
        %v547 = vld [vmem:[%s544 + $0x8] sm:$0xf]
        %v548 = vld [vmem:[%s544 + $0xc] sm:$0xf]
        %v549 = vld [vmem:[%s544 + $0x10] sm:$0xf]
        %v550 = vld [vmem:[%s544 + $0x14] sm:$0xf]
        %v551 = vld [vmem:[%s544 + $0x18] sm:$0xf]
        %v552 = vld [vmem:[%s544 + $0x1c] sm:$0xf]
        %v553 = vld [vmem:[%s544 + $0x20] sm:$0xf]
        %v554 = vld [vmem:[%s544 + $0x24] sm:$0xf]
        %v555 = vld [vmem:[%s544 + $0x28] sm:$0xf]
        %v556 = vld [vmem:[%s544 + $0x2c] sm:$0xf]
        %v557 = vld [vmem:[%s544 + $0x30] sm:$0xf]
        %v558 = vld [vmem:[%s544 + $0x34] sm:$0xf]
        %v559 = vld [vmem:[%s544 + $0x38] sm:$0xf]
        %v560 = vld [vmem:[%s544 + $0x3c] sm:$0xf]
        %v561 = vld [vmem:[%s544 + $0x40] sm:$0xf]
        %v562 = vld [vmem:[%s544 + $0x44] sm:$0xf]
        %v563 = vld [vmem:[%s544 + $0x48] sm:$0xf]
        %v564 = vld [vmem:[%s544 + $0x4c] sm:$0xf]
        %v565 = vld [vmem:[%s544 + $0x50] sm:$0xf]
        %v566 = vld [vmem:[%s544 + $0x54] sm:$0xf]
        %v567 = vld [vmem:[%s544 + $0x58] sm:$0xf]
        %v568 = vld [vmem:[%s544 + $0x5c] sm:$0xf]
        %v569 = vld [vmem:[%s544 + $0x60] sm:$0xf]
        %v570 = vld [vmem:[%s544 + $0x64] sm:$0xf]
        %v571 = vld [vmem:[%s544 + $0x68] sm:$0xf]
        %v572 = vld [vmem:[%s544 + $0x6c] sm:$0xf]
        %v573 = vld [vmem:[%s544 + $0x70] sm:$0xf]
        %v574 = vld [vmem:[%s544 + $0x74] sm:$0xf]
        %v575 = vld [vmem:[%s544 + $0x78] sm:$0xf]
        %v576 = vld [vmem:[%s544 + $0x7c] sm:$0xf]
        %v609 = vunpack.c.l.b16 %v347
        %v610 = vunpack.c.l.b16 %v348
        %v611 = vunpack.c.l.b16 %v349
        %v612 = vunpack.c.l.b16 %v350
        %v613 = vunpack.c.l.b16 %v351
        %v614 = vunpack.c.l.b16 %v352
        %v615 = vunpack.c.l.b16 %v353
        %v616 = vunpack.c.l.b16 %v354
        %v617 = vunpack.c.l.b16 %v355
        %v618 = vunpack.c.l.b16 %v356
        %v619 = vunpack.c.l.b16 %v357
        %v620 = vunpack.c.l.b16 %v358
        %v621 = vunpack.c.l.b16 %v359
        %v622 = vunpack.c.l.b16 %v360
        %v623 = vunpack.c.l.b16 %v361
        %v624 = vunpack.c.l.b16 %v362
        %v625 = vunpack.c.l.b16 %v363
        %v626 = vunpack.c.l.b16 %v364
        %v627 = vunpack.c.l.b16 %v365
        %v628 = vunpack.c.l.b16 %v366
        %v629 = vunpack.c.l.b16 %v367
        %v630 = vunpack.c.l.b16 %v368
        %v631 = vunpack.c.l.b16 %v369
        %v632 = vunpack.c.l.b16 %v370
        %v633 = vunpack.c.l.b16 %v371
        %v634 = vunpack.c.l.b16 %v372
        %v635 = vunpack.c.l.b16 %v373
        %v636 = vunpack.c.l.b16 %v374
        %v637 = vunpack.c.l.b16 %v375
        %v638 = vunpack.c.l.b16 %v376
        %v639 = vunpack.c.l.b16 %v377
        %v640 = vunpack.c.l.b16 %v378
        %v641 = vpack.c.b16 %v610, %v609
        %v642 = vpack.c.b16 %v612, %v611
        %v643 = vpack.c.b16 %v614, %v613
        %v644 = vpack.c.b16 %v616, %v615
        %v645 = vpack.c.b16 %v618, %v617
        %v646 = vpack.c.b16 %v620, %v619
        %v647 = vpack.c.b16 %v622, %v621
        %v648 = vpack.c.b16 %v624, %v623
        %v649 = vpack.c.b16 %v626, %v625
        %v650 = vpack.c.b16 %v628, %v627
        %v651 = vpack.c.b16 %v630, %v629
        %v652 = vpack.c.b16 %v632, %v631
        %v653 = vpack.c.b16 %v634, %v633
        %v654 = vpack.c.b16 %v636, %v635
        %v655 = vpack.c.b16 %v638, %v637
        %v656 = vpack.c.b16 %v640, %v639
        %v689 = vunpack.c.l.b16 %v380
        %v690 = vunpack.c.l.b16 %v381
        %v691 = vunpack.c.l.b16 %v382
        %v692 = vunpack.c.l.b16 %v383
        %v693 = vunpack.c.l.b16 %v384
        %v694 = vunpack.c.l.b16 %v385
        %v695 = vunpack.c.l.b16 %v386
        %v696 = vunpack.c.l.b16 %v387
        %v697 = vunpack.c.l.b16 %v388
        %v698 = vunpack.c.l.b16 %v389
        %v699 = vunpack.c.l.b16 %v390
        %v700 = vunpack.c.l.b16 %v391
        %v701 = vunpack.c.l.b16 %v392
        %v702 = vunpack.c.l.b16 %v393
        %v703 = vunpack.c.l.b16 %v394
        %v704 = vunpack.c.l.b16 %v395
        %v705 = vunpack.c.l.b16 %v396
        %v706 = vunpack.c.l.b16 %v397
        %v707 = vunpack.c.l.b16 %v398
        %v708 = vunpack.c.l.b16 %v399
        %v709 = vunpack.c.l.b16 %v400
        %v710 = vunpack.c.l.b16 %v401
        %v711 = vunpack.c.l.b16 %v402
        %v712 = vunpack.c.l.b16 %v403
        %v713 = vunpack.c.l.b16 %v404
        %v714 = vunpack.c.l.b16 %v405
        %v715 = vunpack.c.l.b16 %v406
        %v716 = vunpack.c.l.b16 %v407
        %v717 = vunpack.c.l.b16 %v408
        %v718 = vunpack.c.l.b16 %v409
        %v719 = vunpack.c.l.b16 %v410
        %v720 = vunpack.c.l.b16 %v411
        %v721 = vpack.c.b16 %v690, %v689
        %v722 = vpack.c.b16 %v692, %v691
        %v723 = vpack.c.b16 %v694, %v693
        %v724 = vpack.c.b16 %v696, %v695
        %v725 = vpack.c.b16 %v698, %v697
        %v726 = vpack.c.b16 %v700, %v699
        %v727 = vpack.c.b16 %v702, %v701
        %v728 = vpack.c.b16 %v704, %v703
        %v729 = vpack.c.b16 %v706, %v705
        %v730 = vpack.c.b16 %v708, %v707
        %v731 = vpack.c.b16 %v710, %v709
        %v732 = vpack.c.b16 %v712, %v711
        %v733 = vpack.c.b16 %v714, %v713
        %v734 = vpack.c.b16 %v716, %v715
        %v735 = vpack.c.b16 %v718, %v717
        %v736 = vpack.c.b16 %v720, %v719
        %737 = vrot.lane.b32.xlu0 %v721, 4
        %v738 = vpop.permute.xlu0 %737
        %739 = vrot.lane.b32.xlu0 %v722, 4
        %v740 = vpop.permute.xlu0 %739
        %741 = vrot.lane.b32.xlu0 %v723, 4
        %v742 = vpop.permute.xlu0 %741
        %743 = vrot.lane.b32.xlu0 %v724, 4
        %v744 = vpop.permute.xlu0 %743
        %745 = vrot.lane.b32.xlu0 %v725, 4
        %v746 = vpop.permute.xlu0 %745
        %747 = vrot.lane.b32.xlu0 %v726, 4
        %v748 = vpop.permute.xlu0 %747
        %749 = vrot.lane.b32.xlu0 %v727, 4
        %v750 = vpop.permute.xlu0 %749
        %751 = vrot.lane.b32.xlu0 %v728, 4
        %v752 = vpop.permute.xlu0 %751
        %753 = vrot.lane.b32.xlu0 %v729, 4
        %v754 = vpop.permute.xlu0 %753
        %755 = vrot.lane.b32.xlu0 %v730, 4
        %v756 = vpop.permute.xlu0 %755
        %757 = vrot.lane.b32.xlu0 %v731, 4
        %v758 = vpop.permute.xlu0 %757
        %759 = vrot.lane.b32.xlu0 %v732, 4
        %v760 = vpop.permute.xlu0 %759
        %761 = vrot.lane.b32.xlu0 %v733, 4
        %v762 = vpop.permute.xlu0 %761
        %763 = vrot.lane.b32.xlu0 %v734, 4
        %v764 = vpop.permute.xlu0 %763
        %765 = vrot.lane.b32.xlu0 %v735, 4
        %v766 = vpop.permute.xlu0 %765
        %767 = vrot.lane.b32.xlu0 %v736, 4
        %v768 = vpop.permute.xlu0 %767
        %v801 = vunpack.c.l.b16 %v413
        %v802 = vunpack.c.l.b16 %v414
        %v803 = vunpack.c.l.b16 %v415
        %v804 = vunpack.c.l.b16 %v416
        %v805 = vunpack.c.l.b16 %v417
        %v806 = vunpack.c.l.b16 %v418
        %v807 = vunpack.c.l.b16 %v419
        %v808 = vunpack.c.l.b16 %v420
        %v809 = vunpack.c.l.b16 %v421
        %v810 = vunpack.c.l.b16 %v422
        %v811 = vunpack.c.l.b16 %v423
        %v812 = vunpack.c.l.b16 %v424
        %v813 = vunpack.c.l.b16 %v425
        %v814 = vunpack.c.l.b16 %v426
        %v815 = vunpack.c.l.b16 %v427
        %v816 = vunpack.c.l.b16 %v428
        %v817 = vunpack.c.l.b16 %v429
        %v818 = vunpack.c.l.b16 %v430
        %v819 = vunpack.c.l.b16 %v431
        %v820 = vunpack.c.l.b16 %v432
        %v821 = vunpack.c.l.b16 %v433
        %v822 = vunpack.c.l.b16 %v434
        %v823 = vunpack.c.l.b16 %v435
        %v824 = vunpack.c.l.b16 %v436
        %v825 = vunpack.c.l.b16 %v437
        %v826 = vunpack.c.l.b16 %v438
        %v827 = vunpack.c.l.b16 %v439
        %v828 = vunpack.c.l.b16 %v440
        %v829 = vunpack.c.l.b16 %v441
        %v830 = vunpack.c.l.b16 %v442
        %v831 = vunpack.c.l.b16 %v443
        %v832 = vunpack.c.l.b16 %v444
        %v833 = vpack.c.b16 %v802, %v801
        %v834 = vpack.c.b16 %v804, %v803
        %v835 = vpack.c.b16 %v806, %v805
        %v836 = vpack.c.b16 %v808, %v807
        %v837 = vpack.c.b16 %v810, %v809
        %v838 = vpack.c.b16 %v812, %v811
        %v839 = vpack.c.b16 %v814, %v813
        %v840 = vpack.c.b16 %v816, %v815
        %v841 = vpack.c.b16 %v818, %v817
        %v842 = vpack.c.b16 %v820, %v819
        %v843 = vpack.c.b16 %v822, %v821
        %v844 = vpack.c.b16 %v824, %v823
        %v845 = vpack.c.b16 %v826, %v825
        %v846 = vpack.c.b16 %v828, %v827
        %v847 = vpack.c.b16 %v830, %v829
        %v848 = vpack.c.b16 %v832, %v831
        %849 = vrot.lane.b32.xlu0 %v833, 8
        %v850 = vpop.permute.xlu0 %849
        %851 = vrot.lane.b32.xlu0 %v834, 8
        %v852 = vpop.permute.xlu0 %851
        %853 = vrot.lane.b32.xlu0 %v835, 8
        %v854 = vpop.permute.xlu0 %853
        %855 = vrot.lane.b32.xlu0 %v836, 8
        %v856 = vpop.permute.xlu0 %855
        %857 = vrot.lane.b32.xlu0 %v837, 8
        %v858 = vpop.permute.xlu0 %857
        %859 = vrot.lane.b32.xlu0 %v838, 8
        %v860 = vpop.permute.xlu0 %859
        %861 = vrot.lane.b32.xlu0 %v839, 8
        %v862 = vpop.permute.xlu0 %861
        %863 = vrot.lane.b32.xlu0 %v840, 8
        %v864 = vpop.permute.xlu0 %863
        %865 = vrot.lane.b32.xlu0 %v841, 8
        %v866 = vpop.permute.xlu0 %865
        %867 = vrot.lane.b32.xlu0 %v842, 8
        %v868 = vpop.permute.xlu0 %867
        %869 = vrot.lane.b32.xlu0 %v843, 8
        %v870 = vpop.permute.xlu0 %869
        %871 = vrot.lane.b32.xlu0 %v844, 8
        %v872 = vpop.permute.xlu0 %871
        %873 = vrot.lane.b32.xlu0 %v845, 8
        %v874 = vpop.permute.xlu0 %873
        %875 = vrot.lane.b32.xlu0 %v846, 8
        %v876 = vpop.permute.xlu0 %875
        %877 = vrot.lane.b32.xlu0 %v847, 8
        %v878 = vpop.permute.xlu0 %877
        %879 = vrot.lane.b32.xlu0 %v848, 8
        %v880 = vpop.permute.xlu0 %879
        %v913 = vunpack.c.l.b16 %v446
        %v914 = vunpack.c.l.b16 %v447
        %v915 = vunpack.c.l.b16 %v448
        %v916 = vunpack.c.l.b16 %v449
        %v917 = vunpack.c.l.b16 %v450
        %v918 = vunpack.c.l.b16 %v451
        %v919 = vunpack.c.l.b16 %v452
        %v920 = vunpack.c.l.b16 %v453
        %v921 = vunpack.c.l.b16 %v454
        %v922 = vunpack.c.l.b16 %v455
        %v923 = vunpack.c.l.b16 %v456
        %v924 = vunpack.c.l.b16 %v457
        %v925 = vunpack.c.l.b16 %v458
        %v926 = vunpack.c.l.b16 %v459
        %v927 = vunpack.c.l.b16 %v460
        %v928 = vunpack.c.l.b16 %v461
        %v929 = vunpack.c.l.b16 %v462
        %v930 = vunpack.c.l.b16 %v463
        %v931 = vunpack.c.l.b16 %v464
        %v932 = vunpack.c.l.b16 %v465
        %v933 = vunpack.c.l.b16 %v466
        %v934 = vunpack.c.l.b16 %v467
        %v935 = vunpack.c.l.b16 %v468
        %v936 = vunpack.c.l.b16 %v469
        %v937 = vunpack.c.l.b16 %v470
        %v938 = vunpack.c.l.b16 %v471
        %v939 = vunpack.c.l.b16 %v472
        %v940 = vunpack.c.l.b16 %v473
        %v941 = vunpack.c.l.b16 %v474
        %v942 = vunpack.c.l.b16 %v475
        %v943 = vunpack.c.l.b16 %v476
        %v944 = vunpack.c.l.b16 %v477
        %v945 = vpack.c.b16 %v914, %v913
        %v946 = vpack.c.b16 %v916, %v915
        %v947 = vpack.c.b16 %v918, %v917
        %v948 = vpack.c.b16 %v920, %v919
        %v949 = vpack.c.b16 %v922, %v921
        %v950 = vpack.c.b16 %v924, %v923
        %v951 = vpack.c.b16 %v926, %v925
        %v952 = vpack.c.b16 %v928, %v927
        %v953 = vpack.c.b16 %v930, %v929
        %v954 = vpack.c.b16 %v932, %v931
        %v955 = vpack.c.b16 %v934, %v933
        %v956 = vpack.c.b16 %v936, %v935
        %v957 = vpack.c.b16 %v938, %v937
        %v958 = vpack.c.b16 %v940, %v939
        %v959 = vpack.c.b16 %v942, %v941
        %v960 = vpack.c.b16 %v944, %v943
        %961 = vrot.lane.b32.xlu0 %v945, 12
        %v962 = vpop.permute.xlu0 %961
        %963 = vrot.lane.b32.xlu0 %v946, 12
        %v964 = vpop.permute.xlu0 %963
        %965 = vrot.lane.b32.xlu0 %v947, 12
        %v966 = vpop.permute.xlu0 %965
        %967 = vrot.lane.b32.xlu0 %v948, 12
        %v968 = vpop.permute.xlu0 %967
        %969 = vrot.lane.b32.xlu0 %v949, 12
        %v970 = vpop.permute.xlu0 %969
        %971 = vrot.lane.b32.xlu0 %v950, 12
        %v972 = vpop.permute.xlu0 %971
        %973 = vrot.lane.b32.xlu0 %v951, 12
        %v974 = vpop.permute.xlu0 %973
        %975 = vrot.lane.b32.xlu0 %v952, 12
        %v976 = vpop.permute.xlu0 %975
        %977 = vrot.lane.b32.xlu0 %v953, 12
        %v978 = vpop.permute.xlu0 %977
        %979 = vrot.lane.b32.xlu0 %v954, 12
        %v980 = vpop.permute.xlu0 %979
        %981 = vrot.lane.b32.xlu0 %v955, 12
        %v982 = vpop.permute.xlu0 %981
        %983 = vrot.lane.b32.xlu0 %v956, 12
        %v984 = vpop.permute.xlu0 %983
        %985 = vrot.lane.b32.xlu0 %v957, 12
        %v986 = vpop.permute.xlu0 %985
        %987 = vrot.lane.b32.xlu0 %v958, 12
        %v988 = vpop.permute.xlu0 %987
        %989 = vrot.lane.b32.xlu0 %v959, 12
        %v990 = vpop.permute.xlu0 %989
        %991 = vrot.lane.b32.xlu0 %v960, 12
        %v992 = vpop.permute.xlu0 %991
        %v1025 = vunpack.c.l.b16 %v479
        %v1026 = vunpack.c.l.b16 %v480
        %v1027 = vunpack.c.l.b16 %v481
        %v1028 = vunpack.c.l.b16 %v482
        %v1029 = vunpack.c.l.b16 %v483
        %v1030 = vunpack.c.l.b16 %v484
        %v1031 = vunpack.c.l.b16 %v485
        %v1032 = vunpack.c.l.b16 %v486
        %v1033 = vunpack.c.l.b16 %v487
        %v1034 = vunpack.c.l.b16 %v488
        %v1035 = vunpack.c.l.b16 %v489
        %v1036 = vunpack.c.l.b16 %v490
        %v1037 = vunpack.c.l.b16 %v491
        %v1038 = vunpack.c.l.b16 %v492
        %v1039 = vunpack.c.l.b16 %v493
        %v1040 = vunpack.c.l.b16 %v494
        %v1041 = vunpack.c.l.b16 %v495
        %v1042 = vunpack.c.l.b16 %v496
        %v1043 = vunpack.c.l.b16 %v497
        %v1044 = vunpack.c.l.b16 %v498
        %v1045 = vunpack.c.l.b16 %v499
        %v1046 = vunpack.c.l.b16 %v500
        %v1047 = vunpack.c.l.b16 %v501
        %v1048 = vunpack.c.l.b16 %v502
        %v1049 = vunpack.c.l.b16 %v503
        %v1050 = vunpack.c.l.b16 %v504
        %v1051 = vunpack.c.l.b16 %v505
        %v1052 = vunpack.c.l.b16 %v506
        %v1053 = vunpack.c.l.b16 %v507
        %v1054 = vunpack.c.l.b16 %v508
        %v1055 = vunpack.c.l.b16 %v509
        %v1056 = vunpack.c.l.b16 %v510
        %v1057 = vpack.c.b16 %v1026, %v1025
        %v1058 = vpack.c.b16 %v1028, %v1027
        %v1059 = vpack.c.b16 %v1030, %v1029
        %v1060 = vpack.c.b16 %v1032, %v1031
        %v1061 = vpack.c.b16 %v1034, %v1033
        %v1062 = vpack.c.b16 %v1036, %v1035
        %v1063 = vpack.c.b16 %v1038, %v1037
        %v1064 = vpack.c.b16 %v1040, %v1039
        %v1065 = vpack.c.b16 %v1042, %v1041
        %v1066 = vpack.c.b16 %v1044, %v1043
        %v1067 = vpack.c.b16 %v1046, %v1045
        %v1068 = vpack.c.b16 %v1048, %v1047
        %v1069 = vpack.c.b16 %v1050, %v1049
        %v1070 = vpack.c.b16 %v1052, %v1051
        %v1071 = vpack.c.b16 %v1054, %v1053
        %v1072 = vpack.c.b16 %v1056, %v1055
        %1073 = vrot.lane.b32.xlu0 %v1057, 16
        %v1074 = vpop.permute.xlu0 %1073
        %1075 = vrot.lane.b32.xlu0 %v1058, 16
        %v1076 = vpop.permute.xlu0 %1075
        %1077 = vrot.lane.b32.xlu0 %v1059, 16
        %v1078 = vpop.permute.xlu0 %1077
        %1079 = vrot.lane.b32.xlu0 %v1060, 16
        %v1080 = vpop.permute.xlu0 %1079
        %1081 = vrot.lane.b32.xlu0 %v1061, 16
        %v1082 = vpop.permute.xlu0 %1081
        %1083 = vrot.lane.b32.xlu0 %v1062, 16
        %v1084 = vpop.permute.xlu0 %1083
        %1085 = vrot.lane.b32.xlu0 %v1063, 16
        %v1086 = vpop.permute.xlu0 %1085
        %1087 = vrot.lane.b32.xlu0 %v1064, 16
        %v1088 = vpop.permute.xlu0 %1087
        %1089 = vrot.lane.b32.xlu0 %v1065, 16
        %v1090 = vpop.permute.xlu0 %1089
        %1091 = vrot.lane.b32.xlu0 %v1066, 16
        %v1092 = vpop.permute.xlu0 %1091
        %1093 = vrot.lane.b32.xlu0 %v1067, 16
        %v1094 = vpop.permute.xlu0 %1093
        %1095 = vrot.lane.b32.xlu0 %v1068, 16
        %v1096 = vpop.permute.xlu0 %1095
        %1097 = vrot.lane.b32.xlu0 %v1069, 16
        %v1098 = vpop.permute.xlu0 %1097
        %1099 = vrot.lane.b32.xlu0 %v1070, 16
        %v1100 = vpop.permute.xlu0 %1099
        %1101 = vrot.lane.b32.xlu0 %v1071, 16
        %v1102 = vpop.permute.xlu0 %1101
        %1103 = vrot.lane.b32.xlu0 %v1072, 16
        %v1104 = vpop.permute.xlu0 %1103
        %v1137 = vunpack.c.l.b16 %v512
        %v1138 = vunpack.c.l.b16 %v513
        %v1139 = vunpack.c.l.b16 %v514
        %v1140 = vunpack.c.l.b16 %v515
        %v1141 = vunpack.c.l.b16 %v516
        %v1142 = vunpack.c.l.b16 %v517
        %v1143 = vunpack.c.l.b16 %v518
        %v1144 = vunpack.c.l.b16 %v519
        %v1145 = vunpack.c.l.b16 %v520
        %v1146 = vunpack.c.l.b16 %v521
        %v1147 = vunpack.c.l.b16 %v522
        %v1148 = vunpack.c.l.b16 %v523
        %v1149 = vunpack.c.l.b16 %v524
        %v1150 = vunpack.c.l.b16 %v525
        %v1151 = vunpack.c.l.b16 %v526
        %v1152 = vunpack.c.l.b16 %v527
        %v1153 = vunpack.c.l.b16 %v528
        %v1154 = vunpack.c.l.b16 %v529
        %v1155 = vunpack.c.l.b16 %v530
        %v1156 = vunpack.c.l.b16 %v531
        %v1157 = vunpack.c.l.b16 %v532
        %v1158 = vunpack.c.l.b16 %v533
        %v1159 = vunpack.c.l.b16 %v534
        %v1160 = vunpack.c.l.b16 %v535
        %v1161 = vunpack.c.l.b16 %v536
        %v1162 = vunpack.c.l.b16 %v537
        %v1163 = vunpack.c.l.b16 %v538
        %v1164 = vunpack.c.l.b16 %v539
        %v1165 = vunpack.c.l.b16 %v540
        %v1166 = vunpack.c.l.b16 %v541
        %v1167 = vunpack.c.l.b16 %v542
        %v1168 = vunpack.c.l.b16 %v543
        %v1169 = vpack.c.b16 %v1138, %v1137
        %v1170 = vpack.c.b16 %v1140, %v1139
        %v1171 = vpack.c.b16 %v1142, %v1141
        %v1172 = vpack.c.b16 %v1144, %v1143
        %v1173 = vpack.c.b16 %v1146, %v1145
        %v1174 = vpack.c.b16 %v1148, %v1147
        %v1175 = vpack.c.b16 %v1150, %v1149
        %v1176 = vpack.c.b16 %v1152, %v1151
        %v1177 = vpack.c.b16 %v1154, %v1153
        %v1178 = vpack.c.b16 %v1156, %v1155
        %v1179 = vpack.c.b16 %v1158, %v1157
        %v1180 = vpack.c.b16 %v1160, %v1159
        %v1181 = vpack.c.b16 %v1162, %v1161
        %v1182 = vpack.c.b16 %v1164, %v1163
        %v1183 = vpack.c.b16 %v1166, %v1165
        %v1184 = vpack.c.b16 %v1168, %v1167
        %1185 = vrot.lane.b32.xlu0 %v1169, 20
        %v1186 = vpop.permute.xlu0 %1185
        %1187 = vrot.lane.b32.xlu0 %v1170, 20
        %v1188 = vpop.permute.xlu0 %1187
        %1189 = vrot.lane.b32.xlu0 %v1171, 20
        %v1190 = vpop.permute.xlu0 %1189
        %1191 = vrot.lane.b32.xlu0 %v1172, 20
        %v1192 = vpop.permute.xlu0 %1191
        %1193 = vrot.lane.b32.xlu0 %v1173, 20
        %v1194 = vpop.permute.xlu0 %1193
        %1195 = vrot.lane.b32.xlu0 %v1174, 20
        %v1196 = vpop.permute.xlu0 %1195
        %1197 = vrot.lane.b32.xlu0 %v1175, 20
        %v1198 = vpop.permute.xlu0 %1197
        %1199 = vrot.lane.b32.xlu0 %v1176, 20
        %v1200 = vpop.permute.xlu0 %1199
        %1201 = vrot.lane.b32.xlu0 %v1177, 20
        %v1202 = vpop.permute.xlu0 %1201
        %1203 = vrot.lane.b32.xlu0 %v1178, 20
        %v1204 = vpop.permute.xlu0 %1203
        %1205 = vrot.lane.b32.xlu0 %v1179, 20
        %v1206 = vpop.permute.xlu0 %1205
        %1207 = vrot.lane.b32.xlu0 %v1180, 20
        %v1208 = vpop.permute.xlu0 %1207
        %1209 = vrot.lane.b32.xlu0 %v1181, 20
        %v1210 = vpop.permute.xlu0 %1209
        %1211 = vrot.lane.b32.xlu0 %v1182, 20
        %v1212 = vpop.permute.xlu0 %1211
        %1213 = vrot.lane.b32.xlu0 %v1183, 20
        %v1214 = vpop.permute.xlu0 %1213
        %1215 = vrot.lane.b32.xlu0 %v1184, 20
        %v1216 = vpop.permute.xlu0 %1215
        %v1249 = vunpack.c.l.b16 %v545
        %v1250 = vunpack.c.l.b16 %v546
        %v1251 = vunpack.c.l.b16 %v547
        %v1252 = vunpack.c.l.b16 %v548
        %v1253 = vunpack.c.l.b16 %v549
        %v1254 = vunpack.c.l.b16 %v550
        %v1255 = vunpack.c.l.b16 %v551
        %v1256 = vunpack.c.l.b16 %v552
        %v1257 = vunpack.c.l.b16 %v553
        %v1258 = vunpack.c.l.b16 %v554
        %v1259 = vunpack.c.l.b16 %v555
        %v1260 = vunpack.c.l.b16 %v556
        %v1261 = vunpack.c.l.b16 %v557
        %v1262 = vunpack.c.l.b16 %v558
        %v1263 = vunpack.c.l.b16 %v559
        %v1264 = vunpack.c.l.b16 %v560
        %v1265 = vunpack.c.l.b16 %v561
        %v1266 = vunpack.c.l.b16 %v562
        %v1267 = vunpack.c.l.b16 %v563
        %v1268 = vunpack.c.l.b16 %v564
        %v1269 = vunpack.c.l.b16 %v565
        %v1270 = vunpack.c.l.b16 %v566
        %v1271 = vunpack.c.l.b16 %v567
        %v1272 = vunpack.c.l.b16 %v568
        %v1273 = vunpack.c.l.b16 %v569
        %v1274 = vunpack.c.l.b16 %v570
        %v1275 = vunpack.c.l.b16 %v571
        %v1276 = vunpack.c.l.b16 %v572
        %v1277 = vunpack.c.l.b16 %v573
        %v1278 = vunpack.c.l.b16 %v574
        %v1279 = vunpack.c.l.b16 %v575
        %v1280 = vunpack.c.l.b16 %v576
        %v1281 = vpack.c.b16 %v1250, %v1249
        %v1282 = vpack.c.b16 %v1252, %v1251
        %v1283 = vpack.c.b16 %v1254, %v1253
        %v1284 = vpack.c.b16 %v1256, %v1255
        %v1285 = vpack.c.b16 %v1258, %v1257
        %v1286 = vpack.c.b16 %v1260, %v1259
        %v1287 = vpack.c.b16 %v1262, %v1261
        %v1288 = vpack.c.b16 %v1264, %v1263
        %v1289 = vpack.c.b16 %v1266, %v1265
        %v1290 = vpack.c.b16 %v1268, %v1267
        %v1291 = vpack.c.b16 %v1270, %v1269
        %v1292 = vpack.c.b16 %v1272, %v1271
        %v1293 = vpack.c.b16 %v1274, %v1273
        %v1294 = vpack.c.b16 %v1276, %v1275
        %v1295 = vpack.c.b16 %v1278, %v1277
        %v1296 = vpack.c.b16 %v1280, %v1279
        %1297 = vrot.lane.b32.xlu0 %v1281, 24
        %v1298 = vpop.permute.xlu0 %1297
        %1299 = vrot.lane.b32.xlu0 %v1282, 24
        %v1300 = vpop.permute.xlu0 %1299
        %1301 = vrot.lane.b32.xlu0 %v1283, 24
        %v1302 = vpop.permute.xlu0 %1301
        %1303 = vrot.lane.b32.xlu0 %v1284, 24
        %v1304 = vpop.permute.xlu0 %1303
        %1305 = vrot.lane.b32.xlu0 %v1285, 24
        %v1306 = vpop.permute.xlu0 %1305
        %1307 = vrot.lane.b32.xlu0 %v1286, 24
        %v1308 = vpop.permute.xlu0 %1307
        %1309 = vrot.lane.b32.xlu0 %v1287, 24
        %v1310 = vpop.permute.xlu0 %1309
        %1311 = vrot.lane.b32.xlu0 %v1288, 24
        %v1312 = vpop.permute.xlu0 %1311
        %1313 = vrot.lane.b32.xlu0 %v1289, 24
        %v1314 = vpop.permute.xlu0 %1313
        %1315 = vrot.lane.b32.xlu0 %v1290, 24
        %v1316 = vpop.permute.xlu0 %1315
        %1317 = vrot.lane.b32.xlu0 %v1291, 24
        %v1318 = vpop.permute.xlu0 %1317
        %1319 = vrot.lane.b32.xlu0 %v1292, 24
        %v1320 = vpop.permute.xlu0 %1319
        %1321 = vrot.lane.b32.xlu0 %v1293, 24
        %v1322 = vpop.permute.xlu0 %1321
        %1323 = vrot.lane.b32.xlu0 %v1294, 24
        %v1324 = vpop.permute.xlu0 %1323
        %1325 = vrot.lane.b32.xlu0 %v1295, 24
        %v1326 = vpop.permute.xlu0 %1325
        %1327 = vrot.lane.b32.xlu0 %v1296, 24
        %v1328 = vpop.permute.xlu0 %1327
        %vm1329 = vcmask 31744
        %v1332 = vsel %vm1329, %v641, %v738
        %v1335 = vsel %vm1329, %v642, %v740
        %v1338 = vsel %vm1329, %v643, %v742
        %v1341 = vsel %vm1329, %v644, %v744
        %v1344 = vsel %vm1329, %v645, %v746
        %v1347 = vsel %vm1329, %v646, %v748
        %v1350 = vsel %vm1329, %v647, %v750
        %v1353 = vsel %vm1329, %v648, %v752
        %v1356 = vsel %vm1329, %v649, %v754
        %v1359 = vsel %vm1329, %v650, %v756
        %v1362 = vsel %vm1329, %v651, %v758
        %v1365 = vsel %vm1329, %v652, %v760
        %v1368 = vsel %vm1329, %v653, %v762
        %v1371 = vsel %vm1329, %v654, %v764
        %v1374 = vsel %vm1329, %v655, %v766
        %v1377 = vsel %vm1329, %v656, %v768
        %vm1378 = vcmask 64512
        %v1380 = vsel %vm1378, %v1332, %v850
        %v1382 = vsel %vm1378, %v1335, %v852
        %v1384 = vsel %vm1378, %v1338, %v854
        %v1386 = vsel %vm1378, %v1341, %v856
        %v1388 = vsel %vm1378, %v1344, %v858
        %v1390 = vsel %vm1378, %v1347, %v860
        %v1392 = vsel %vm1378, %v1350, %v862
        %v1394 = vsel %vm1378, %v1353, %v864
        %v1396 = vsel %vm1378, %v1356, %v866
        %v1398 = vsel %vm1378, %v1359, %v868
        %v1400 = vsel %vm1378, %v1362, %v870
        %v1402 = vsel %vm1378, %v1365, %v872
        %v1404 = vsel %vm1378, %v1368, %v874
        %v1406 = vsel %vm1378, %v1371, %v876
        %v1408 = vsel %vm1378, %v1374, %v878
        %v1410 = vsel %vm1378, %v1377, %v880
        %vm1411 = vcmask 97280
        %v1413 = vsel %vm1411, %v1380, %v962
        %v1415 = vsel %vm1411, %v1382, %v964
        %v1417 = vsel %vm1411, %v1384, %v966
        %v1419 = vsel %vm1411, %v1386, %v968
        %v1421 = vsel %vm1411, %v1388, %v970
        %v1423 = vsel %vm1411, %v1390, %v972
        %v1425 = vsel %vm1411, %v1392, %v974
        %v1427 = vsel %vm1411, %v1394, %v976
        %v1429 = vsel %vm1411, %v1396, %v978
        %v1431 = vsel %vm1411, %v1398, %v980
        %v1433 = vsel %vm1411, %v1400, %v982
        %v1435 = vsel %vm1411, %v1402, %v984
        %v1437 = vsel %vm1411, %v1404, %v986
        %v1439 = vsel %vm1411, %v1406, %v988
        %v1441 = vsel %vm1411, %v1408, %v990
        %v1443 = vsel %vm1411, %v1410, %v992
        %vm1444 = vcmask 130048
        %v1446 = vsel %vm1444, %v1413, %v1074
        %v1448 = vsel %vm1444, %v1415, %v1076
        %v1450 = vsel %vm1444, %v1417, %v1078
        %v1452 = vsel %vm1444, %v1419, %v1080
        %v1454 = vsel %vm1444, %v1421, %v1082
        %v1456 = vsel %vm1444, %v1423, %v1084
        %v1458 = vsel %vm1444, %v1425, %v1086
        %v1460 = vsel %vm1444, %v1427, %v1088
        %v1462 = vsel %vm1444, %v1429, %v1090
        %v1464 = vsel %vm1444, %v1431, %v1092
        %v1466 = vsel %vm1444, %v1433, %v1094
        %v1468 = vsel %vm1444, %v1435, %v1096
        %v1470 = vsel %vm1444, %v1437, %v1098
        %v1472 = vsel %vm1444, %v1439, %v1100
        %v1474 = vsel %vm1444, %v1441, %v1102
        %v1476 = vsel %vm1444, %v1443, %v1104
        %vm1477 = vcmask 162816
        %v1479 = vsel %vm1477, %v1446, %v1186
        %v1481 = vsel %vm1477, %v1448, %v1188
        %v1483 = vsel %vm1477, %v1450, %v1190
        %v1485 = vsel %vm1477, %v1452, %v1192
        %v1487 = vsel %vm1477, %v1454, %v1194
        %v1489 = vsel %vm1477, %v1456, %v1196
        %v1491 = vsel %vm1477, %v1458, %v1198
        %v1493 = vsel %vm1477, %v1460, %v1200
        %v1495 = vsel %vm1477, %v1462, %v1202
        %v1497 = vsel %vm1477, %v1464, %v1204
        %v1499 = vsel %vm1477, %v1466, %v1206
        %v1501 = vsel %vm1477, %v1468, %v1208
        %v1503 = vsel %vm1477, %v1470, %v1210
        %v1505 = vsel %vm1477, %v1472, %v1212
        %v1507 = vsel %vm1477, %v1474, %v1214
        %v1509 = vsel %vm1477, %v1476, %v1216
        %vm1510 = vcmask 195584
        %v1512 = vsel %vm1510, %v1479, %v1298
        %v1514 = vsel %vm1510, %v1481, %v1300
        %v1516 = vsel %vm1510, %v1483, %v1302
        %v1518 = vsel %vm1510, %v1485, %v1304
        %v1520 = vsel %vm1510, %v1487, %v1306
        %v1522 = vsel %vm1510, %v1489, %v1308
        %v1524 = vsel %vm1510, %v1491, %v1310
        %v1526 = vsel %vm1510, %v1493, %v1312
        %v1528 = vsel %vm1510, %v1495, %v1314
        %v1530 = vsel %vm1510, %v1497, %v1316
        %v1532 = vsel %vm1510, %v1499, %v1318
        %v1534 = vsel %vm1510, %v1501, %v1320
        %v1536 = vsel %vm1510, %v1503, %v1322
        %v1538 = vsel %vm1510, %v1505, %v1324
        %v1540 = vsel %vm1510, %v1507, %v1326
        %v1542 = vsel %vm1510, %v1509, %v1328
        %v1543 = vld [vmem:[%s1] sm:$0xf]
        %v1544 = vld [vmem:[%s1 + $0x4] sm:$0xf]
        %v1545 = vld [vmem:[%s1 + $0x8] sm:$0xf]
        %v1546 = vld [vmem:[%s1 + $0xc] sm:$0x3]
        %v1551 = vunpack.c.l.b16 %v1543
        %v1552 = vunpack.c.l.b16 %v1544
        %v1553 = vunpack.c.l.b16 %v1545
        %v1554 = vunpack.c.l.b16 %v1546
        %v1555 = vpack.c.b16 %v1552, %v1551
        %v1556 = vpack.c.b16 %v1554, %v1553
        %vm1558 = vcmask 228352
        %v1559 = vsel %vm1558, %v1512, 0
        %v1561 = vsel %vm1558, %v1514, 0
        %v1563 = vsel %vm1558, %v1516, 0
        %v1565 = vsel %vm1558, %v1518, 0
        %v1567 = vsel %vm1558, %v1520, 0
        %v1569 = vsel %vm1558, %v1522, 0
        %v1571 = vsel %vm1558, %v1524, 0
        %v1573 = vsel %vm1558, %v1526, 0
        %v1575 = vsel %vm1558, %v1528, 0
        %v1577 = vsel %vm1558, %v1530, 0
        %v1579 = vsel %vm1558, %v1532, 0
        %v1581 = vsel %vm1558, %v1534, 0
        %v1583 = vsel %vm1558, %v1536, 0
        %v1585 = vsel %vm1558, %v1538, 0
        %v1587 = vsel %vm1558, %v1540, 0
        %v1589 = vsel %vm1558, %v1542, 0
        %vm1591 = vcmask 1045504
        %v1593 = vsel %vm1591, %v1556, 0
        %1595 = vmatprep.subr.bf16.mxu0 0
        %1596 = vmatpush1.bf16.msra.mxu0 0
        %1597 = vmatprep.subr.bf16.mxu0 0
        %1598 = vmatpush1.bf16.msra.mxu0 0
        %1599 = vmatprep.subr.bf16.mxu0 0
        %1600 = vmatpush1.bf16.msra.mxu0 0
        %1601 = vmatprep.subr.bf16.mxu0 0
        %1602 = vmatpush1.bf16.msra.mxu0 0
        %1603 = vmatprep.subr.bf16.mxu0 0
        %1604 = vmatpush1.bf16.msra.mxu0 0
        %1605 = vmatprep.subr.bf16.mxu0 0
        %1606 = vmatpush1.bf16.msra.mxu0 0
        %1607 = vmatprep.subr.bf16.mxu0 0
        %1608 = vmatpush1.bf16.msra.mxu0 %v1593
        %1609 = vmatprep.subr.bf16.mxu0 0
        %1610 = vmatpush1.bf16.msra.mxu0 %v1555
        %1611 = vmatprep.subr.bf16.mxu0 0
        %1612 = vmatpush2.bf16.msra.mxu0 0
        %1613 = vmatprep.subr.bf16.mxu0 0
        %1614 = vmatpush2.bf16.msra.mxu0 0
        %1615 = vmatprep.subr.bf16.mxu0 0
        %1616 = vmatpush2.bf16.msra.mxu0 0
        %1617 = vmatprep.subr.bf16.mxu0 0
        %1618 = vmatpush2.bf16.msra.mxu0 0
        %1619 = vmatprep.subr.bf16.mxu0 0
        %1620 = vmatpush2.bf16.msra.mxu0 0
        %1621 = vmatprep.subr.bf16.mxu0 0
        %1622 = vmatpush2.bf16.msra.mxu0 0
        %1623 = vmatprep.subr.bf16.mxu0 0
        %1624 = vmatpush2.bf16.msra.mxu0 0
        %1625 = vmatprep.subr.bf16.mxu0 0
        %1626 = vmatpush2.bf16.msra.mxu0 0
        %1627 = vmatprep.mubr.bf16.mxu0 0
        %1628 = vmatmul.mubr.bf16.gmra.mxu0 %v1559
        %v1629 = vpop.f32.mrf.mxu0
        %v1630 = vadd.f32 0.0, %v1629
        %v1631 = vpop.f32.mrf.mxu0
        %v1632 = vpop.f32.mrf.mxu0
        %v1633 = vadd.f32 0.0, %v1632
        %v1634 = vpop.f32.mrf.mxu0
        %1635 = vmatprep.mubr.bf16.mxu0 0
        %1636 = vmatmul.mubr.bf16.gmra.mxu0 %v1561
        %v1637 = vpop.f32.mrf.mxu0
        %v1638 = vadd.f32 0.0, %v1637
        %v1639 = vpop.f32.mrf.mxu0
        %v1640 = vpop.f32.mrf.mxu0
        %v1641 = vadd.f32 0.0, %v1640
        %v1642 = vpop.f32.mrf.mxu0
        %1643 = vmatprep.mubr.bf16.mxu0 0
        %1644 = vmatmul.mubr.bf16.gmra.mxu0 %v1563
        %v1645 = vpop.f32.mrf.mxu0
        %v1646 = vadd.f32 0.0, %v1645
        %v1647 = vpop.f32.mrf.mxu0
        %v1648 = vpop.f32.mrf.mxu0
        %v1649 = vadd.f32 0.0, %v1648
        %v1650 = vpop.f32.mrf.mxu0
        %1651 = vmatprep.mubr.bf16.mxu0 0
        %1652 = vmatmul.mubr.bf16.gmra.mxu0 %v1565
        %v1653 = vpop.f32.mrf.mxu0
        %v1654 = vadd.f32 0.0, %v1653
        %v1655 = vpop.f32.mrf.mxu0
        %v1656 = vpop.f32.mrf.mxu0
        %v1657 = vadd.f32 0.0, %v1656
        %v1658 = vpop.f32.mrf.mxu0
        %1659 = vmatprep.mubr.bf16.mxu0 0
        %1660 = vmatmul.mubr.bf16.gmra.mxu0 %v1567
        %v1661 = vpop.f32.mrf.mxu0
        %v1662 = vadd.f32 0.0, %v1661
        %v1663 = vpop.f32.mrf.mxu0
        %v1664 = vpop.f32.mrf.mxu0
        %v1665 = vadd.f32 0.0, %v1664
        %v1666 = vpop.f32.mrf.mxu0
        %1667 = vmatprep.mubr.bf16.mxu0 0
        %1668 = vmatmul.mubr.bf16.gmra.mxu0 %v1569
        %v1669 = vpop.f32.mrf.mxu0
        %v1670 = vadd.f32 0.0, %v1669
        %v1671 = vpop.f32.mrf.mxu0
        %v1672 = vpop.f32.mrf.mxu0
        %v1673 = vadd.f32 0.0, %v1672
        %v1674 = vpop.f32.mrf.mxu0
        %1675 = vmatprep.mubr.bf16.mxu0 0
        %1676 = vmatmul.mubr.bf16.gmra.mxu0 %v1571
        %v1677 = vpop.f32.mrf.mxu0
        %v1678 = vadd.f32 0.0, %v1677
        %v1679 = vpop.f32.mrf.mxu0
        %v1680 = vpop.f32.mrf.mxu0
        %v1681 = vadd.f32 0.0, %v1680
        %v1682 = vpop.f32.mrf.mxu0
        %1683 = vmatprep.mubr.bf16.mxu0 0
        %1684 = vmatmul.mubr.bf16.gmra.mxu0 %v1573
        %v1685 = vpop.f32.mrf.mxu0
        %v1686 = vadd.f32 0.0, %v1685
        %v1687 = vpop.f32.mrf.mxu0
        %v1688 = vpop.f32.mrf.mxu0
        %v1689 = vadd.f32 0.0, %v1688
        %v1690 = vpop.f32.mrf.mxu0
        %1691 = vmatprep.mubr.bf16.mxu0 0
        %1692 = vmatmul.mubr.bf16.gmra.mxu0 %v1575
        %v1693 = vpop.f32.mrf.mxu0
        %v1694 = vadd.f32 0.0, %v1693
        %v1695 = vpop.f32.mrf.mxu0
        %v1696 = vpop.f32.mrf.mxu0
        %v1697 = vadd.f32 0.0, %v1696
        %v1698 = vpop.f32.mrf.mxu0
        %1699 = vmatprep.mubr.bf16.mxu0 0
        %1700 = vmatmul.mubr.bf16.gmra.mxu0 %v1577
        %v1701 = vpop.f32.mrf.mxu0
        %v1702 = vadd.f32 0.0, %v1701
        %v1703 = vpop.f32.mrf.mxu0
        %v1704 = vpop.f32.mrf.mxu0
        %v1705 = vadd.f32 0.0, %v1704
        %v1706 = vpop.f32.mrf.mxu0
        %1707 = vmatprep.mubr.bf16.mxu0 0
        %1708 = vmatmul.mubr.bf16.gmra.mxu0 %v1579
        %v1709 = vpop.f32.mrf.mxu0
        %v1710 = vadd.f32 0.0, %v1709
        %v1711 = vpop.f32.mrf.mxu0
        %v1712 = vpop.f32.mrf.mxu0
        %v1713 = vadd.f32 0.0, %v1712
        %v1714 = vpop.f32.mrf.mxu0
        %1715 = vmatprep.mubr.bf16.mxu0 0
        %1716 = vmatmul.mubr.bf16.gmra.mxu0 %v1581
        %v1717 = vpop.f32.mrf.mxu0
        %v1718 = vadd.f32 0.0, %v1717
        %v1719 = vpop.f32.mrf.mxu0
        %v1720 = vpop.f32.mrf.mxu0
        %v1721 = vadd.f32 0.0, %v1720
        %v1722 = vpop.f32.mrf.mxu0
        %1723 = vmatprep.mubr.bf16.mxu0 0
        %1724 = vmatmul.mubr.bf16.gmra.mxu0 %v1583
        %v1725 = vpop.f32.mrf.mxu0
        %v1726 = vadd.f32 0.0, %v1725
        %v1727 = vpop.f32.mrf.mxu0
        %v1728 = vpop.f32.mrf.mxu0
        %v1729 = vadd.f32 0.0, %v1728
        %v1730 = vpop.f32.mrf.mxu0
        %1731 = vmatprep.mubr.bf16.mxu0 0
        %1732 = vmatmul.mubr.bf16.gmra.mxu0 %v1585
        %v1733 = vpop.f32.mrf.mxu0
        %v1734 = vadd.f32 0.0, %v1733
        %v1735 = vpop.f32.mrf.mxu0
        %v1736 = vpop.f32.mrf.mxu0
        %v1737 = vadd.f32 0.0, %v1736
        %v1738 = vpop.f32.mrf.mxu0
        %1739 = vmatprep.mubr.bf16.mxu0 0
        %1740 = vmatmul.mubr.bf16.gmra.mxu0 %v1587
        %v1741 = vpop.f32.mrf.mxu0
        %v1742 = vadd.f32 0.0, %v1741
        %v1743 = vpop.f32.mrf.mxu0
        %v1744 = vpop.f32.mrf.mxu0
        %v1745 = vadd.f32 0.0, %v1744
        %v1746 = vpop.f32.mrf.mxu0
        %1747 = vmatprep.mubr.bf16.mxu0 0
        %1748 = vmatmul.mubr.bf16.gmra.mxu0 %v1589
        %v1749 = vpop.f32.mrf.mxu0
        %v1750 = vadd.f32 0.0, %v1749
        %v1751 = vpop.f32.mrf.mxu0
        %v1752 = vpop.f32.mrf.mxu0
        %v1753 = vadd.f32 0.0, %v1752
        %v1754 = vpop.f32.mrf.mxu0
        %1755 = vdwg.mxu0
        %v1756 = vadd.f32 %v1630, %v1633
        %v1757 = vadd.f32 %v1756, %v1638
        %v1758 = vadd.f32 %v1757, %v1641
        %v1759 = vadd.f32 %v1758, %v1646
        %v1760 = vadd.f32 %v1759, %v1649
        %v1761 = vadd.f32 %v1760, %v1654
        %v1762 = vadd.f32 %v1761, %v1657
        %v1763 = vadd.f32 %v1762, %v1662
        %v1764 = vadd.f32 %v1763, %v1665
        %v1765 = vadd.f32 %v1764, %v1670
        %v1766 = vadd.f32 %v1765, %v1673
        %v1767 = vadd.f32 %v1766, %v1678
        %v1768 = vadd.f32 %v1767, %v1681
        %v1769 = vadd.f32 %v1768, %v1686
        %v1770 = vadd.f32 %v1769, %v1689
        %v1771 = vadd.f32 %v1770, %v1694
        %v1772 = vadd.f32 %v1771, %v1697
        %v1773 = vadd.f32 %v1772, %v1702
        %v1774 = vadd.f32 %v1773, %v1705
        %v1775 = vadd.f32 %v1774, %v1710
        %v1776 = vadd.f32 %v1775, %v1713
        %v1777 = vadd.f32 %v1776, %v1718
        %v1778 = vadd.f32 %v1777, %v1721
        %v1779 = vadd.f32 %v1778, %v1726
        %v1780 = vadd.f32 %v1779, %v1729
        %v1781 = vadd.f32 %v1780, %v1734
        %v1782 = vadd.f32 %v1781, %v1737
        %v1783 = vadd.f32 %v1782, %v1742
        %v1784 = vadd.f32 %v1783, %v1745
        %v1785 = vadd.f32 %v1784, %v1750
        %v1786 = vadd.f32 %v1785, %v1753
        %v1787 = vrot.slane %v1786, 4
        %v1788 = vadd.f32 %v1786, %v1787
        %v1789 = vrot.slane %v1788, 2
        %v1790 = vadd.f32 %v1788, %v1789
        %v1791 = vrot.slane %v1790, 1
        %v1792 = vadd.f32 %v1790, %v1791
        %v1793 = vmul.f32 %v1630, %v1630
        %v1794 = vmul.f32 %v1633, %v1633
        %v1795 = vmul.f32 %v1638, %v1638
        %v1796 = vmul.f32 %v1641, %v1641
        %v1797 = vmul.f32 %v1646, %v1646
        %v1798 = vmul.f32 %v1649, %v1649
        %v1799 = vmul.f32 %v1654, %v1654
        %v1800 = vmul.f32 %v1657, %v1657
        %v1801 = vmul.f32 %v1662, %v1662
        %v1802 = vmul.f32 %v1665, %v1665
        %v1803 = vmul.f32 %v1670, %v1670
        %v1804 = vmul.f32 %v1673, %v1673
        %v1805 = vmul.f32 %v1678, %v1678
        %v1806 = vmul.f32 %v1681, %v1681
        %v1807 = vmul.f32 %v1686, %v1686
        %v1808 = vmul.f32 %v1689, %v1689
        %v1809 = vmul.f32 %v1694, %v1694
        %v1810 = vmul.f32 %v1697, %v1697
        %v1811 = vmul.f32 %v1702, %v1702
        %v1812 = vmul.f32 %v1705, %v1705
        %v1813 = vmul.f32 %v1710, %v1710
        %v1814 = vmul.f32 %v1713, %v1713
        %v1815 = vmul.f32 %v1718, %v1718
        %v1816 = vmul.f32 %v1721, %v1721
        %v1817 = vmul.f32 %v1726, %v1726
        %v1818 = vmul.f32 %v1729, %v1729
        %v1819 = vmul.f32 %v1734, %v1734
        %v1820 = vmul.f32 %v1737, %v1737
        %v1821 = vmul.f32 %v1742, %v1742
        %v1822 = vmul.f32 %v1745, %v1745
        %v1823 = vmul.f32 %v1750, %v1750
        %v1824 = vmul.f32 %v1753, %v1753
        %v1825 = vadd.f32 %v1793, %v1794
        %v1826 = vadd.f32 %v1825, %v1795
        %v1827 = vadd.f32 %v1826, %v1796
        %v1828 = vadd.f32 %v1827, %v1797
        %v1829 = vadd.f32 %v1828, %v1798
        %v1830 = vadd.f32 %v1829, %v1799
        %v1831 = vadd.f32 %v1830, %v1800
        %v1832 = vadd.f32 %v1831, %v1801
        %v1833 = vadd.f32 %v1832, %v1802
        %v1834 = vadd.f32 %v1833, %v1803
        %v1835 = vadd.f32 %v1834, %v1804
        %v1836 = vadd.f32 %v1835, %v1805
        %v1837 = vadd.f32 %v1836, %v1806
        %v1838 = vadd.f32 %v1837, %v1807
        %v1839 = vadd.f32 %v1838, %v1808
        %v1840 = vadd.f32 %v1839, %v1809
        %v1841 = vadd.f32 %v1840, %v1810
        %v1842 = vadd.f32 %v1841, %v1811
        %v1843 = vadd.f32 %v1842, %v1812
        %v1844 = vadd.f32 %v1843, %v1813
        %v1845 = vadd.f32 %v1844, %v1814
        %v1846 = vadd.f32 %v1845, %v1815
        %v1847 = vadd.f32 %v1846, %v1816
        %v1848 = vadd.f32 %v1847, %v1817
        %v1849 = vadd.f32 %v1848, %v1818
        %v1850 = vadd.f32 %v1849, %v1819
        %v1851 = vadd.f32 %v1850, %v1820
        %v1852 = vadd.f32 %v1851, %v1821
        %v1853 = vadd.f32 %v1852, %v1822
        %v1854 = vadd.f32 %v1853, %v1823
        %v1855 = vadd.f32 %v1854, %v1824
        %v1856 = vrot.slane %v1855, 4
        %v1857 = vadd.f32 %v1855, %v1856
        %v1858 = vrot.slane %v1857, 2
        %v1859 = vadd.f32 %v1857, %v1858
        %v1860 = vrot.slane %v1859, 1
        %v1861 = vadd.f32 %v1859, %v1860
        %p1862 = scmp.eq.s32.totalorder %s13, 0
        // Predicated region
        $region70: #{run.4} parent=64 // pred_check
          %p1863 = pneg %p1862
        $region71: #{run.4} parent=64 // pred_check_branch
          %1865 = sbr.rel (%p1863) target = $region73
        $region72: #{run.4} parent=64 // pred_region
          %1866 = vst [vmem:[%s2] sm:$0x3] 0.0
        $region73: #{run.4} parent=64 // pred_fallthru
          _
        %v1867 = vld [vmem:[%s2] sm:$0x3]
        %vm1868 = vcmask 1040384
        %v1869 = vsel %vm1868, %v1792, %v1861
        %v1870 = vadd.f32 %v1867, %v1869
        %1871 = vst [vmem:[%s2] sm:$0x3] %v1870
        // Predicated region
        $region74: #{run.4} parent=64 // pred_check
          %p1872 = pneg %p73
        $region75: #{run.4} parent=64 // pred_check_branch
          %1874 = sbr.rel (%p1872) target = $region77
        $region76: #{run.4} parent=64 // pred_region
          _
        $region77: #{run.4} parent=64 // pred_fallthru
          _
        // Predicated region
        $region78: #{run.4} parent=64 // pred_check
          %p1875 = pneg %p73
        $region79: #{run.4} parent=64 // pred_check_branch
          %1877 = sbr.rel (%p1875) target = $region81
        $region80: #{run.4} parent=64 // pred_region
          _
        $region81: #{run.4} parent=64 // pred_fallthru
          _
      $region65: #{run.4} parent=5 // pred_fallthru
        _
      %p1878 = scmp.le.s32.totalorder 2, %s8
      // Predicated region
      $region82: #{run.4} parent=5 // pred_check
        %p1879 = pneg %p1878
      $region83: #{run.4} parent=5 // pred_check_branch
        %1881 = sbr.rel (%p1879) target = $region85
      $region84: #{run.4} parent=5 // pred_region
        %s1882 = ssub.s32 %s8, 2
      $region85: #{run.4} parent=5 // pred_fallthru
        _
    $region6: #{run.4} parent=1 // loop_footer
      %s12 = sadd.s32 1, %s8
    $region7: #{run.4} parent=1 // loop_footer_branch
      %7 = sbr.rel target = $region3
    $region8: #{run.4} parent=1 // loop_exit
      _

// kernel: run.5
$region0: #{run.5}
  #allocation0 [shape = 'u32[]', space=smem, size = 0x4, offset = 0x4, fixed_abs, tag = 'smem constant byte address 0x4 - core index']
  #allocation1 [shape = 'u32[144,128]{1,0:T(1,128)}', space=vmem, size = 0x12000, scoped, tag = 'internal scratch']
  %s0 = inlined_call_operand.vmem [shape: bf16[22,32,4], index: 0, kind: input, shape index: {}]
  %s1 = inlined_call_operand.vmem [shape: bf16[28,128], index: 1, kind: input, shape index: {}]
  %s2 = inlined_call_operand.vmem [shape: f32[1,128], index: 2, kind: input, shape index: {}]
  %s3 = inlined_call_operand.vmem [shape: f32[1,128], index: 3, kind: input, shape index: {}]
  %s4 = inlined_call_operand.vmem [shape: f32[16,32,128], index: 4, kind: output, shape index: {}]
  %s5 = sld [smem:[#allocation0]]
  $region124: #{run.5} parent=0
    _
  %s7 = ssub.s32 1, %s5
  %s8 = scalar_select 0, %s7, %s5
  $region1: #{run.5} parent=0
    #allocation2 [shape = 'u8[180224]{0}', space=vmem, size = 0x2c000, scoped, tag = 'input window, operand 0']
    #allocation3 [shape = 'u8[262144]{0}', space=vmem, size = 0x40000, scoped, tag = 'output window, operand 0']
    loop: start=0, step=1, limit=4
    $region2: #{run.5} parent=1 // loop_pre_header
      _
    $region3: #{run.5} parent=1 // loop_header
      %s10 = sphi 0, %s14
      %p11 = scmp.ge.s32.totalorder %s10, 4
      %s20 = sphi 0, %s22
      %s23 = sphi 0, %s20
      %s24 = sphi 0, %s23
      %s40 = sphi 0, %s24
      %s44 = sphi 0, %s44
      %s46 = sphi 0, %s44
      %s47 = sphi 0, %s46
      %s61 = sphi 0, %s47
      %s65 = sphi 0, %s65
      %s67 = sphi 0, %s65
      %s68 = sphi 0, %s67
      %s82 = sphi 0, %s68
      %s86 = sphi 0, %s86
      %s88 = sphi 0, %s86
      %s89 = sphi 0, %s88
      %s103 = sphi 0, %s89
      %s109 = sphi 0, %s111
      %s112 = sphi 0, %s109
      %s113 = sphi 0, %s112
      %s129 = sphi 0, %s113
    $region4: #{run.5} parent=1 // loop_header_branch
      %13 = sbr.rel (%p11) target = $region8
    $region5: #{run.5} parent=1 // loop_body
      %s15 = ssub.s32 %s10, 1
      %s16 = ssub.s32 %s10, 2
      %s17 = sadd.s32 %s10, 1
      %s18 = ssub.s32 %s10, %s17
      %p19 = scmp.eq.s32.totalorder %s18, 0
      %s21 = sadd.s32 %s20, 1
      %s22 = scalar_select %p19, %s20, %s21
      %p25 = pneg %p19
      %p26 = scmp.eq.s32.totalorder %s10, 1
      %p27 = por %p25, %p26
      %p28 = scmp.ne.s32.totalorder %s20, %s23
      %p29 = scmp.eq.s32.totalorder %s10, 0
      %p30 = por %p28, %p29
      %p31 = scmp.ne.s32.totalorder %s20, %s23
      %p32 = scmp.eq.s32.totalorder %s15, 1
      %p33 = por %p31, %p32
      %p34 = scmp.ne.s32.totalorder %s23, %s24
      %p35 = scmp.eq.s32.totalorder %s15, 0
      %p36 = por %p34, %p35
      %p37 = scmp.ne.s32.totalorder %s23, %s24
      %p38 = scmp.eq.s32.totalorder %s16, 1
      %p39 = por %p37, %p38
      %p41 = scmp.ne.s32.totalorder %s24, %s40
      %p42 = scmp.eq.s32.totalorder %s16, 0
      %p43 = por %p41, %p42
      %s45 = sadd.s32 %s44, 1
      %p48 = scmp.eq.s32.totalorder %s10, 1
      %p49 = scmp.ne.s32.totalorder %s44, %s46
      %p50 = scmp.eq.s32.totalorder %s10, 0
      %p51 = por %p49, %p50
      %p52 = scmp.ne.s32.totalorder %s44, %s46
      %p53 = scmp.eq.s32.totalorder %s15, 1
      %p54 = por %p52, %p53
      %p55 = scmp.ne.s32.totalorder %s46, %s47
      %p56 = scmp.eq.s32.totalorder %s15, 0
      %p57 = por %p55, %p56
      %p58 = scmp.ne.s32.totalorder %s46, %s47
      %p59 = scmp.eq.s32.totalorder %s16, 1
      %p60 = por %p58, %p59
      %p62 = scmp.ne.s32.totalorder %s47, %s61
      %p63 = scmp.eq.s32.totalorder %s16, 0
      %p64 = por %p62, %p63
      %s66 = sadd.s32 %s65, 1
      %p69 = scmp.eq.s32.totalorder %s10, 1
      %p70 = scmp.ne.s32.totalorder %s65, %s67
      %p71 = scmp.eq.s32.totalorder %s10, 0
      %p72 = por %p70, %p71
      %p73 = scmp.ne.s32.totalorder %s65, %s67
      %p74 = scmp.eq.s32.totalorder %s15, 1
      %p75 = por %p73, %p74
      %p76 = scmp.ne.s32.totalorder %s67, %s68
      %p77 = scmp.eq.s32.totalorder %s15, 0
      %p78 = por %p76, %p77
      %p79 = scmp.ne.s32.totalorder %s67, %s68
      %p80 = scmp.eq.s32.totalorder %s16, 1
      %p81 = por %p79, %p80
      %p83 = scmp.ne.s32.totalorder %s68, %s82
      %p84 = scmp.eq.s32.totalorder %s16, 0
      %p85 = por %p83, %p84
      %s87 = sadd.s32 %s86, 1
      %p90 = scmp.eq.s32.totalorder %s10, 1
      %p91 = scmp.ne.s32.totalorder %s86, %s88
      %p92 = scmp.eq.s32.totalorder %s10, 0
      %p93 = por %p91, %p92
      %p94 = scmp.ne.s32.totalorder %s86, %s88
      %p95 = scmp.eq.s32.totalorder %s15, 1
      %p96 = por %p94, %p95
      %p97 = scmp.ne.s32.totalorder %s88, %s89
      %p98 = scmp.eq.s32.totalorder %s15, 0
      %p99 = por %p97, %p98
      %p100 = scmp.ne.s32.totalorder %s88, %s89
      %p101 = scmp.eq.s32.totalorder %s16, 1
      %p102 = por %p100, %p101
      %p104 = scmp.ne.s32.totalorder %s89, %s103
      %p105 = scmp.eq.s32.totalorder %s16, 0
      %p106 = por %p104, %p105
      %s107 = ssub.s32 %s10, %s17
      %p108 = scmp.eq.s32.totalorder %s107, 0
      %s110 = sadd.s32 %s109, 1
      %s111 = scalar_select %p108, %s109, %s110
      %p114 = pneg %p108
      %p115 = scmp.eq.s32.totalorder %s10, 1
      %p116 = por %p114, %p115
      %p117 = scmp.ne.s32.totalorder %s109, %s112
      %p118 = scmp.eq.s32.totalorder %s10, 0
      %p119 = por %p117, %p118
      %p120 = scmp.ne.s32.totalorder %s109, %s112
      %p121 = scmp.eq.s32.totalorder %s15, 1
      %p122 = por %p120, %p121
      %p123 = scmp.ne.s32.totalorder %s112, %s113
      %p124 = scmp.eq.s32.totalorder %s15, 0
      %p125 = por %p123, %p124
      %p126 = scmp.ne.s32.totalorder %s112, %s113
      %p127 = scmp.eq.s32.totalorder %s16, 1
      %p128 = por %p126, %p127
      %p130 = scmp.ne.s32.totalorder %s113, %s129
      %p131 = scmp.eq.s32.totalorder %s16, 0
      %p132 = por %p130, %p131
      %p133 = scmp.le.s32.totalorder 1, %s10
      %p134 = scmp.lt.s32.totalorder %s10, 3
      %p135 = pnand %p133, %p134
      %p136 = pneg %p135
      // Predicated region
      $region9: #{run.5} parent=5 // pred_check
        _
      $region10: #{run.5} parent=5 // pred_check_branch
        %138 = sbr.rel (%p135) target = $region12
      $region11: #{run.5} parent=5 // pred_region
        %s139 = ssub.s32 %s10, 1
        // Predicated region
        $region13: #{run.5} parent=11 // pred_check
          %p140 = pneg %p57
        $region14: #{run.5} parent=11 // pred_check_branch
          %142 = sbr.rel (%p140) target = $region16
        $region15: #{run.5} parent=11 // pred_region
          _
        $region16: #{run.5} parent=11 // pred_fallthru
          _
        // Predicated region
        $region17: #{run.5} parent=11 // pred_check
          %p143 = pneg %p78
        $region18: #{run.5} parent=11 // pred_check_branch
          %145 = sbr.rel (%p143) target = $region20
        $region19: #{run.5} parent=11 // pred_region
          _
        $region20: #{run.5} parent=11 // pred_fallthru
          _
        // Predicated region
        $region21: #{run.5} parent=11 // pred_check
          %p146 = pneg %p99
        $region22: #{run.5} parent=11 // pred_check_branch
          %148 = sbr.rel (%p146) target = $region24
        $region23: #{run.5} parent=11 // pred_region
          _
        $region24: #{run.5} parent=11 // pred_fallthru
          _
      $region12: #{run.5} parent=5 // pred_fallthru
        _
      %p149 = scmp.lt.s32.totalorder %s10, 2
      // Predicated region
      $region25: #{run.5} parent=5 // pred_check
        %p150 = pneg %p149
      $region26: #{run.5} parent=5 // pred_check_branch
        %152 = sbr.rel (%p150) target = $region28
      $region27: #{run.5} parent=5 // pred_region
        // Predicated region
        $region29: #{run.5} parent=27 // pred_check
          %p153 = pneg %p30
        $region30: #{run.5} parent=27 // pred_check_branch
          %155 = sbr.rel (%p153) target = $region32
        $region31: #{run.5} parent=27 // pred_region
          %s156 = sand.u32 %s20, 1
          %s157 = sand.u32 %s20, 1
          %s158 = smul.addr %s157, 176
          %s159 = scalar_lea.vmem [#allocation2], %s158
          %s160 = smul.u32 2, %s10
          %s161 = smul.addr %s160, 4
          %s162 = scalar_lea.vmem %s0, %s161
          // Predicated region
          $region33: #{run.5} parent=31 // pred_check
            _
          $region34: #{run.5} parent=31 // pred_check_branch
            %164 = sbr.rel (0) target = $region36
          $region35: #{run.5} parent=31 // pred_region
            // Predicated region
            $region37: #{run.5} parent=35 // pred_check
              _
            $region38: #{run.5} parent=35 // pred_check_branch
              %166 = sbr.rel target = $region40
            $region39: #{run.5} parent=35 // pred_region
              // Predicated region
              $region52: #{run.5} parent=39 // pred_check
                _
              $region53: #{run.5} parent=39 // pred_check_branch
                %268 = sbr.rel (0) target = $region55
              $region54: #{run.5} parent=39 // pred_region
                loop: start=0, step=1, limit=1
                $region56: #{run.5} parent=54 // loop_pre_header
                  _
                $region57: #{run.5} parent=54 // loop_header
                  %s270 = sphi 0, %s274
                  %p271 = scmp.ge.s32.totalorder %s270, 1
                  %s275 = sphi %s162, %s162
                  %s276 = sphi %s159, %s159
                $region58: #{run.5} parent=54 // loop_header_branch
                  %273 = sbr.rel (%p271) target = $region62
                $region59: #{run.5} parent=54 // loop_body
                  _
                $region60: #{run.5} parent=54 // loop_footer
                  %s274 = sadd.s32 1, %s270
                $region61: #{run.5} parent=54 // loop_footer_branch
                  %269 = sbr.rel target = $region57
                $region62: #{run.5} parent=54 // loop_exit
                  _
                %s278 = ssub.s32 16, 1
                loop: start=0, step=1, limit=1
                $region63: #{run.5} parent=54 // loop_pre_header
                  _
                $region64: #{run.5} parent=54 // loop_header
                  %s280 = sphi 0, %s284
                  %p281 = scmp.ge.s32.totalorder %s280, 1
                  %s285 = sphi %s162, %s162
                  %s286 = sphi %s159, %s159
                $region65: #{run.5} parent=54 // loop_header_branch
                  %283 = sbr.rel (%p281) target = $region69
                $region66: #{run.5} parent=54 // loop_body
                  %v287 = vld [vmem:[%s285] sm:%s278]
                  %288 = vst [vmem:[%s286] sm:%s278] %v287
                  %v289 = vld [vmem:[%s285 + $0x4] sm:%s278]
                  %290 = vst [vmem:[%s286 + $0x4] sm:%s278] %v289
                  %v291 = vld [vmem:[%s285 + $0x10] sm:%s278]
                  %292 = vst [vmem:[%s286 + $0x8] sm:%s278] %v291
                  %v293 = vld [vmem:[%s285 + $0x14] sm:%s278]
                  %294 = vst [vmem:[%s286 + $0xc] sm:%s278] %v293
                  %v295 = vld [vmem:[%s285 + $0x20] sm:%s278]
                  %296 = vst [vmem:[%s286 + $0x10] sm:%s278] %v295
                  %v297 = vld [vmem:[%s285 + $0x24] sm:%s278]
                  %298 = vst [vmem:[%s286 + $0x14] sm:%s278] %v297
                  %v299 = vld [vmem:[%s285 + $0x30] sm:%s278]
                  %300 = vst [vmem:[%s286 + $0x18] sm:%s278] %v299
                  %v301 = vld [vmem:[%s285 + $0x34] sm:%s278]
                  %302 = vst [vmem:[%s286 + $0x1c] sm:%s278] %v301
                  %v303 = vld [vmem:[%s285 + $0x40] sm:%s278]
                  %304 = vst [vmem:[%s286 + $0x20] sm:%s278] %v303
                  %v305 = vld [vmem:[%s285 + $0x44] sm:%s278]
                  %306 = vst [vmem:[%s286 + $0x24] sm:%s278] %v305
                  %v307 = vld [vmem:[%s285 + $0x50] sm:%s278]
                  %308 = vst [vmem:[%s286 + $0x28] sm:%s278] %v307
                  %v309 = vld [vmem:[%s285 + $0x54] sm:%s278]
                  %310 = vst [vmem:[%s286 + $0x2c] sm:%s278] %v309
                  %v311 = vld [vmem:[%s285 + $0x60] sm:%s278]
                  %312 = vst [vmem:[%s286 + $0x30] sm:%s278] %v311
                  %v313 = vld [vmem:[%s285 + $0x64] sm:%s278]
                  %314 = vst [vmem:[%s286 + $0x34] sm:%s278] %v313
                  %v315 = vld [vmem:[%s285 + $0x70] sm:%s278]
                  %316 = vst [vmem:[%s286 + $0x38] sm:%s278] %v315
                  %v317 = vld [vmem:[%s285 + $0x74] sm:%s278]
                  %318 = vst [vmem:[%s286 + $0x3c] sm:%s278] %v317
                  %v319 = vld [vmem:[%s285 + $0x80] sm:%s278]
                  %320 = vst [vmem:[%s286 + $0x40] sm:%s278] %v319
                  %v321 = vld [vmem:[%s285 + $0x84] sm:%s278]
                  %322 = vst [vmem:[%s286 + $0x44] sm:%s278] %v321
                  %v323 = vld [vmem:[%s285 + $0x90] sm:%s278]
                  %324 = vst [vmem:[%s286 + $0x48] sm:%s278] %v323
                  %v325 = vld [vmem:[%s285 + $0x94] sm:%s278]
                  %326 = vst [vmem:[%s286 + $0x4c] sm:%s278] %v325
                  %v327 = vld [vmem:[%s285 + $0xa0] sm:%s278]
                  %328 = vst [vmem:[%s286 + $0x50] sm:%s278] %v327
                  %v329 = vld [vmem:[%s285 + $0xa4] sm:%s278]
                  %330 = vst [vmem:[%s286 + $0x54] sm:%s278] %v329
                  %v331 = vld [vmem:[%s285 + $0xb0] sm:%s278]
                  %332 = vst [vmem:[%s286 + $0x58] sm:%s278] %v331
                  %v333 = vld [vmem:[%s285 + $0xb4] sm:%s278]
                  %334 = vst [vmem:[%s286 + $0x5c] sm:%s278] %v333
                  %v335 = vld [vmem:[%s285 + $0xc0] sm:%s278]
                  %336 = vst [vmem:[%s286 + $0x60] sm:%s278] %v335
                  %v337 = vld [vmem:[%s285 + $0xc4] sm:%s278]
                  %338 = vst [vmem:[%s286 + $0x64] sm:%s278] %v337
                  %v339 = vld [vmem:[%s285 + $0xd0] sm:%s278]
                  %340 = vst [vmem:[%s286 + $0x68] sm:%s278] %v339
                  %v341 = vld [vmem:[%s285 + $0xd4] sm:%s278]
                  %342 = vst [vmem:[%s286 + $0x6c] sm:%s278] %v341
                  %v343 = vld [vmem:[%s285 + $0xe0] sm:%s278]
                  %344 = vst [vmem:[%s286 + $0x70] sm:%s278] %v343
                  %v345 = vld [vmem:[%s285 + $0xe4] sm:%s278]
                  %346 = vst [vmem:[%s286 + $0x74] sm:%s278] %v345
                  %v347 = vld [vmem:[%s285 + $0xf0] sm:%s278]
                  %348 = vst [vmem:[%s286 + $0x78] sm:%s278] %v347
                  %v349 = vld [vmem:[%s285 + $0xf4] sm:%s278]
                  %350 = vst [vmem:[%s286 + $0x7c] sm:%s278] %v349
                  %v351 = vld [vmem:[%s285 + $0x100] sm:%s278]
                  %352 = vst [vmem:[%s286 + $0x80] sm:%s278] %v351
                  %v353 = vld [vmem:[%s285 + $0x104] sm:%s278]
                  %354 = vst [vmem:[%s286 + $0x84] sm:%s278] %v353
                  %v355 = vld [vmem:[%s285 + $0x110] sm:%s278]
                  %356 = vst [vmem:[%s286 + $0x88] sm:%s278] %v355
                  %v357 = vld [vmem:[%s285 + $0x114] sm:%s278]
                  %358 = vst [vmem:[%s286 + $0x8c] sm:%s278] %v357
                  %v359 = vld [vmem:[%s285 + $0x120] sm:%s278]
                  %360 = vst [vmem:[%s286 + $0x90] sm:%s278] %v359
                  %v361 = vld [vmem:[%s285 + $0x124] sm:%s278]
                  %362 = vst [vmem:[%s286 + $0x94] sm:%s278] %v361
                  %v363 = vld [vmem:[%s285 + $0x130] sm:%s278]
                  %364 = vst [vmem:[%s286 + $0x98] sm:%s278] %v363
                  %v365 = vld [vmem:[%s285 + $0x134] sm:%s278]
                  %366 = vst [vmem:[%s286 + $0x9c] sm:%s278] %v365
                  %v367 = vld [vmem:[%s285 + $0x140] sm:%s278]
                  %368 = vst [vmem:[%s286 + $0xa0] sm:%s278] %v367
                  %v369 = vld [vmem:[%s285 + $0x144] sm:%s278]
                  %370 = vst [vmem:[%s286 + $0xa4] sm:%s278] %v369
                  %v371 = vld [vmem:[%s285 + $0x150] sm:%s278]
                  %372 = vst [vmem:[%s286 + $0xa8] sm:%s278] %v371
                  %v373 = vld [vmem:[%s285 + $0x154] sm:%s278]
                  %374 = vst [vmem:[%s286 + $0xac] sm:%s278] %v373
                $region67: #{run.5} parent=54 // loop_footer
                  %s284 = sadd.s32 1, %s280
                $region68: #{run.5} parent=54 // loop_footer_branch
                  %279 = sbr.rel target = $region64
                $region69: #{run.5} parent=54 // loop_exit
                  _
              $region55: #{run.5} parent=39 // pred_fallthru
                _
            $region40: #{run.5} parent=35 // pred_fallthru
              _
            // Predicated region
            $region41: #{run.5} parent=35 // pred_check
              _
            $region42: #{run.5} parent=35 // pred_check_branch
              %168 = sbr.rel (0) target = $region44
            $region43: #{run.5} parent=35 // pred_region
              %s170 = ssub.s32 16, 1
              loop: start=0, step=1, limit=1
              $region45: #{run.5} parent=43 // loop_pre_header
                _
              $region46: #{run.5} parent=43 // loop_header
                %s172 = sphi 0, %s176
                %p173 = scmp.ge.s32.totalorder %s172, 1
                %s177 = sphi %s162, %s162
                %s178 = sphi %s159, %s159
              $region47: #{run.5} parent=43 // loop_header_branch
                %175 = sbr.rel (%p173) target = $region51
              $region48: #{run.5} parent=43 // loop_body
                %v179 = vld [vmem:[%s177] sm:%s170]
                %180 = vst [vmem:[%s178] sm:%s170] %v179
                %v181 = vld [vmem:[%s177 + $0x4] sm:%s170]
                %182 = vst [vmem:[%s178 + $0x4] sm:%s170] %v181
                %v183 = vld [vmem:[%s177 + $0x10] sm:%s170]
                %184 = vst [vmem:[%s178 + $0x8] sm:%s170] %v183
                %v185 = vld [vmem:[%s177 + $0x14] sm:%s170]
                %186 = vst [vmem:[%s178 + $0xc] sm:%s170] %v185
                %v187 = vld [vmem:[%s177 + $0x20] sm:%s170]
                %188 = vst [vmem:[%s178 + $0x10] sm:%s170] %v187
                %v189 = vld [vmem:[%s177 + $0x24] sm:%s170]
                %190 = vst [vmem:[%s178 + $0x14] sm:%s170] %v189
                %v191 = vld [vmem:[%s177 + $0x30] sm:%s170]
                %192 = vst [vmem:[%s178 + $0x18] sm:%s170] %v191
                %v193 = vld [vmem:[%s177 + $0x34] sm:%s170]
                %194 = vst [vmem:[%s178 + $0x1c] sm:%s170] %v193
                %v195 = vld [vmem:[%s177 + $0x40] sm:%s170]
                %196 = vst [vmem:[%s178 + $0x20] sm:%s170] %v195
                %v197 = vld [vmem:[%s177 + $0x44] sm:%s170]
                %198 = vst [vmem:[%s178 + $0x24] sm:%s170] %v197
                %v199 = vld [vmem:[%s177 + $0x50] sm:%s170]
                %200 = vst [vmem:[%s178 + $0x28] sm:%s170] %v199
                %v201 = vld [vmem:[%s177 + $0x54] sm:%s170]
                %202 = vst [vmem:[%s178 + $0x2c] sm:%s170] %v201
                %v203 = vld [vmem:[%s177 + $0x60] sm:%s170]
                %204 = vst [vmem:[%s178 + $0x30] sm:%s170] %v203
                %v205 = vld [vmem:[%s177 + $0x64] sm:%s170]
                %206 = vst [vmem:[%s178 + $0x34] sm:%s170] %v205
                %v207 = vld [vmem:[%s177 + $0x70] sm:%s170]
                %208 = vst [vmem:[%s178 + $0x38] sm:%s170] %v207
                %v209 = vld [vmem:[%s177 + $0x74] sm:%s170]
                %210 = vst [vmem:[%s178 + $0x3c] sm:%s170] %v209
                %v211 = vld [vmem:[%s177 + $0x80] sm:%s170]
                %212 = vst [vmem:[%s178 + $0x40] sm:%s170] %v211
                %v213 = vld [vmem:[%s177 + $0x84] sm:%s170]
                %214 = vst [vmem:[%s178 + $0x44] sm:%s170] %v213
                %v215 = vld [vmem:[%s177 + $0x90] sm:%s170]
                %216 = vst [vmem:[%s178 + $0x48] sm:%s170] %v215
                %v217 = vld [vmem:[%s177 + $0x94] sm:%s170]
                %218 = vst [vmem:[%s178 + $0x4c] sm:%s170] %v217
                %v219 = vld [vmem:[%s177 + $0xa0] sm:%s170]
                %220 = vst [vmem:[%s178 + $0x50] sm:%s170] %v219
                %v221 = vld [vmem:[%s177 + $0xa4] sm:%s170]
                %222 = vst [vmem:[%s178 + $0x54] sm:%s170] %v221
                %v223 = vld [vmem:[%s177 + $0xb0] sm:%s170]
                %224 = vst [vmem:[%s178 + $0x58] sm:%s170] %v223
                %v225 = vld [vmem:[%s177 + $0xb4] sm:%s170]
                %226 = vst [vmem:[%s178 + $0x5c] sm:%s170] %v225
                %v227 = vld [vmem:[%s177 + $0xc0] sm:%s170]
                %228 = vst [vmem:[%s178 + $0x60] sm:%s170] %v227
                %v229 = vld [vmem:[%s177 + $0xc4] sm:%s170]
                %230 = vst [vmem:[%s178 + $0x64] sm:%s170] %v229
                %v231 = vld [vmem:[%s177 + $0xd0] sm:%s170]
                %232 = vst [vmem:[%s178 + $0x68] sm:%s170] %v231
                %v233 = vld [vmem:[%s177 + $0xd4] sm:%s170]
                %234 = vst [vmem:[%s178 + $0x6c] sm:%s170] %v233
                %v235 = vld [vmem:[%s177 + $0xe0] sm:%s170]
                %236 = vst [vmem:[%s178 + $0x70] sm:%s170] %v235
                %v237 = vld [vmem:[%s177 + $0xe4] sm:%s170]
                %238 = vst [vmem:[%s178 + $0x74] sm:%s170] %v237
                %v239 = vld [vmem:[%s177 + $0xf0] sm:%s170]
                %240 = vst [vmem:[%s178 + $0x78] sm:%s170] %v239
                %v241 = vld [vmem:[%s177 + $0xf4] sm:%s170]
                %242 = vst [vmem:[%s178 + $0x7c] sm:%s170] %v241
                %v243 = vld [vmem:[%s177 + $0x100] sm:%s170]
                %244 = vst [vmem:[%s178 + $0x80] sm:%s170] %v243
                %v245 = vld [vmem:[%s177 + $0x104] sm:%s170]
                %246 = vst [vmem:[%s178 + $0x84] sm:%s170] %v245
                %v247 = vld [vmem:[%s177 + $0x110] sm:%s170]
                %248 = vst [vmem:[%s178 + $0x88] sm:%s170] %v247
                %v249 = vld [vmem:[%s177 + $0x114] sm:%s170]
                %250 = vst [vmem:[%s178 + $0x8c] sm:%s170] %v249
                %v251 = vld [vmem:[%s177 + $0x120] sm:%s170]
                %252 = vst [vmem:[%s178 + $0x90] sm:%s170] %v251
                %v253 = vld [vmem:[%s177 + $0x124] sm:%s170]
                %254 = vst [vmem:[%s178 + $0x94] sm:%s170] %v253
                %v255 = vld [vmem:[%s177 + $0x130] sm:%s170]
                %256 = vst [vmem:[%s178 + $0x98] sm:%s170] %v255
                %v257 = vld [vmem:[%s177 + $0x134] sm:%s170]
                %258 = vst [vmem:[%s178 + $0x9c] sm:%s170] %v257
                %v259 = vld [vmem:[%s177 + $0x140] sm:%s170]
                %260 = vst [vmem:[%s178 + $0xa0] sm:%s170] %v259
                %v261 = vld [vmem:[%s177 + $0x144] sm:%s170]
                %262 = vst [vmem:[%s178 + $0xa4] sm:%s170] %v261
                %v263 = vld [vmem:[%s177 + $0x150] sm:%s170]
                %264 = vst [vmem:[%s178 + $0xa8] sm:%s170] %v263
                %v265 = vld [vmem:[%s177 + $0x154] sm:%s170]
                %266 = vst [vmem:[%s178 + $0xac] sm:%s170] %v265
              $region49: #{run.5} parent=43 // loop_footer
                %s176 = sadd.s32 1, %s172
              $region50: #{run.5} parent=43 // loop_footer_branch
                %171 = sbr.rel target = $region46
              $region51: #{run.5} parent=43 // loop_exit
                _
            $region44: #{run.5} parent=35 // pred_fallthru
              _
          $region36: #{run.5} parent=31 // pred_fallthru
            _
          %375 = vnop
        $region32: #{run.5} parent=27 // pred_fallthru
          _
      $region28: #{run.5} parent=5 // pred_fallthru
        _
      %p376 = scmp.le.s32.totalorder 1, %s10
      %p377 = scmp.lt.s32.totalorder %s10, 3
      %p378 = pnand %p376, %p377
      %p379 = pneg %p378
      // Predicated region
      $region70: #{run.5} parent=5 // pred_check
        _
      $region71: #{run.5} parent=5 // pred_check_branch
        %381 = sbr.rel (%p378) target = $region73
      $region72: #{run.5} parent=5 // pred_region
        %s382 = ssub.s32 %s10, 1
        %s383 = sand.u32 %s23, 1
        %s384 = sand.u32 %s23, 1
        %s385 = smul.addr %s384, 176
        %s386 = scalar_lea.vmem [#allocation2], %s385
        // Predicated region
        $region74: #{run.5} parent=72 // pred_check
          %p387 = pneg %p36
        $region75: #{run.5} parent=72 // pred_check_branch
          %389 = sbr.rel (%p387) target = $region77
        $region76: #{run.5} parent=72 // pred_region
          _
        $region77: #{run.5} parent=72 // pred_fallthru
          _
        %s390 = sand.u32 %s23, 1
        %s391 = sand.u32 %s23, 1
        %s392 = smul.addr %s391, 176
        %s393 = scalar_lea.vmem [#allocation2], %s392
        %p394 = pneg %p36
        %p395 = pneg %p33
        %p396 = pneg %p57
        %p397 = pneg %p54
        %p398 = pneg %p78
        %p399 = pneg %p75
        %p400 = pneg %p99
        %p401 = pneg %p96
        %p402 = pneg %p125
        %p403 = pneg %p122
        %s404 = sand.u32 %s112, 1
        %s405 = sand.u32 %s112, 1
        %s406 = smul.addr %s405, 256
        %s407 = scalar_lea.vmem [#allocation3], %s406
        %s408 = smul.u32 2, %s15
        %s409 = smul.u32 2, %s15
        %v411 = vld [vmem:[%s386] sm:$0xf]
        %v412 = vld [vmem:[%s386 + $0x4] sm:$0xf]
        %v413 = vld [vmem:[%s386 + $0x8] sm:$0xf]
        %v414 = vld [vmem:[%s386 + $0xc] sm:$0xf]
        %v415 = vld [vmem:[%s386 + $0x10] sm:$0xf]
        %v416 = vld [vmem:[%s386 + $0x14] sm:$0xf]
        %v417 = vld [vmem:[%s386 + $0x18] sm:$0xf]
        %v418 = vld [vmem:[%s386 + $0x1c] sm:$0xf]
        %v419 = vld [vmem:[%s386 + $0x20] sm:$0xf]
        %v420 = vld [vmem:[%s386 + $0x24] sm:$0xf]
        %v421 = vld [vmem:[%s386 + $0x28] sm:$0xf]
        %v422 = vld [vmem:[%s386 + $0x2c] sm:$0xf]
        %v423 = vld [vmem:[%s386 + $0x30] sm:$0xf]
        %v424 = vld [vmem:[%s386 + $0x34] sm:$0xf]
        %v425 = vld [vmem:[%s386 + $0x38] sm:$0xf]
        %v426 = vld [vmem:[%s386 + $0x3c] sm:$0xf]
        %v427 = vld [vmem:[%s386 + $0x40] sm:$0xf]
        %v428 = vld [vmem:[%s386 + $0x44] sm:$0xf]
        %v429 = vld [vmem:[%s386 + $0x48] sm:$0xf]
        %v430 = vld [vmem:[%s386 + $0x4c] sm:$0xf]
        %v431 = vld [vmem:[%s386 + $0x50] sm:$0xf]
        %v432 = vld [vmem:[%s386 + $0x54] sm:$0xf]
        %v433 = vld [vmem:[%s386 + $0x58] sm:$0xf]
        %v434 = vld [vmem:[%s386 + $0x5c] sm:$0xf]
        %v435 = vld [vmem:[%s386 + $0x60] sm:$0xf]
        %v436 = vld [vmem:[%s386 + $0x64] sm:$0xf]
        %v437 = vld [vmem:[%s386 + $0x68] sm:$0xf]
        %v438 = vld [vmem:[%s386 + $0x6c] sm:$0xf]
        %v439 = vld [vmem:[%s386 + $0x70] sm:$0xf]
        %v440 = vld [vmem:[%s386 + $0x74] sm:$0xf]
        %v441 = vld [vmem:[%s386 + $0x78] sm:$0xf]
        %v442 = vld [vmem:[%s386 + $0x7c] sm:$0xf]
        %s443 = scalar_lea.vmem %s386, 8 [#allocation2]
        %v444 = vld [vmem:[%s443] sm:$0xf]
        %v445 = vld [vmem:[%s443 + $0x4] sm:$0xf]
        %v446 = vld [vmem:[%s443 + $0x8] sm:$0xf]
        %v447 = vld [vmem:[%s443 + $0xc] sm:$0xf]
        %v448 = vld [vmem:[%s443 + $0x10] sm:$0xf]
        %v449 = vld [vmem:[%s443 + $0x14] sm:$0xf]
        %v450 = vld [vmem:[%s443 + $0x18] sm:$0xf]
        %v451 = vld [vmem:[%s443 + $0x1c] sm:$0xf]
        %v452 = vld [vmem:[%s443 + $0x20] sm:$0xf]
        %v453 = vld [vmem:[%s443 + $0x24] sm:$0xf]
        %v454 = vld [vmem:[%s443 + $0x28] sm:$0xf]
        %v455 = vld [vmem:[%s443 + $0x2c] sm:$0xf]
        %v456 = vld [vmem:[%s443 + $0x30] sm:$0xf]
        %v457 = vld [vmem:[%s443 + $0x34] sm:$0xf]
        %v458 = vld [vmem:[%s443 + $0x38] sm:$0xf]
        %v459 = vld [vmem:[%s443 + $0x3c] sm:$0xf]
        %v460 = vld [vmem:[%s443 + $0x40] sm:$0xf]
        %v461 = vld [vmem:[%s443 + $0x44] sm:$0xf]
        %v462 = vld [vmem:[%s443 + $0x48] sm:$0xf]
        %v463 = vld [vmem:[%s443 + $0x4c] sm:$0xf]
        %v464 = vld [vmem:[%s443 + $0x50] sm:$0xf]
        %v465 = vld [vmem:[%s443 + $0x54] sm:$0xf]
        %v466 = vld [vmem:[%s443 + $0x58] sm:$0xf]
        %v467 = vld [vmem:[%s443 + $0x5c] sm:$0xf]
        %v468 = vld [vmem:[%s443 + $0x60] sm:$0xf]
        %v469 = vld [vmem:[%s443 + $0x64] sm:$0xf]
        %v470 = vld [vmem:[%s443 + $0x68] sm:$0xf]
        %v471 = vld [vmem:[%s443 + $0x6c] sm:$0xf]
        %v472 = vld [vmem:[%s443 + $0x70] sm:$0xf]
        %v473 = vld [vmem:[%s443 + $0x74] sm:$0xf]
        %v474 = vld [vmem:[%s443 + $0x78] sm:$0xf]
        %v475 = vld [vmem:[%s443 + $0x7c] sm:$0xf]
        %s476 = scalar_lea.vmem %s386, 16 [#allocation2]
        %v477 = vld [vmem:[%s476] sm:$0xf]
        %v478 = vld [vmem:[%s476 + $0x4] sm:$0xf]
        %v479 = vld [vmem:[%s476 + $0x8] sm:$0xf]
        %v480 = vld [vmem:[%s476 + $0xc] sm:$0xf]
        %v481 = vld [vmem:[%s476 + $0x10] sm:$0xf]
        %v482 = vld [vmem:[%s476 + $0x14] sm:$0xf]
        %v483 = vld [vmem:[%s476 + $0x18] sm:$0xf]
        %v484 = vld [vmem:[%s476 + $0x1c] sm:$0xf]
        %v485 = vld [vmem:[%s476 + $0x20] sm:$0xf]
        %v486 = vld [vmem:[%s476 + $0x24] sm:$0xf]
        %v487 = vld [vmem:[%s476 + $0x28] sm:$0xf]
        %v488 = vld [vmem:[%s476 + $0x2c] sm:$0xf]
        %v489 = vld [vmem:[%s476 + $0x30] sm:$0xf]
        %v490 = vld [vmem:[%s476 + $0x34] sm:$0xf]
        %v491 = vld [vmem:[%s476 + $0x38] sm:$0xf]
        %v492 = vld [vmem:[%s476 + $0x3c] sm:$0xf]
        %v493 = vld [vmem:[%s476 + $0x40] sm:$0xf]
        %v494 = vld [vmem:[%s476 + $0x44] sm:$0xf]
        %v495 = vld [vmem:[%s476 + $0x48] sm:$0xf]
        %v496 = vld [vmem:[%s476 + $0x4c] sm:$0xf]
        %v497 = vld [vmem:[%s476 + $0x50] sm:$0xf]
        %v498 = vld [vmem:[%s476 + $0x54] sm:$0xf]
        %v499 = vld [vmem:[%s476 + $0x58] sm:$0xf]
        %v500 = vld [vmem:[%s476 + $0x5c] sm:$0xf]
        %v501 = vld [vmem:[%s476 + $0x60] sm:$0xf]
        %v502 = vld [vmem:[%s476 + $0x64] sm:$0xf]
        %v503 = vld [vmem:[%s476 + $0x68] sm:$0xf]
        %v504 = vld [vmem:[%s476 + $0x6c] sm:$0xf]
        %v505 = vld [vmem:[%s476 + $0x70] sm:$0xf]
        %v506 = vld [vmem:[%s476 + $0x74] sm:$0xf]
        %v507 = vld [vmem:[%s476 + $0x78] sm:$0xf]
        %v508 = vld [vmem:[%s476 + $0x7c] sm:$0xf]
        %s509 = scalar_lea.vmem %s386, 24 [#allocation2]
        %v510 = vld [vmem:[%s509] sm:$0xf]
        %v511 = vld [vmem:[%s509 + $0x4] sm:$0xf]
        %v512 = vld [vmem:[%s509 + $0x8] sm:$0xf]
        %v513 = vld [vmem:[%s509 + $0xc] sm:$0xf]
        %v514 = vld [vmem:[%s509 + $0x10] sm:$0xf]
        %v515 = vld [vmem:[%s509 + $0x14] sm:$0xf]
        %v516 = vld [vmem:[%s509 + $0x18] sm:$0xf]
        %v517 = vld [vmem:[%s509 + $0x1c] sm:$0xf]
        %v518 = vld [vmem:[%s509 + $0x20] sm:$0xf]
        %v519 = vld [vmem:[%s509 + $0x24] sm:$0xf]
        %v520 = vld [vmem:[%s509 + $0x28] sm:$0xf]
        %v521 = vld [vmem:[%s509 + $0x2c] sm:$0xf]
        %v522 = vld [vmem:[%s509 + $0x30] sm:$0xf]
        %v523 = vld [vmem:[%s509 + $0x34] sm:$0xf]
        %v524 = vld [vmem:[%s509 + $0x38] sm:$0xf]
        %v525 = vld [vmem:[%s509 + $0x3c] sm:$0xf]
        %v526 = vld [vmem:[%s509 + $0x40] sm:$0xf]
        %v527 = vld [vmem:[%s509 + $0x44] sm:$0xf]
        %v528 = vld [vmem:[%s509 + $0x48] sm:$0xf]
        %v529 = vld [vmem:[%s509 + $0x4c] sm:$0xf]
        %v530 = vld [vmem:[%s509 + $0x50] sm:$0xf]
        %v531 = vld [vmem:[%s509 + $0x54] sm:$0xf]
        %v532 = vld [vmem:[%s509 + $0x58] sm:$0xf]
        %v533 = vld [vmem:[%s509 + $0x5c] sm:$0xf]
        %v534 = vld [vmem:[%s509 + $0x60] sm:$0xf]
        %v535 = vld [vmem:[%s509 + $0x64] sm:$0xf]
        %v536 = vld [vmem:[%s509 + $0x68] sm:$0xf]
        %v537 = vld [vmem:[%s509 + $0x6c] sm:$0xf]
        %v538 = vld [vmem:[%s509 + $0x70] sm:$0xf]
        %v539 = vld [vmem:[%s509 + $0x74] sm:$0xf]
        %v540 = vld [vmem:[%s509 + $0x78] sm:$0xf]
        %v541 = vld [vmem:[%s509 + $0x7c] sm:$0xf]
        %s542 = scalar_lea.vmem %s386, 32 [#allocation2]
        %v543 = vld [vmem:[%s542] sm:$0xf]
        %v544 = vld [vmem:[%s542 + $0x4] sm:$0xf]
        %v545 = vld [vmem:[%s542 + $0x8] sm:$0xf]
        %v546 = vld [vmem:[%s542 + $0xc] sm:$0xf]
        %v547 = vld [vmem:[%s542 + $0x10] sm:$0xf]
        %v548 = vld [vmem:[%s542 + $0x14] sm:$0xf]
        %v549 = vld [vmem:[%s542 + $0x18] sm:$0xf]
        %v550 = vld [vmem:[%s542 + $0x1c] sm:$0xf]
        %v551 = vld [vmem:[%s542 + $0x20] sm:$0xf]
        %v552 = vld [vmem:[%s542 + $0x24] sm:$0xf]
        %v553 = vld [vmem:[%s542 + $0x28] sm:$0xf]
        %v554 = vld [vmem:[%s542 + $0x2c] sm:$0xf]
        %v555 = vld [vmem:[%s542 + $0x30] sm:$0xf]
        %v556 = vld [vmem:[%s542 + $0x34] sm:$0xf]
        %v557 = vld [vmem:[%s542 + $0x38] sm:$0xf]
        %v558 = vld [vmem:[%s542 + $0x3c] sm:$0xf]
        %v559 = vld [vmem:[%s542 + $0x40] sm:$0xf]
        %v560 = vld [vmem:[%s542 + $0x44] sm:$0xf]
        %v561 = vld [vmem:[%s542 + $0x48] sm:$0xf]
        %v562 = vld [vmem:[%s542 + $0x4c] sm:$0xf]
        %v563 = vld [vmem:[%s542 + $0x50] sm:$0xf]
        %v564 = vld [vmem:[%s542 + $0x54] sm:$0xf]
        %v565 = vld [vmem:[%s542 + $0x58] sm:$0xf]
        %v566 = vld [vmem:[%s542 + $0x5c] sm:$0xf]
        %v567 = vld [vmem:[%s542 + $0x60] sm:$0xf]
        %v568 = vld [vmem:[%s542 + $0x64] sm:$0xf]
        %v569 = vld [vmem:[%s542 + $0x68] sm:$0xf]
        %v570 = vld [vmem:[%s542 + $0x6c] sm:$0xf]
        %v571 = vld [vmem:[%s542 + $0x70] sm:$0xf]
        %v572 = vld [vmem:[%s542 + $0x74] sm:$0xf]
        %v573 = vld [vmem:[%s542 + $0x78] sm:$0xf]
        %v574 = vld [vmem:[%s542 + $0x7c] sm:$0xf]
        %s575 = scalar_lea.vmem %s386, 40 [#allocation2]
        %v576 = vld [vmem:[%s575] sm:$0xf]
        %v577 = vld [vmem:[%s575 + $0x4] sm:$0xf]
        %v578 = vld [vmem:[%s575 + $0x8] sm:$0xf]
        %v579 = vld [vmem:[%s575 + $0xc] sm:$0xf]
        %v580 = vld [vmem:[%s575 + $0x10] sm:$0xf]
        %v581 = vld [vmem:[%s575 + $0x14] sm:$0xf]
        %v582 = vld [vmem:[%s575 + $0x18] sm:$0xf]
        %v583 = vld [vmem:[%s575 + $0x1c] sm:$0xf]
        %v584 = vld [vmem:[%s575 + $0x20] sm:$0xf]
        %v585 = vld [vmem:[%s575 + $0x24] sm:$0xf]
        %v586 = vld [vmem:[%s575 + $0x28] sm:$0xf]
        %v587 = vld [vmem:[%s575 + $0x2c] sm:$0xf]
        %v588 = vld [vmem:[%s575 + $0x30] sm:$0xf]
        %v589 = vld [vmem:[%s575 + $0x34] sm:$0xf]
        %v590 = vld [vmem:[%s575 + $0x38] sm:$0xf]
        %v591 = vld [vmem:[%s575 + $0x3c] sm:$0xf]
        %v592 = vld [vmem:[%s575 + $0x40] sm:$0xf]
        %v593 = vld [vmem:[%s575 + $0x44] sm:$0xf]
        %v594 = vld [vmem:[%s575 + $0x48] sm:$0xf]
        %v595 = vld [vmem:[%s575 + $0x4c] sm:$0xf]
        %v596 = vld [vmem:[%s575 + $0x50] sm:$0xf]
        %v597 = vld [vmem:[%s575 + $0x54] sm:$0xf]
        %v598 = vld [vmem:[%s575 + $0x58] sm:$0xf]
        %v599 = vld [vmem:[%s575 + $0x5c] sm:$0xf]
        %v600 = vld [vmem:[%s575 + $0x60] sm:$0xf]
        %v601 = vld [vmem:[%s575 + $0x64] sm:$0xf]
        %v602 = vld [vmem:[%s575 + $0x68] sm:$0xf]
        %v603 = vld [vmem:[%s575 + $0x6c] sm:$0xf]
        %v604 = vld [vmem:[%s575 + $0x70] sm:$0xf]
        %v605 = vld [vmem:[%s575 + $0x74] sm:$0xf]
        %v606 = vld [vmem:[%s575 + $0x78] sm:$0xf]
        %v607 = vld [vmem:[%s575 + $0x7c] sm:$0xf]
        %s608 = scalar_lea.vmem %s386, 48 [#allocation2]
        %v609 = vld [vmem:[%s608] sm:$0xf]
        %v610 = vld [vmem:[%s608 + $0x4] sm:$0xf]
        %v611 = vld [vmem:[%s608 + $0x8] sm:$0xf]
        %v612 = vld [vmem:[%s608 + $0xc] sm:$0xf]
        %v613 = vld [vmem:[%s608 + $0x10] sm:$0xf]
        %v614 = vld [vmem:[%s608 + $0x14] sm:$0xf]
        %v615 = vld [vmem:[%s608 + $0x18] sm:$0xf]
        %v616 = vld [vmem:[%s608 + $0x1c] sm:$0xf]
        %v617 = vld [vmem:[%s608 + $0x20] sm:$0xf]
        %v618 = vld [vmem:[%s608 + $0x24] sm:$0xf]
        %v619 = vld [vmem:[%s608 + $0x28] sm:$0xf]
        %v620 = vld [vmem:[%s608 + $0x2c] sm:$0xf]
        %v621 = vld [vmem:[%s608 + $0x30] sm:$0xf]
        %v622 = vld [vmem:[%s608 + $0x34] sm:$0xf]
        %v623 = vld [vmem:[%s608 + $0x38] sm:$0xf]
        %v624 = vld [vmem:[%s608 + $0x3c] sm:$0xf]
        %v625 = vld [vmem:[%s608 + $0x40] sm:$0xf]
        %v626 = vld [vmem:[%s608 + $0x44] sm:$0xf]
        %v627 = vld [vmem:[%s608 + $0x48] sm:$0xf]
        %v628 = vld [vmem:[%s608 + $0x4c] sm:$0xf]
        %v629 = vld [vmem:[%s608 + $0x50] sm:$0xf]
        %v630 = vld [vmem:[%s608 + $0x54] sm:$0xf]
        %v631 = vld [vmem:[%s608 + $0x58] sm:$0xf]
        %v632 = vld [vmem:[%s608 + $0x5c] sm:$0xf]
        %v633 = vld [vmem:[%s608 + $0x60] sm:$0xf]
        %v634 = vld [vmem:[%s608 + $0x64] sm:$0xf]
        %v635 = vld [vmem:[%s608 + $0x68] sm:$0xf]
        %v636 = vld [vmem:[%s608 + $0x6c] sm:$0xf]
        %v637 = vld [vmem:[%s608 + $0x70] sm:$0xf]
        %v638 = vld [vmem:[%s608 + $0x74] sm:$0xf]
        %v639 = vld [vmem:[%s608 + $0x78] sm:$0xf]
        %v640 = vld [vmem:[%s608 + $0x7c] sm:$0xf]
        %v673 = vunpack.c.l.b16 %v411
        %v674 = vunpack.c.l.b16 %v412
        %v675 = vunpack.c.l.b16 %v413
        %v676 = vunpack.c.l.b16 %v414
        %v677 = vunpack.c.l.b16 %v415
        %v678 = vunpack.c.l.b16 %v416
        %v679 = vunpack.c.l.b16 %v417
        %v680 = vunpack.c.l.b16 %v418
        %v681 = vunpack.c.l.b16 %v419
        %v682 = vunpack.c.l.b16 %v420
        %v683 = vunpack.c.l.b16 %v421
        %v684 = vunpack.c.l.b16 %v422
        %v685 = vunpack.c.l.b16 %v423
        %v686 = vunpack.c.l.b16 %v424
        %v687 = vunpack.c.l.b16 %v425
        %v688 = vunpack.c.l.b16 %v426
        %v689 = vunpack.c.l.b16 %v427
        %v690 = vunpack.c.l.b16 %v428
        %v691 = vunpack.c.l.b16 %v429
        %v692 = vunpack.c.l.b16 %v430
        %v693 = vunpack.c.l.b16 %v431
        %v694 = vunpack.c.l.b16 %v432
        %v695 = vunpack.c.l.b16 %v433
        %v696 = vunpack.c.l.b16 %v434
        %v697 = vunpack.c.l.b16 %v435
        %v698 = vunpack.c.l.b16 %v436
        %v699 = vunpack.c.l.b16 %v437
        %v700 = vunpack.c.l.b16 %v438
        %v701 = vunpack.c.l.b16 %v439
        %v702 = vunpack.c.l.b16 %v440
        %v703 = vunpack.c.l.b16 %v441
        %v704 = vunpack.c.l.b16 %v442
        %v705 = vpack.c.b16 %v674, %v673
        %v706 = vpack.c.b16 %v676, %v675
        %v707 = vpack.c.b16 %v678, %v677
        %v708 = vpack.c.b16 %v680, %v679
        %v709 = vpack.c.b16 %v682, %v681
        %v710 = vpack.c.b16 %v684, %v683
        %v711 = vpack.c.b16 %v686, %v685
        %v712 = vpack.c.b16 %v688, %v687
        %v713 = vpack.c.b16 %v690, %v689
        %v714 = vpack.c.b16 %v692, %v691
        %v715 = vpack.c.b16 %v694, %v693
        %v716 = vpack.c.b16 %v696, %v695
        %v717 = vpack.c.b16 %v698, %v697
        %v718 = vpack.c.b16 %v700, %v699
        %v719 = vpack.c.b16 %v702, %v701
        %v720 = vpack.c.b16 %v704, %v703
        %v753 = vunpack.c.l.b16 %v444
        %v754 = vunpack.c.l.b16 %v445
        %v755 = vunpack.c.l.b16 %v446
        %v756 = vunpack.c.l.b16 %v447
        %v757 = vunpack.c.l.b16 %v448
        %v758 = vunpack.c.l.b16 %v449
        %v759 = vunpack.c.l.b16 %v450
        %v760 = vunpack.c.l.b16 %v451
        %v761 = vunpack.c.l.b16 %v452
        %v762 = vunpack.c.l.b16 %v453
        %v763 = vunpack.c.l.b16 %v454
        %v764 = vunpack.c.l.b16 %v455
        %v765 = vunpack.c.l.b16 %v456
        %v766 = vunpack.c.l.b16 %v457
        %v767 = vunpack.c.l.b16 %v458
        %v768 = vunpack.c.l.b16 %v459
        %v769 = vunpack.c.l.b16 %v460
        %v770 = vunpack.c.l.b16 %v461
        %v771 = vunpack.c.l.b16 %v462
        %v772 = vunpack.c.l.b16 %v463
        %v773 = vunpack.c.l.b16 %v464
        %v774 = vunpack.c.l.b16 %v465
        %v775 = vunpack.c.l.b16 %v466
        %v776 = vunpack.c.l.b16 %v467
        %v777 = vunpack.c.l.b16 %v468
        %v778 = vunpack.c.l.b16 %v469
        %v779 = vunpack.c.l.b16 %v470
        %v780 = vunpack.c.l.b16 %v471
        %v781 = vunpack.c.l.b16 %v472
        %v782 = vunpack.c.l.b16 %v473
        %v783 = vunpack.c.l.b16 %v474
        %v784 = vunpack.c.l.b16 %v475
        %v785 = vpack.c.b16 %v754, %v753
        %v786 = vpack.c.b16 %v756, %v755
        %v787 = vpack.c.b16 %v758, %v757
        %v788 = vpack.c.b16 %v760, %v759
        %v789 = vpack.c.b16 %v762, %v761
        %v790 = vpack.c.b16 %v764, %v763
        %v791 = vpack.c.b16 %v766, %v765
        %v792 = vpack.c.b16 %v768, %v767
        %v793 = vpack.c.b16 %v770, %v769
        %v794 = vpack.c.b16 %v772, %v771
        %v795 = vpack.c.b16 %v774, %v773
        %v796 = vpack.c.b16 %v776, %v775
        %v797 = vpack.c.b16 %v778, %v777
        %v798 = vpack.c.b16 %v780, %v779
        %v799 = vpack.c.b16 %v782, %v781
        %v800 = vpack.c.b16 %v784, %v783
        %801 = vrot.lane.b32.xlu0 %v785, 4
        %v802 = vpop.permute.xlu0 %801
        %803 = vrot.lane.b32.xlu0 %v786, 4
        %v804 = vpop.permute.xlu0 %803
        %805 = vrot.lane.b32.xlu0 %v787, 4
        %v806 = vpop.permute.xlu0 %805
        %807 = vrot.lane.b32.xlu0 %v788, 4
        %v808 = vpop.permute.xlu0 %807
        %809 = vrot.lane.b32.xlu0 %v789, 4
        %v810 = vpop.permute.xlu0 %809
        %811 = vrot.lane.b32.xlu0 %v790, 4
        %v812 = vpop.permute.xlu0 %811
        %813 = vrot.lane.b32.xlu0 %v791, 4
        %v814 = vpop.permute.xlu0 %813
        %815 = vrot.lane.b32.xlu0 %v792, 4
        %v816 = vpop.permute.xlu0 %815
        %817 = vrot.lane.b32.xlu0 %v793, 4
        %v818 = vpop.permute.xlu0 %817
        %819 = vrot.lane.b32.xlu0 %v794, 4
        %v820 = vpop.permute.xlu0 %819
        %821 = vrot.lane.b32.xlu0 %v795, 4
        %v822 = vpop.permute.xlu0 %821
        %823 = vrot.lane.b32.xlu0 %v796, 4
        %v824 = vpop.permute.xlu0 %823
        %825 = vrot.lane.b32.xlu0 %v797, 4
        %v826 = vpop.permute.xlu0 %825
        %827 = vrot.lane.b32.xlu0 %v798, 4
        %v828 = vpop.permute.xlu0 %827
        %829 = vrot.lane.b32.xlu0 %v799, 4
        %v830 = vpop.permute.xlu0 %829
        %831 = vrot.lane.b32.xlu0 %v800, 4
        %v832 = vpop.permute.xlu0 %831
        %v865 = vunpack.c.l.b16 %v477
        %v866 = vunpack.c.l.b16 %v478
        %v867 = vunpack.c.l.b16 %v479
        %v868 = vunpack.c.l.b16 %v480
        %v869 = vunpack.c.l.b16 %v481
        %v870 = vunpack.c.l.b16 %v482
        %v871 = vunpack.c.l.b16 %v483
        %v872 = vunpack.c.l.b16 %v484
        %v873 = vunpack.c.l.b16 %v485
        %v874 = vunpack.c.l.b16 %v486
        %v875 = vunpack.c.l.b16 %v487
        %v876 = vunpack.c.l.b16 %v488
        %v877 = vunpack.c.l.b16 %v489
        %v878 = vunpack.c.l.b16 %v490
        %v879 = vunpack.c.l.b16 %v491
        %v880 = vunpack.c.l.b16 %v492
        %v881 = vunpack.c.l.b16 %v493
        %v882 = vunpack.c.l.b16 %v494
        %v883 = vunpack.c.l.b16 %v495
        %v884 = vunpack.c.l.b16 %v496
        %v885 = vunpack.c.l.b16 %v497
        %v886 = vunpack.c.l.b16 %v498
        %v887 = vunpack.c.l.b16 %v499
        %v888 = vunpack.c.l.b16 %v500
        %v889 = vunpack.c.l.b16 %v501
        %v890 = vunpack.c.l.b16 %v502
        %v891 = vunpack.c.l.b16 %v503
        %v892 = vunpack.c.l.b16 %v504
        %v893 = vunpack.c.l.b16 %v505
        %v894 = vunpack.c.l.b16 %v506
        %v895 = vunpack.c.l.b16 %v507
        %v896 = vunpack.c.l.b16 %v508
        %v897 = vpack.c.b16 %v866, %v865
        %v898 = vpack.c.b16 %v868, %v867
        %v899 = vpack.c.b16 %v870, %v869
        %v900 = vpack.c.b16 %v872, %v871
        %v901 = vpack.c.b16 %v874, %v873
        %v902 = vpack.c.b16 %v876, %v875
        %v903 = vpack.c.b16 %v878, %v877
        %v904 = vpack.c.b16 %v880, %v879
        %v905 = vpack.c.b16 %v882, %v881
        %v906 = vpack.c.b16 %v884, %v883
        %v907 = vpack.c.b16 %v886, %v885
        %v908 = vpack.c.b16 %v888, %v887
        %v909 = vpack.c.b16 %v890, %v889
        %v910 = vpack.c.b16 %v892, %v891
        %v911 = vpack.c.b16 %v894, %v893
        %v912 = vpack.c.b16 %v896, %v895
        %913 = vrot.lane.b32.xlu0 %v897, 8
        %v914 = vpop.permute.xlu0 %913
        %915 = vrot.lane.b32.xlu0 %v898, 8
        %v916 = vpop.permute.xlu0 %915
        %917 = vrot.lane.b32.xlu0 %v899, 8
        %v918 = vpop.permute.xlu0 %917
        %919 = vrot.lane.b32.xlu0 %v900, 8
        %v920 = vpop.permute.xlu0 %919
        %921 = vrot.lane.b32.xlu0 %v901, 8
        %v922 = vpop.permute.xlu0 %921
        %923 = vrot.lane.b32.xlu0 %v902, 8
        %v924 = vpop.permute.xlu0 %923
        %925 = vrot.lane.b32.xlu0 %v903, 8
        %v926 = vpop.permute.xlu0 %925
        %927 = vrot.lane.b32.xlu0 %v904, 8
        %v928 = vpop.permute.xlu0 %927
        %929 = vrot.lane.b32.xlu0 %v905, 8
        %v930 = vpop.permute.xlu0 %929
        %931 = vrot.lane.b32.xlu0 %v906, 8
        %v932 = vpop.permute.xlu0 %931
        %933 = vrot.lane.b32.xlu0 %v907, 8
        %v934 = vpop.permute.xlu0 %933
        %935 = vrot.lane.b32.xlu0 %v908, 8
        %v936 = vpop.permute.xlu0 %935
        %937 = vrot.lane.b32.xlu0 %v909, 8
        %v938 = vpop.permute.xlu0 %937
        %939 = vrot.lane.b32.xlu0 %v910, 8
        %v940 = vpop.permute.xlu0 %939
        %941 = vrot.lane.b32.xlu0 %v911, 8
        %v942 = vpop.permute.xlu0 %941
        %943 = vrot.lane.b32.xlu0 %v912, 8
        %v944 = vpop.permute.xlu0 %943
        %v977 = vunpack.c.l.b16 %v510
        %v978 = vunpack.c.l.b16 %v511
        %v979 = vunpack.c.l.b16 %v512
        %v980 = vunpack.c.l.b16 %v513
        %v981 = vunpack.c.l.b16 %v514
        %v982 = vunpack.c.l.b16 %v515
        %v983 = vunpack.c.l.b16 %v516
        %v984 = vunpack.c.l.b16 %v517
        %v985 = vunpack.c.l.b16 %v518
        %v986 = vunpack.c.l.b16 %v519
        %v987 = vunpack.c.l.b16 %v520
        %v988 = vunpack.c.l.b16 %v521
        %v989 = vunpack.c.l.b16 %v522
        %v990 = vunpack.c.l.b16 %v523
        %v991 = vunpack.c.l.b16 %v524
        %v992 = vunpack.c.l.b16 %v525
        %v993 = vunpack.c.l.b16 %v526
        %v994 = vunpack.c.l.b16 %v527
        %v995 = vunpack.c.l.b16 %v528
        %v996 = vunpack.c.l.b16 %v529
        %v997 = vunpack.c.l.b16 %v530
        %v998 = vunpack.c.l.b16 %v531
        %v999 = vunpack.c.l.b16 %v532
        %v1000 = vunpack.c.l.b16 %v533
        %v1001 = vunpack.c.l.b16 %v534
        %v1002 = vunpack.c.l.b16 %v535
        %v1003 = vunpack.c.l.b16 %v536
        %v1004 = vunpack.c.l.b16 %v537
        %v1005 = vunpack.c.l.b16 %v538
        %v1006 = vunpack.c.l.b16 %v539
        %v1007 = vunpack.c.l.b16 %v540
        %v1008 = vunpack.c.l.b16 %v541
        %v1009 = vpack.c.b16 %v978, %v977
        %v1010 = vpack.c.b16 %v980, %v979
        %v1011 = vpack.c.b16 %v982, %v981
        %v1012 = vpack.c.b16 %v984, %v983
        %v1013 = vpack.c.b16 %v986, %v985
        %v1014 = vpack.c.b16 %v988, %v987
        %v1015 = vpack.c.b16 %v990, %v989
        %v1016 = vpack.c.b16 %v992, %v991
        %v1017 = vpack.c.b16 %v994, %v993
        %v1018 = vpack.c.b16 %v996, %v995
        %v1019 = vpack.c.b16 %v998, %v997
        %v1020 = vpack.c.b16 %v1000, %v999
        %v1021 = vpack.c.b16 %v1002, %v1001
        %v1022 = vpack.c.b16 %v1004, %v1003
        %v1023 = vpack.c.b16 %v1006, %v1005
        %v1024 = vpack.c.b16 %v1008, %v1007
        %1025 = vrot.lane.b32.xlu0 %v1009, 12
        %v1026 = vpop.permute.xlu0 %1025
        %1027 = vrot.lane.b32.xlu0 %v1010, 12
        %v1028 = vpop.permute.xlu0 %1027
        %1029 = vrot.lane.b32.xlu0 %v1011, 12
        %v1030 = vpop.permute.xlu0 %1029
        %1031 = vrot.lane.b32.xlu0 %v1012, 12
        %v1032 = vpop.permute.xlu0 %1031
        %1033 = vrot.lane.b32.xlu0 %v1013, 12
        %v1034 = vpop.permute.xlu0 %1033
        %1035 = vrot.lane.b32.xlu0 %v1014, 12
        %v1036 = vpop.permute.xlu0 %1035
        %1037 = vrot.lane.b32.xlu0 %v1015, 12
        %v1038 = vpop.permute.xlu0 %1037
        %1039 = vrot.lane.b32.xlu0 %v1016, 12
        %v1040 = vpop.permute.xlu0 %1039
        %1041 = vrot.lane.b32.xlu0 %v1017, 12
        %v1042 = vpop.permute.xlu0 %1041
        %1043 = vrot.lane.b32.xlu0 %v1018, 12
        %v1044 = vpop.permute.xlu0 %1043
        %1045 = vrot.lane.b32.xlu0 %v1019, 12
        %v1046 = vpop.permute.xlu0 %1045
        %1047 = vrot.lane.b32.xlu0 %v1020, 12
        %v1048 = vpop.permute.xlu0 %1047
        %1049 = vrot.lane.b32.xlu0 %v1021, 12
        %v1050 = vpop.permute.xlu0 %1049
        %1051 = vrot.lane.b32.xlu0 %v1022, 12
        %v1052 = vpop.permute.xlu0 %1051
        %1053 = vrot.lane.b32.xlu0 %v1023, 12
        %v1054 = vpop.permute.xlu0 %1053
        %1055 = vrot.lane.b32.xlu0 %v1024, 12
        %v1056 = vpop.permute.xlu0 %1055
        %v1089 = vunpack.c.l.b16 %v543
        %v1090 = vunpack.c.l.b16 %v544
        %v1091 = vunpack.c.l.b16 %v545
        %v1092 = vunpack.c.l.b16 %v546
        %v1093 = vunpack.c.l.b16 %v547
        %v1094 = vunpack.c.l.b16 %v548
        %v1095 = vunpack.c.l.b16 %v549
        %v1096 = vunpack.c.l.b16 %v550
        %v1097 = vunpack.c.l.b16 %v551
        %v1098 = vunpack.c.l.b16 %v552
        %v1099 = vunpack.c.l.b16 %v553
        %v1100 = vunpack.c.l.b16 %v554
        %v1101 = vunpack.c.l.b16 %v555
        %v1102 = vunpack.c.l.b16 %v556
        %v1103 = vunpack.c.l.b16 %v557
        %v1104 = vunpack.c.l.b16 %v558
        %v1105 = vunpack.c.l.b16 %v559
        %v1106 = vunpack.c.l.b16 %v560
        %v1107 = vunpack.c.l.b16 %v561
        %v1108 = vunpack.c.l.b16 %v562
        %v1109 = vunpack.c.l.b16 %v563
        %v1110 = vunpack.c.l.b16 %v564
        %v1111 = vunpack.c.l.b16 %v565
        %v1112 = vunpack.c.l.b16 %v566
        %v1113 = vunpack.c.l.b16 %v567
        %v1114 = vunpack.c.l.b16 %v568
        %v1115 = vunpack.c.l.b16 %v569
        %v1116 = vunpack.c.l.b16 %v570
        %v1117 = vunpack.c.l.b16 %v571
        %v1118 = vunpack.c.l.b16 %v572
        %v1119 = vunpack.c.l.b16 %v573
        %v1120 = vunpack.c.l.b16 %v574
        %v1121 = vpack.c.b16 %v1090, %v1089
        %v1122 = vpack.c.b16 %v1092, %v1091
        %v1123 = vpack.c.b16 %v1094, %v1093
        %v1124 = vpack.c.b16 %v1096, %v1095
        %v1125 = vpack.c.b16 %v1098, %v1097
        %v1126 = vpack.c.b16 %v1100, %v1099
        %v1127 = vpack.c.b16 %v1102, %v1101
        %v1128 = vpack.c.b16 %v1104, %v1103
        %v1129 = vpack.c.b16 %v1106, %v1105
        %v1130 = vpack.c.b16 %v1108, %v1107
        %v1131 = vpack.c.b16 %v1110, %v1109
        %v1132 = vpack.c.b16 %v1112, %v1111
        %v1133 = vpack.c.b16 %v1114, %v1113
        %v1134 = vpack.c.b16 %v1116, %v1115
        %v1135 = vpack.c.b16 %v1118, %v1117
        %v1136 = vpack.c.b16 %v1120, %v1119
        %1137 = vrot.lane.b32.xlu0 %v1121, 16
        %v1138 = vpop.permute.xlu0 %1137
        %1139 = vrot.lane.b32.xlu0 %v1122, 16
        %v1140 = vpop.permute.xlu0 %1139
        %1141 = vrot.lane.b32.xlu0 %v1123, 16
        %v1142 = vpop.permute.xlu0 %1141
        %1143 = vrot.lane.b32.xlu0 %v1124, 16
        %v1144 = vpop.permute.xlu0 %1143
        %1145 = vrot.lane.b32.xlu0 %v1125, 16
        %v1146 = vpop.permute.xlu0 %1145
        %1147 = vrot.lane.b32.xlu0 %v1126, 16
        %v1148 = vpop.permute.xlu0 %1147
        %1149 = vrot.lane.b32.xlu0 %v1127, 16
        %v1150 = vpop.permute.xlu0 %1149
        %1151 = vrot.lane.b32.xlu0 %v1128, 16
        %v1152 = vpop.permute.xlu0 %1151
        %1153 = vrot.lane.b32.xlu0 %v1129, 16
        %v1154 = vpop.permute.xlu0 %1153
        %1155 = vrot.lane.b32.xlu0 %v1130, 16
        %v1156 = vpop.permute.xlu0 %1155
        %1157 = vrot.lane.b32.xlu0 %v1131, 16
        %v1158 = vpop.permute.xlu0 %1157
        %1159 = vrot.lane.b32.xlu0 %v1132, 16
        %v1160 = vpop.permute.xlu0 %1159
        %1161 = vrot.lane.b32.xlu0 %v1133, 16
        %v1162 = vpop.permute.xlu0 %1161
        %1163 = vrot.lane.b32.xlu0 %v1134, 16
        %v1164 = vpop.permute.xlu0 %1163
        %1165 = vrot.lane.b32.xlu0 %v1135, 16
        %v1166 = vpop.permute.xlu0 %1165
        %1167 = vrot.lane.b32.xlu0 %v1136, 16
        %v1168 = vpop.permute.xlu0 %1167
        %v1201 = vunpack.c.l.b16 %v576
        %v1202 = vunpack.c.l.b16 %v577
        %v1203 = vunpack.c.l.b16 %v578
        %v1204 = vunpack.c.l.b16 %v579
        %v1205 = vunpack.c.l.b16 %v580
        %v1206 = vunpack.c.l.b16 %v581
        %v1207 = vunpack.c.l.b16 %v582
        %v1208 = vunpack.c.l.b16 %v583
        %v1209 = vunpack.c.l.b16 %v584
        %v1210 = vunpack.c.l.b16 %v585
        %v1211 = vunpack.c.l.b16 %v586
        %v1212 = vunpack.c.l.b16 %v587
        %v1213 = vunpack.c.l.b16 %v588
        %v1214 = vunpack.c.l.b16 %v589
        %v1215 = vunpack.c.l.b16 %v590
        %v1216 = vunpack.c.l.b16 %v591
        %v1217 = vunpack.c.l.b16 %v592
        %v1218 = vunpack.c.l.b16 %v593
        %v1219 = vunpack.c.l.b16 %v594
        %v1220 = vunpack.c.l.b16 %v595
        %v1221 = vunpack.c.l.b16 %v596
        %v1222 = vunpack.c.l.b16 %v597
        %v1223 = vunpack.c.l.b16 %v598
        %v1224 = vunpack.c.l.b16 %v599
        %v1225 = vunpack.c.l.b16 %v600
        %v1226 = vunpack.c.l.b16 %v601
        %v1227 = vunpack.c.l.b16 %v602
        %v1228 = vunpack.c.l.b16 %v603
        %v1229 = vunpack.c.l.b16 %v604
        %v1230 = vunpack.c.l.b16 %v605
        %v1231 = vunpack.c.l.b16 %v606
        %v1232 = vunpack.c.l.b16 %v607
        %v1233 = vpack.c.b16 %v1202, %v1201
        %v1234 = vpack.c.b16 %v1204, %v1203
        %v1235 = vpack.c.b16 %v1206, %v1205
        %v1236 = vpack.c.b16 %v1208, %v1207
        %v1237 = vpack.c.b16 %v1210, %v1209
        %v1238 = vpack.c.b16 %v1212, %v1211
        %v1239 = vpack.c.b16 %v1214, %v1213
        %v1240 = vpack.c.b16 %v1216, %v1215
        %v1241 = vpack.c.b16 %v1218, %v1217
        %v1242 = vpack.c.b16 %v1220, %v1219
        %v1243 = vpack.c.b16 %v1222, %v1221
        %v1244 = vpack.c.b16 %v1224, %v1223
        %v1245 = vpack.c.b16 %v1226, %v1225
        %v1246 = vpack.c.b16 %v1228, %v1227
        %v1247 = vpack.c.b16 %v1230, %v1229
        %v1248 = vpack.c.b16 %v1232, %v1231
        %1249 = vrot.lane.b32.xlu0 %v1233, 20
        %v1250 = vpop.permute.xlu0 %1249
        %1251 = vrot.lane.b32.xlu0 %v1234, 20
        %v1252 = vpop.permute.xlu0 %1251
        %1253 = vrot.lane.b32.xlu0 %v1235, 20
        %v1254 = vpop.permute.xlu0 %1253
        %1255 = vrot.lane.b32.xlu0 %v1236, 20
        %v1256 = vpop.permute.xlu0 %1255
        %1257 = vrot.lane.b32.xlu0 %v1237, 20
        %v1258 = vpop.permute.xlu0 %1257
        %1259 = vrot.lane.b32.xlu0 %v1238, 20
        %v1260 = vpop.permute.xlu0 %1259
        %1261 = vrot.lane.b32.xlu0 %v1239, 20
        %v1262 = vpop.permute.xlu0 %1261
        %1263 = vrot.lane.b32.xlu0 %v1240, 20
        %v1264 = vpop.permute.xlu0 %1263
        %1265 = vrot.lane.b32.xlu0 %v1241, 20
        %v1266 = vpop.permute.xlu0 %1265
        %1267 = vrot.lane.b32.xlu0 %v1242, 20
        %v1268 = vpop.permute.xlu0 %1267
        %1269 = vrot.lane.b32.xlu0 %v1243, 20
        %v1270 = vpop.permute.xlu0 %1269
        %1271 = vrot.lane.b32.xlu0 %v1244, 20
        %v1272 = vpop.permute.xlu0 %1271
        %1273 = vrot.lane.b32.xlu0 %v1245, 20
        %v1274 = vpop.permute.xlu0 %1273
        %1275 = vrot.lane.b32.xlu0 %v1246, 20
        %v1276 = vpop.permute.xlu0 %1275
        %1277 = vrot.lane.b32.xlu0 %v1247, 20
        %v1278 = vpop.permute.xlu0 %1277
        %1279 = vrot.lane.b32.xlu0 %v1248, 20
        %v1280 = vpop.permute.xlu0 %1279
        %v1313 = vunpack.c.l.b16 %v609
        %v1314 = vunpack.c.l.b16 %v610
        %v1315 = vunpack.c.l.b16 %v611
        %v1316 = vunpack.c.l.b16 %v612
        %v1317 = vunpack.c.l.b16 %v613
        %v1318 = vunpack.c.l.b16 %v614
        %v1319 = vunpack.c.l.b16 %v615
        %v1320 = vunpack.c.l.b16 %v616
        %v1321 = vunpack.c.l.b16 %v617
        %v1322 = vunpack.c.l.b16 %v618
        %v1323 = vunpack.c.l.b16 %v619
        %v1324 = vunpack.c.l.b16 %v620
        %v1325 = vunpack.c.l.b16 %v621
        %v1326 = vunpack.c.l.b16 %v622
        %v1327 = vunpack.c.l.b16 %v623
        %v1328 = vunpack.c.l.b16 %v624
        %v1329 = vunpack.c.l.b16 %v625
        %v1330 = vunpack.c.l.b16 %v626
        %v1331 = vunpack.c.l.b16 %v627
        %v1332 = vunpack.c.l.b16 %v628
        %v1333 = vunpack.c.l.b16 %v629
        %v1334 = vunpack.c.l.b16 %v630
        %v1335 = vunpack.c.l.b16 %v631
        %v1336 = vunpack.c.l.b16 %v632
        %v1337 = vunpack.c.l.b16 %v633
        %v1338 = vunpack.c.l.b16 %v634
        %v1339 = vunpack.c.l.b16 %v635
        %v1340 = vunpack.c.l.b16 %v636
        %v1341 = vunpack.c.l.b16 %v637
        %v1342 = vunpack.c.l.b16 %v638
        %v1343 = vunpack.c.l.b16 %v639
        %v1344 = vunpack.c.l.b16 %v640
        %v1345 = vpack.c.b16 %v1314, %v1313
        %v1346 = vpack.c.b16 %v1316, %v1315
        %v1347 = vpack.c.b16 %v1318, %v1317
        %v1348 = vpack.c.b16 %v1320, %v1319
        %v1349 = vpack.c.b16 %v1322, %v1321
        %v1350 = vpack.c.b16 %v1324, %v1323
        %v1351 = vpack.c.b16 %v1326, %v1325
        %v1352 = vpack.c.b16 %v1328, %v1327
        %v1353 = vpack.c.b16 %v1330, %v1329
        %v1354 = vpack.c.b16 %v1332, %v1331
        %v1355 = vpack.c.b16 %v1334, %v1333
        %v1356 = vpack.c.b16 %v1336, %v1335
        %v1357 = vpack.c.b16 %v1338, %v1337
        %v1358 = vpack.c.b16 %v1340, %v1339
        %v1359 = vpack.c.b16 %v1342, %v1341
        %v1360 = vpack.c.b16 %v1344, %v1343
        %1361 = vrot.lane.b32.xlu0 %v1345, 24
        %v1362 = vpop.permute.xlu0 %1361
        %1363 = vrot.lane.b32.xlu0 %v1346, 24
        %v1364 = vpop.permute.xlu0 %1363
        %1365 = vrot.lane.b32.xlu0 %v1347, 24
        %v1366 = vpop.permute.xlu0 %1365
        %1367 = vrot.lane.b32.xlu0 %v1348, 24
        %v1368 = vpop.permute.xlu0 %1367
        %1369 = vrot.lane.b32.xlu0 %v1349, 24
        %v1370 = vpop.permute.xlu0 %1369
        %1371 = vrot.lane.b32.xlu0 %v1350, 24
        %v1372 = vpop.permute.xlu0 %1371
        %1373 = vrot.lane.b32.xlu0 %v1351, 24
        %v1374 = vpop.permute.xlu0 %1373
        %1375 = vrot.lane.b32.xlu0 %v1352, 24
        %v1376 = vpop.permute.xlu0 %1375
        %1377 = vrot.lane.b32.xlu0 %v1353, 24
        %v1378 = vpop.permute.xlu0 %1377
        %1379 = vrot.lane.b32.xlu0 %v1354, 24
        %v1380 = vpop.permute.xlu0 %1379
        %1381 = vrot.lane.b32.xlu0 %v1355, 24
        %v1382 = vpop.permute.xlu0 %1381
        %1383 = vrot.lane.b32.xlu0 %v1356, 24
        %v1384 = vpop.permute.xlu0 %1383
        %1385 = vrot.lane.b32.xlu0 %v1357, 24
        %v1386 = vpop.permute.xlu0 %1385
        %1387 = vrot.lane.b32.xlu0 %v1358, 24
        %v1388 = vpop.permute.xlu0 %1387
        %1389 = vrot.lane.b32.xlu0 %v1359, 24
        %v1390 = vpop.permute.xlu0 %1389
        %1391 = vrot.lane.b32.xlu0 %v1360, 24
        %v1392 = vpop.permute.xlu0 %1391
        %vm1393 = vcmask 31744
        %v1396 = vsel %vm1393, %v705, %v802
        %v1399 = vsel %vm1393, %v706, %v804
        %v1402 = vsel %vm1393, %v707, %v806
        %v1405 = vsel %vm1393, %v708, %v808
        %v1408 = vsel %vm1393, %v709, %v810
        %v1411 = vsel %vm1393, %v710, %v812
        %v1414 = vsel %vm1393, %v711, %v814
        %v1417 = vsel %vm1393, %v712, %v816
        %v1420 = vsel %vm1393, %v713, %v818
        %v1423 = vsel %vm1393, %v714, %v820
        %v1426 = vsel %vm1393, %v715, %v822
        %v1429 = vsel %vm1393, %v716, %v824
        %v1432 = vsel %vm1393, %v717, %v826
        %v1435 = vsel %vm1393, %v718, %v828
        %v1438 = vsel %vm1393, %v719, %v830
        %v1441 = vsel %vm1393, %v720, %v832
        %vm1442 = vcmask 64512
        %v1444 = vsel %vm1442, %v1396, %v914
        %v1446 = vsel %vm1442, %v1399, %v916
        %v1448 = vsel %vm1442, %v1402, %v918
        %v1450 = vsel %vm1442, %v1405, %v920
        %v1452 = vsel %vm1442, %v1408, %v922
        %v1454 = vsel %vm1442, %v1411, %v924
        %v1456 = vsel %vm1442, %v1414, %v926
        %v1458 = vsel %vm1442, %v1417, %v928
        %v1460 = vsel %vm1442, %v1420, %v930
        %v1462 = vsel %vm1442, %v1423, %v932
        %v1464 = vsel %vm1442, %v1426, %v934
        %v1466 = vsel %vm1442, %v1429, %v936
        %v1468 = vsel %vm1442, %v1432, %v938
        %v1470 = vsel %vm1442, %v1435, %v940
        %v1472 = vsel %vm1442, %v1438, %v942
        %v1474 = vsel %vm1442, %v1441, %v944
        %vm1475 = vcmask 97280
        %v1477 = vsel %vm1475, %v1444, %v1026
        %v1479 = vsel %vm1475, %v1446, %v1028
        %v1481 = vsel %vm1475, %v1448, %v1030
        %v1483 = vsel %vm1475, %v1450, %v1032
        %v1485 = vsel %vm1475, %v1452, %v1034
        %v1487 = vsel %vm1475, %v1454, %v1036
        %v1489 = vsel %vm1475, %v1456, %v1038
        %v1491 = vsel %vm1475, %v1458, %v1040
        %v1493 = vsel %vm1475, %v1460, %v1042
        %v1495 = vsel %vm1475, %v1462, %v1044
        %v1497 = vsel %vm1475, %v1464, %v1046
        %v1499 = vsel %vm1475, %v1466, %v1048
        %v1501 = vsel %vm1475, %v1468, %v1050
        %v1503 = vsel %vm1475, %v1470, %v1052
        %v1505 = vsel %vm1475, %v1472, %v1054
        %v1507 = vsel %vm1475, %v1474, %v1056
        %vm1508 = vcmask 130048
        %v1510 = vsel %vm1508, %v1477, %v1138
        %v1512 = vsel %vm1508, %v1479, %v1140
        %v1514 = vsel %vm1508, %v1481, %v1142
        %v1516 = vsel %vm1508, %v1483, %v1144
        %v1518 = vsel %vm1508, %v1485, %v1146
        %v1520 = vsel %vm1508, %v1487, %v1148
        %v1522 = vsel %vm1508, %v1489, %v1150
        %v1524 = vsel %vm1508, %v1491, %v1152
        %v1526 = vsel %vm1508, %v1493, %v1154
        %v1528 = vsel %vm1508, %v1495, %v1156
        %v1530 = vsel %vm1508, %v1497, %v1158
        %v1532 = vsel %vm1508, %v1499, %v1160
        %v1534 = vsel %vm1508, %v1501, %v1162
        %v1536 = vsel %vm1508, %v1503, %v1164
        %v1538 = vsel %vm1508, %v1505, %v1166
        %v1540 = vsel %vm1508, %v1507, %v1168
        %vm1541 = vcmask 162816
        %v1543 = vsel %vm1541, %v1510, %v1250
        %v1545 = vsel %vm1541, %v1512, %v1252
        %v1547 = vsel %vm1541, %v1514, %v1254
        %v1549 = vsel %vm1541, %v1516, %v1256
        %v1551 = vsel %vm1541, %v1518, %v1258
        %v1553 = vsel %vm1541, %v1520, %v1260
        %v1555 = vsel %vm1541, %v1522, %v1262
        %v1557 = vsel %vm1541, %v1524, %v1264
        %v1559 = vsel %vm1541, %v1526, %v1266
        %v1561 = vsel %vm1541, %v1528, %v1268
        %v1563 = vsel %vm1541, %v1530, %v1270
        %v1565 = vsel %vm1541, %v1532, %v1272
        %v1567 = vsel %vm1541, %v1534, %v1274
        %v1569 = vsel %vm1541, %v1536, %v1276
        %v1571 = vsel %vm1541, %v1538, %v1278
        %v1573 = vsel %vm1541, %v1540, %v1280
        %vm1574 = vcmask 195584
        %v1576 = vsel %vm1574, %v1543, %v1362
        %v1578 = vsel %vm1574, %v1545, %v1364
        %v1580 = vsel %vm1574, %v1547, %v1366
        %v1582 = vsel %vm1574, %v1549, %v1368
        %v1584 = vsel %vm1574, %v1551, %v1370
        %v1586 = vsel %vm1574, %v1553, %v1372
        %v1588 = vsel %vm1574, %v1555, %v1374
        %v1590 = vsel %vm1574, %v1557, %v1376
        %v1592 = vsel %vm1574, %v1559, %v1378
        %v1594 = vsel %vm1574, %v1561, %v1380
        %v1596 = vsel %vm1574, %v1563, %v1382
        %v1598 = vsel %vm1574, %v1565, %v1384
        %v1600 = vsel %vm1574, %v1567, %v1386
        %v1602 = vsel %vm1574, %v1569, %v1388
        %v1604 = vsel %vm1574, %v1571, %v1390
        %v1606 = vsel %vm1574, %v1573, %v1392
        %v1607 = vld [vmem:[%s1] sm:$0xf]
        %v1608 = vld [vmem:[%s1 + $0x4] sm:$0xf]
        %v1609 = vld [vmem:[%s1 + $0x8] sm:$0xf]
        %v1610 = vld [vmem:[%s1 + $0xc] sm:$0x3]
        %v1615 = vunpack.c.l.b16 %v1607
        %v1616 = vunpack.c.l.b16 %v1608
        %v1617 = vunpack.c.l.b16 %v1609
        %v1618 = vunpack.c.l.b16 %v1610
        %v1619 = vpack.c.b16 %v1616, %v1615
        %v1620 = vpack.c.b16 %v1618, %v1617
        %vm1622 = vcmask 228352
        %v1623 = vsel %vm1622, %v1576, 0
        %v1625 = vsel %vm1622, %v1578, 0
        %v1627 = vsel %vm1622, %v1580, 0
        %v1629 = vsel %vm1622, %v1582, 0
        %v1631 = vsel %vm1622, %v1584, 0
        %v1633 = vsel %vm1622, %v1586, 0
        %v1635 = vsel %vm1622, %v1588, 0
        %v1637 = vsel %vm1622, %v1590, 0
        %v1639 = vsel %vm1622, %v1592, 0
        %v1641 = vsel %vm1622, %v1594, 0
        %v1643 = vsel %vm1622, %v1596, 0
        %v1645 = vsel %vm1622, %v1598, 0
        %v1647 = vsel %vm1622, %v1600, 0
        %v1649 = vsel %vm1622, %v1602, 0
        %v1651 = vsel %vm1622, %v1604, 0
        %v1653 = vsel %vm1622, %v1606, 0
        %vm1655 = vcmask 1045504
        %v1657 = vsel %vm1655, %v1620, 0
        %1659 = vmatprep.subr.bf16.mxu0 0
        %1660 = vmatpush1.bf16.msra.mxu0 0
        %1661 = vmatprep.subr.bf16.mxu0 0
        %1662 = vmatpush1.bf16.msra.mxu0 0
        %1663 = vmatprep.subr.bf16.mxu0 0
        %1664 = vmatpush1.bf16.msra.mxu0 0
        %1665 = vmatprep.subr.bf16.mxu0 0
        %1666 = vmatpush1.bf16.msra.mxu0 0
        %1667 = vmatprep.subr.bf16.mxu0 0
        %1668 = vmatpush1.bf16.msra.mxu0 0
        %1669 = vmatprep.subr.bf16.mxu0 0
        %1670 = vmatpush1.bf16.msra.mxu0 0
        %1671 = vmatprep.subr.bf16.mxu0 0
        %1672 = vmatpush1.bf16.msra.mxu0 %v1657
        %1673 = vmatprep.subr.bf16.mxu0 0
        %1674 = vmatpush1.bf16.msra.mxu0 %v1619
        %1675 = vmatprep.subr.bf16.mxu0 0
        %1676 = vmatpush2.bf16.msra.mxu0 0
        %1677 = vmatprep.subr.bf16.mxu0 0
        %1678 = vmatpush2.bf16.msra.mxu0 0
        %1679 = vmatprep.subr.bf16.mxu0 0
        %1680 = vmatpush2.bf16.msra.mxu0 0
        %1681 = vmatprep.subr.bf16.mxu0 0
        %1682 = vmatpush2.bf16.msra.mxu0 0
        %1683 = vmatprep.subr.bf16.mxu0 0
        %1684 = vmatpush2.bf16.msra.mxu0 0
        %1685 = vmatprep.subr.bf16.mxu0 0
        %1686 = vmatpush2.bf16.msra.mxu0 0
        %1687 = vmatprep.subr.bf16.mxu0 0
        %1688 = vmatpush2.bf16.msra.mxu0 0
        %1689 = vmatprep.subr.bf16.mxu0 0
        %1690 = vmatpush2.bf16.msra.mxu0 0
        %1691 = vmatprep.mubr.bf16.mxu0 0
        %1692 = vmatmul.mubr.bf16.gmra.mxu0 %v1623
        %v1693 = vpop.f32.mrf.mxu0
        %v1694 = vadd.f32 0.0, %v1693
        %v1695 = vpop.f32.mrf.mxu0
        %v1696 = vpop.f32.mrf.mxu0
        %v1697 = vadd.f32 0.0, %v1696
        %v1698 = vpop.f32.mrf.mxu0
        %1699 = vmatprep.mubr.bf16.mxu0 0
        %1700 = vmatmul.mubr.bf16.gmra.mxu0 %v1625
        %v1701 = vpop.f32.mrf.mxu0
        %v1702 = vadd.f32 0.0, %v1701
        %v1703 = vpop.f32.mrf.mxu0
        %v1704 = vpop.f32.mrf.mxu0
        %v1705 = vadd.f32 0.0, %v1704
        %v1706 = vpop.f32.mrf.mxu0
        %1707 = vmatprep.mubr.bf16.mxu0 0
        %1708 = vmatmul.mubr.bf16.gmra.mxu0 %v1627
        %v1709 = vpop.f32.mrf.mxu0
        %v1710 = vadd.f32 0.0, %v1709
        %v1711 = vpop.f32.mrf.mxu0
        %v1712 = vpop.f32.mrf.mxu0
        %v1713 = vadd.f32 0.0, %v1712
        %v1714 = vpop.f32.mrf.mxu0
        %1715 = vmatprep.mubr.bf16.mxu0 0
        %1716 = vmatmul.mubr.bf16.gmra.mxu0 %v1629
        %v1717 = vpop.f32.mrf.mxu0
        %v1718 = vadd.f32 0.0, %v1717
        %v1719 = vpop.f32.mrf.mxu0
        %v1720 = vpop.f32.mrf.mxu0
        %v1721 = vadd.f32 0.0, %v1720
        %v1722 = vpop.f32.mrf.mxu0
        %1723 = vmatprep.mubr.bf16.mxu0 0
        %1724 = vmatmul.mubr.bf16.gmra.mxu0 %v1631
        %v1725 = vpop.f32.mrf.mxu0
        %v1726 = vadd.f32 0.0, %v1725
        %v1727 = vpop.f32.mrf.mxu0
        %v1728 = vpop.f32.mrf.mxu0
        %v1729 = vadd.f32 0.0, %v1728
        %v1730 = vpop.f32.mrf.mxu0
        %1731 = vmatprep.mubr.bf16.mxu0 0
        %1732 = vmatmul.mubr.bf16.gmra.mxu0 %v1633
        %v1733 = vpop.f32.mrf.mxu0
        %v1734 = vadd.f32 0.0, %v1733
        %v1735 = vpop.f32.mrf.mxu0
        %v1736 = vpop.f32.mrf.mxu0
        %v1737 = vadd.f32 0.0, %v1736
        %v1738 = vpop.f32.mrf.mxu0
        %1739 = vmatprep.mubr.bf16.mxu0 0
        %1740 = vmatmul.mubr.bf16.gmra.mxu0 %v1635
        %v1741 = vpop.f32.mrf.mxu0
        %v1742 = vadd.f32 0.0, %v1741
        %v1743 = vpop.f32.mrf.mxu0
        %v1744 = vpop.f32.mrf.mxu0
        %v1745 = vadd.f32 0.0, %v1744
        %v1746 = vpop.f32.mrf.mxu0
        %1747 = vmatprep.mubr.bf16.mxu0 0
        %1748 = vmatmul.mubr.bf16.gmra.mxu0 %v1637
        %v1749 = vpop.f32.mrf.mxu0
        %v1750 = vadd.f32 0.0, %v1749
        %v1751 = vpop.f32.mrf.mxu0
        %v1752 = vpop.f32.mrf.mxu0
        %v1753 = vadd.f32 0.0, %v1752
        %v1754 = vpop.f32.mrf.mxu0
        %1755 = vmatprep.mubr.bf16.mxu0 0
        %1756 = vmatmul.mubr.bf16.gmra.mxu0 %v1639
        %v1757 = vpop.f32.mrf.mxu0
        %v1758 = vadd.f32 0.0, %v1757
        %v1759 = vpop.f32.mrf.mxu0
        %v1760 = vpop.f32.mrf.mxu0
        %v1761 = vadd.f32 0.0, %v1760
        %v1762 = vpop.f32.mrf.mxu0
        %1763 = vmatprep.mubr.bf16.mxu0 0
        %1764 = vmatmul.mubr.bf16.gmra.mxu0 %v1641
        %v1765 = vpop.f32.mrf.mxu0
        %v1766 = vadd.f32 0.0, %v1765
        %v1767 = vpop.f32.mrf.mxu0
        %v1768 = vpop.f32.mrf.mxu0
        %v1769 = vadd.f32 0.0, %v1768
        %v1770 = vpop.f32.mrf.mxu0
        %1771 = vmatprep.mubr.bf16.mxu0 0
        %1772 = vmatmul.mubr.bf16.gmra.mxu0 %v1643
        %v1773 = vpop.f32.mrf.mxu0
        %v1774 = vadd.f32 0.0, %v1773
        %v1775 = vpop.f32.mrf.mxu0
        %v1776 = vpop.f32.mrf.mxu0
        %v1777 = vadd.f32 0.0, %v1776
        %v1778 = vpop.f32.mrf.mxu0
        %1779 = vmatprep.mubr.bf16.mxu0 0
        %1780 = vmatmul.mubr.bf16.gmra.mxu0 %v1645
        %v1781 = vpop.f32.mrf.mxu0
        %v1782 = vadd.f32 0.0, %v1781
        %v1783 = vpop.f32.mrf.mxu0
        %v1784 = vpop.f32.mrf.mxu0
        %v1785 = vadd.f32 0.0, %v1784
        %v1786 = vpop.f32.mrf.mxu0
        %1787 = vmatprep.mubr.bf16.mxu0 0
        %1788 = vmatmul.mubr.bf16.gmra.mxu0 %v1647
        %v1789 = vpop.f32.mrf.mxu0
        %v1790 = vadd.f32 0.0, %v1789
        %v1791 = vpop.f32.mrf.mxu0
        %v1792 = vpop.f32.mrf.mxu0
        %v1793 = vadd.f32 0.0, %v1792
        %v1794 = vpop.f32.mrf.mxu0
        %1795 = vmatprep.mubr.bf16.mxu0 0
        %1796 = vmatmul.mubr.bf16.gmra.mxu0 %v1649
        %v1797 = vpop.f32.mrf.mxu0
        %v1798 = vadd.f32 0.0, %v1797
        %v1799 = vpop.f32.mrf.mxu0
        %v1800 = vpop.f32.mrf.mxu0
        %v1801 = vadd.f32 0.0, %v1800
        %v1802 = vpop.f32.mrf.mxu0
        %1803 = vmatprep.mubr.bf16.mxu0 0
        %1804 = vmatmul.mubr.bf16.gmra.mxu0 %v1651
        %v1805 = vpop.f32.mrf.mxu0
        %v1806 = vadd.f32 0.0, %v1805
        %v1807 = vpop.f32.mrf.mxu0
        %v1808 = vpop.f32.mrf.mxu0
        %v1809 = vadd.f32 0.0, %v1808
        %v1810 = vpop.f32.mrf.mxu0
        %1811 = vmatprep.mubr.bf16.mxu0 0
        %1812 = vmatmul.mubr.bf16.gmra.mxu0 %v1653
        %v1813 = vpop.f32.mrf.mxu0
        %v1814 = vadd.f32 0.0, %v1813
        %v1815 = vpop.f32.mrf.mxu0
        %v1816 = vpop.f32.mrf.mxu0
        %v1817 = vadd.f32 0.0, %v1816
        %v1818 = vpop.f32.mrf.mxu0
        %1819 = vdwg.mxu0
        %v1820 = vld [vmem:[%s2] sm:$0x1]
        %v1822 = vlaneseq
        %v1823 = vshrl.u32 %v1822, 7
        %v1824 = vsub.s32 0, %v1823
        %v1825 = vrot.slane %v1820, %v1824
        %v1827 = vmul.f32 %v1694, %v1825
        %v1828 = vmul.f32 %v1697, %v1825
        %v1829 = vmul.f32 %v1702, %v1825
        %v1830 = vmul.f32 %v1705, %v1825
        %v1831 = vmul.f32 %v1710, %v1825
        %v1832 = vmul.f32 %v1713, %v1825
        %v1833 = vmul.f32 %v1718, %v1825
        %v1834 = vmul.f32 %v1721, %v1825
        %v1835 = vmul.f32 %v1726, %v1825
        %v1836 = vmul.f32 %v1729, %v1825
        %v1837 = vmul.f32 %v1734, %v1825
        %v1838 = vmul.f32 %v1737, %v1825
        %v1839 = vmul.f32 %v1742, %v1825
        %v1840 = vmul.f32 %v1745, %v1825
        %v1841 = vmul.f32 %v1750, %v1825
        %v1842 = vmul.f32 %v1753, %v1825
        %v1843 = vmul.f32 %v1758, %v1825
        %v1844 = vmul.f32 %v1761, %v1825
        %v1845 = vmul.f32 %v1766, %v1825
        %v1846 = vmul.f32 %v1769, %v1825
        %v1847 = vmul.f32 %v1774, %v1825
        %v1848 = vmul.f32 %v1777, %v1825
        %v1849 = vmul.f32 %v1782, %v1825
        %v1850 = vmul.f32 %v1785, %v1825
        %v1851 = vmul.f32 %v1790, %v1825
        %v1852 = vmul.f32 %v1793, %v1825
        %v1853 = vmul.f32 %v1798, %v1825
        %v1854 = vmul.f32 %v1801, %v1825
        %v1855 = vmul.f32 %v1806, %v1825
        %v1856 = vmul.f32 %v1809, %v1825
        %v1857 = vmul.f32 %v1814, %v1825
        %v1858 = vmul.f32 %v1817, %v1825
        %v1859 = vld [vmem:[%s3] sm:$0x1]
        %v1861 = vlaneseq
        %v1862 = vshrl.u32 %v1861, 7
        %v1863 = vsub.s32 0, %v1862
        %v1864 = vrot.slane %v1859, %v1863
        %v1866 = vadd.f32 %v1827, %v1864
        %v1867 = vadd.f32 %v1828, %v1864
        %v1868 = vadd.f32 %v1829, %v1864
        %v1869 = vadd.f32 %v1830, %v1864
        %v1870 = vadd.f32 %v1831, %v1864
        %v1871 = vadd.f32 %v1832, %v1864
        %v1872 = vadd.f32 %v1833, %v1864
        %v1873 = vadd.f32 %v1834, %v1864
        %v1874 = vadd.f32 %v1835, %v1864
        %v1875 = vadd.f32 %v1836, %v1864
        %v1876 = vadd.f32 %v1837, %v1864
        %v1877 = vadd.f32 %v1838, %v1864
        %v1878 = vadd.f32 %v1839, %v1864
        %v1879 = vadd.f32 %v1840, %v1864
        %v1880 = vadd.f32 %v1841, %v1864
        %v1881 = vadd.f32 %v1842, %v1864
        %v1882 = vadd.f32 %v1843, %v1864
        %v1883 = vadd.f32 %v1844, %v1864
        %v1884 = vadd.f32 %v1845, %v1864
        %v1885 = vadd.f32 %v1846, %v1864
        %v1886 = vadd.f32 %v1847, %v1864
        %v1887 = vadd.f32 %v1848, %v1864
        %v1888 = vadd.f32 %v1849, %v1864
        %v1889 = vadd.f32 %v1850, %v1864
        %v1890 = vadd.f32 %v1851, %v1864
        %v1891 = vadd.f32 %v1852, %v1864
        %v1892 = vadd.f32 %v1853, %v1864
        %v1893 = vadd.f32 %v1854, %v1864
        %v1894 = vadd.f32 %v1855, %v1864
        %v1895 = vadd.f32 %v1856, %v1864
        %v1896 = vadd.f32 %v1857, %v1864
        %v1897 = vadd.f32 %v1858, %v1864
        %v1898 = vmax.f32 %v1866, 0.0
        %v1899 = vmax.f32 %v1867, 0.0
        %v1900 = vmax.f32 %v1868, 0.0
        %v1901 = vmax.f32 %v1869, 0.0
        %v1902 = vmax.f32 %v1870, 0.0
        %v1903 = vmax.f32 %v1871, 0.0
        %v1904 = vmax.f32 %v1872, 0.0
        %v1905 = vmax.f32 %v1873, 0.0
        %v1906 = vmax.f32 %v1874, 0.0
        %v1907 = vmax.f32 %v1875, 0.0
        %v1908 = vmax.f32 %v1876, 0.0
        %v1909 = vmax.f32 %v1877, 0.0
        %v1910 = vmax.f32 %v1878, 0.0
        %v1911 = vmax.f32 %v1879, 0.0
        %v1912 = vmax.f32 %v1880, 0.0
        %v1913 = vmax.f32 %v1881, 0.0
        %v1914 = vmax.f32 %v1882, 0.0
        %v1915 = vmax.f32 %v1883, 0.0
        %v1916 = vmax.f32 %v1884, 0.0
        %v1917 = vmax.f32 %v1885, 0.0
        %v1918 = vmax.f32 %v1886, 0.0
        %v1919 = vmax.f32 %v1887, 0.0
        %v1920 = vmax.f32 %v1888, 0.0
        %v1921 = vmax.f32 %v1889, 0.0
        %v1922 = vmax.f32 %v1890, 0.0
        %v1923 = vmax.f32 %v1891, 0.0
        %v1924 = vmax.f32 %v1892, 0.0
        %v1925 = vmax.f32 %v1893, 0.0
        %v1926 = vmax.f32 %v1894, 0.0
        %v1927 = vmax.f32 %v1895, 0.0
        %v1928 = vmax.f32 %v1896, 0.0
        %v1929 = vmax.f32 %v1897, 0.0
        %1930 = vst [vmem:[%s407] sm:$0xff] %v1898
        %1931 = vst [vmem:[%s407 + $0x8] sm:$0xff] %v1899
        %1932 = vst [vmem:[%s407 + $0x10] sm:$0xff] %v1900
        %1933 = vst [vmem:[%s407 + $0x18] sm:$0xff] %v1901
        %1934 = vst [vmem:[%s407 + $0x20] sm:$0xff] %v1902
        %1935 = vst [vmem:[%s407 + $0x28] sm:$0xff] %v1903
        %1936 = vst [vmem:[%s407 + $0x30] sm:$0xff] %v1904
        %1937 = vst [vmem:[%s407 + $0x38] sm:$0xff] %v1905
        %1938 = vst [vmem:[%s407 + $0x40] sm:$0xff] %v1906
        %1939 = vst [vmem:[%s407 + $0x48] sm:$0xff] %v1907
        %1940 = vst [vmem:[%s407 + $0x50] sm:$0xff] %v1908
        %1941 = vst [vmem:[%s407 + $0x58] sm:$0xff] %v1909
        %1942 = vst [vmem:[%s407 + $0x60] sm:$0xff] %v1910
        %1943 = vst [vmem:[%s407 + $0x68] sm:$0xff] %v1911
        %1944 = vst [vmem:[%s407 + $0x70] sm:$0xff] %v1912
        %1945 = vst [vmem:[%s407 + $0x78] sm:$0xff] %v1913
        %1946 = vst [vmem:[%s407 + $0x80] sm:$0xff] %v1914
        %1947 = vst [vmem:[%s407 + $0x88] sm:$0xff] %v1915
        %1948 = vst [vmem:[%s407 + $0x90] sm:$0xff] %v1916
        %1949 = vst [vmem:[%s407 + $0x98] sm:$0xff] %v1917
        %1950 = vst [vmem:[%s407 + $0xa0] sm:$0xff] %v1918
        %1951 = vst [vmem:[%s407 + $0xa8] sm:$0xff] %v1919
        %1952 = vst [vmem:[%s407 + $0xb0] sm:$0xff] %v1920
        %1953 = vst [vmem:[%s407 + $0xb8] sm:$0xff] %v1921
        %1954 = vst [vmem:[%s407 + $0xc0] sm:$0xff] %v1922
        %1955 = vst [vmem:[%s407 + $0xc8] sm:$0xff] %v1923
        %1956 = vst [vmem:[%s407 + $0xd0] sm:$0xff] %v1924
        %1957 = vst [vmem:[%s407 + $0xd8] sm:$0xff] %v1925
        %1958 = vst [vmem:[%s407 + $0xe0] sm:$0xff] %v1926
        %1959 = vst [vmem:[%s407 + $0xe8] sm:$0xff] %v1927
        %1960 = vst [vmem:[%s407 + $0xf0] sm:$0xff] %v1928
        %1961 = vst [vmem:[%s407 + $0xf8] sm:$0xff] %v1929
        %s1962 = sand.u32 %s112, 1
        %s1963 = sand.u32 %s112, 1
        %s1964 = smul.addr %s1963, 256
        %s1965 = scalar_lea.vmem [#allocation3], %s1964
        // Predicated region
        $region78: #{run.5} parent=72 // pred_check
          %p1966 = pneg %p122
        $region79: #{run.5} parent=72 // pred_check_branch
          %1968 = sbr.rel (%p1966) target = $region81
        $region80: #{run.5} parent=72 // pred_region
          %s1969 = smul.u32 2, %s15
          %s1970 = smul.addr %s1969, 8
          %s1971 = scalar_lea.vmem %s4, %s1970
          // Predicated region
          $region82: #{run.5} parent=80 // pred_check
            _
          $region83: #{run.5} parent=80 // pred_check_branch
            %1973 = sbr.rel (0) target = $region85
          $region84: #{run.5} parent=80 // pred_region
            // Predicated region
            $region86: #{run.5} parent=84 // pred_check
              _
            $region87: #{run.5} parent=84 // pred_check_branch
              %1975 = sbr.rel (0) target = $region89
            $region88: #{run.5} parent=84 // pred_region
              // Predicated region
              $region101: #{run.5} parent=88 // pred_check
                _
              $region102: #{run.5} parent=88 // pred_check_branch
                %2053 = sbr.rel (0) target = $region104
              $region103: #{run.5} parent=88 // pred_region
                loop: start=0, step=1, limit=1
                $region105: #{run.5} parent=103 // loop_pre_header
                  _
                $region106: #{run.5} parent=103 // loop_header
                  %s2055 = sphi 0, %s2059
                  %p2056 = scmp.ge.s32.totalorder %s2055, 1
                  %s2060 = sphi %s1965, %s1965
                  %s2061 = sphi %s1971, %s1971
                $region107: #{run.5} parent=103 // loop_header_branch
                  %2058 = sbr.rel (%p2056) target = $region111
                $region108: #{run.5} parent=103 // loop_body
                  %v2062 = vld [vmem:[%s2060] sm:$0xff]
                  %2063 = vst [vmem:[%s2061] sm:$0xff] %v2062
                  %v2064 = vld [vmem:[%s2060 + $0x8] sm:$0xff]
                  %2065 = vst [vmem:[%s2061 + $0x8] sm:$0xff] %v2064
                  %v2066 = vld [vmem:[%s2060 + $0x10] sm:$0xff]
                  %2067 = vst [vmem:[%s2061 + $0x20] sm:$0xff] %v2066
                  %v2068 = vld [vmem:[%s2060 + $0x18] sm:$0xff]
                  %2069 = vst [vmem:[%s2061 + $0x28] sm:$0xff] %v2068
                  %v2070 = vld [vmem:[%s2060 + $0x20] sm:$0xff]
                  %2071 = vst [vmem:[%s2061 + $0x40] sm:$0xff] %v2070
                  %v2072 = vld [vmem:[%s2060 + $0x28] sm:$0xff]
                  %2073 = vst [vmem:[%s2061 + $0x48] sm:$0xff] %v2072
                  %v2074 = vld [vmem:[%s2060 + $0x30] sm:$0xff]
                  %2075 = vst [vmem:[%s2061 + $0x60] sm:$0xff] %v2074
                  %v2076 = vld [vmem:[%s2060 + $0x38] sm:$0xff]
                  %2077 = vst [vmem:[%s2061 + $0x68] sm:$0xff] %v2076
                  %v2078 = vld [vmem:[%s2060 + $0x40] sm:$0xff]
                  %2079 = vst [vmem:[%s2061 + $0x80] sm:$0xff] %v2078
                  %v2080 = vld [vmem:[%s2060 + $0x48] sm:$0xff]
                  %2081 = vst [vmem:[%s2061 + $0x88] sm:$0xff] %v2080
                  %v2082 = vld [vmem:[%s2060 + $0x50] sm:$0xff]
                  %2083 = vst [vmem:[%s2061 + $0xa0] sm:$0xff] %v2082
                  %v2084 = vld [vmem:[%s2060 + $0x58] sm:$0xff]
                  %2085 = vst [vmem:[%s2061 + $0xa8] sm:$0xff] %v2084
                  %v2086 = vld [vmem:[%s2060 + $0x60] sm:$0xff]
                  %2087 = vst [vmem:[%s2061 + $0xc0] sm:$0xff] %v2086
                  %v2088 = vld [vmem:[%s2060 + $0x68] sm:$0xff]
                  %2089 = vst [vmem:[%s2061 + $0xc8] sm:$0xff] %v2088
                  %v2090 = vld [vmem:[%s2060 + $0x70] sm:$0xff]
                  %2091 = vst [vmem:[%s2061 + $0xe0] sm:$0xff] %v2090
                  %v2092 = vld [vmem:[%s2060 + $0x78] sm:$0xff]
                  %2093 = vst [vmem:[%s2061 + $0xe8] sm:$0xff] %v2092
                  %v2094 = vld [vmem:[%s2060 + $0x80] sm:$0xff]
                  %2095 = vst [vmem:[%s2061 + $0x100] sm:$0xff] %v2094
                  %v2096 = vld [vmem:[%s2060 + $0x88] sm:$0xff]
                  %2097 = vst [vmem:[%s2061 + $0x108] sm:$0xff] %v2096
                  %v2098 = vld [vmem:[%s2060 + $0x90] sm:$0xff]
                  %2099 = vst [vmem:[%s2061 + $0x120] sm:$0xff] %v2098
                  %v2100 = vld [vmem:[%s2060 + $0x98] sm:$0xff]
                  %2101 = vst [vmem:[%s2061 + $0x128] sm:$0xff] %v2100
                  %v2102 = vld [vmem:[%s2060 + $0xa0] sm:$0xff]
                  %2103 = vst [vmem:[%s2061 + $0x140] sm:$0xff] %v2102
                  %v2104 = vld [vmem:[%s2060 + $0xa8] sm:$0xff]
                  %2105 = vst [vmem:[%s2061 + $0x148] sm:$0xff] %v2104
                  %v2106 = vld [vmem:[%s2060 + $0xb0] sm:$0xff]
                  %2107 = vst [vmem:[%s2061 + $0x160] sm:$0xff] %v2106
                  %v2108 = vld [vmem:[%s2060 + $0xb8] sm:$0xff]
                  %2109 = vst [vmem:[%s2061 + $0x168] sm:$0xff] %v2108
                  %v2110 = vld [vmem:[%s2060 + $0xc0] sm:$0xff]
                  %2111 = vst [vmem:[%s2061 + $0x180] sm:$0xff] %v2110
                  %v2112 = vld [vmem:[%s2060 + $0xc8] sm:$0xff]
                  %2113 = vst [vmem:[%s2061 + $0x188] sm:$0xff] %v2112
                  %v2114 = vld [vmem:[%s2060 + $0xd0] sm:$0xff]
                  %2115 = vst [vmem:[%s2061 + $0x1a0] sm:$0xff] %v2114
                  %v2116 = vld [vmem:[%s2060 + $0xd8] sm:$0xff]
                  %2117 = vst [vmem:[%s2061 + $0x1a8] sm:$0xff] %v2116
                  %v2118 = vld [vmem:[%s2060 + $0xe0] sm:$0xff]
                  %2119 = vst [vmem:[%s2061 + $0x1c0] sm:$0xff] %v2118
                  %v2120 = vld [vmem:[%s2060 + $0xe8] sm:$0xff]
                  %2121 = vst [vmem:[%s2061 + $0x1c8] sm:$0xff] %v2120
                  %v2122 = vld [vmem:[%s2060 + $0xf0] sm:$0xff]
                  %2123 = vst [vmem:[%s2061 + $0x1e0] sm:$0xff] %v2122
                  %v2124 = vld [vmem:[%s2060 + $0xf8] sm:$0xff]
                  %2125 = vst [vmem:[%s2061 + $0x1e8] sm:$0xff] %v2124
                $region109: #{run.5} parent=103 // loop_footer
                  %s2059 = sadd.s32 1, %s2055
                $region110: #{run.5} parent=103 // loop_footer_branch
                  %2054 = sbr.rel target = $region106
                $region111: #{run.5} parent=103 // loop_exit
                  _
              $region104: #{run.5} parent=88 // pred_fallthru
                _
              // Predicated region
              $region112: #{run.5} parent=88 // pred_check
                _
              $region113: #{run.5} parent=88 // pred_check_branch
                %2127 = sbr.rel target = $region115
              $region114: #{run.5} parent=88 // pred_region
                _
              $region115: #{run.5} parent=88 // pred_fallthru
                _
            $region89: #{run.5} parent=84 // pred_fallthru
              _
            // Predicated region
            $region90: #{run.5} parent=84 // pred_check
              _
            $region91: #{run.5} parent=84 // pred_check_branch
              %1977 = sbr.rel target = $region93
            $region92: #{run.5} parent=84 // pred_region
              %s1979 = ssub.s32 256, 1
              loop: start=0, step=1, limit=1
              $region94: #{run.5} parent=92 // loop_pre_header
                _
              $region95: #{run.5} parent=92 // loop_header
                %s1981 = sphi 0, %s1985
                %p1982 = scmp.ge.s32.totalorder %s1981, 1
                %s1986 = sphi %s1965, %s1965
                %s1987 = sphi %s1971, %s1971
              $region96: #{run.5} parent=92 // loop_header_branch
                %1984 = sbr.rel (%p1982) target = $region100
              $region97: #{run.5} parent=92 // loop_body
                %v1988 = vld [vmem:[%s1986] sm:%s1979]
                %1989 = vst [vmem:[%s1987] sm:%s1979] %v1988
                %v1990 = vld [vmem:[%s1986 + $0x8] sm:%s1979]
                %1991 = vst [vmem:[%s1987 + $0x8] sm:%s1979] %v1990
                %v1992 = vld [vmem:[%s1986 + $0x10] sm:%s1979]
                %1993 = vst [vmem:[%s1987 + $0x20] sm:%s1979] %v1992
                %v1994 = vld [vmem:[%s1986 + $0x18] sm:%s1979]
                %1995 = vst [vmem:[%s1987 + $0x28] sm:%s1979] %v1994
                %v1996 = vld [vmem:[%s1986 + $0x20] sm:%s1979]
                %1997 = vst [vmem:[%s1987 + $0x40] sm:%s1979] %v1996
                %v1998 = vld [vmem:[%s1986 + $0x28] sm:%s1979]
                %1999 = vst [vmem:[%s1987 + $0x48] sm:%s1979] %v1998
                %v2000 = vld [vmem:[%s1986 + $0x30] sm:%s1979]
                %2001 = vst [vmem:[%s1987 + $0x60] sm:%s1979] %v2000
                %v2002 = vld [vmem:[%s1986 + $0x38] sm:%s1979]
                %2003 = vst [vmem:[%s1987 + $0x68] sm:%s1979] %v2002
                %v2004 = vld [vmem:[%s1986 + $0x40] sm:%s1979]
                %2005 = vst [vmem:[%s1987 + $0x80] sm:%s1979] %v2004
                %v2006 = vld [vmem:[%s1986 + $0x48] sm:%s1979]
                %2007 = vst [vmem:[%s1987 + $0x88] sm:%s1979] %v2006
                %v2008 = vld [vmem:[%s1986 + $0x50] sm:%s1979]
                %2009 = vst [vmem:[%s1987 + $0xa0] sm:%s1979] %v2008
                %v2010 = vld [vmem:[%s1986 + $0x58] sm:%s1979]
                %2011 = vst [vmem:[%s1987 + $0xa8] sm:%s1979] %v2010
                %v2012 = vld [vmem:[%s1986 + $0x60] sm:%s1979]
                %2013 = vst [vmem:[%s1987 + $0xc0] sm:%s1979] %v2012
                %v2014 = vld [vmem:[%s1986 + $0x68] sm:%s1979]
                %2015 = vst [vmem:[%s1987 + $0xc8] sm:%s1979] %v2014
                %v2016 = vld [vmem:[%s1986 + $0x70] sm:%s1979]
                %2017 = vst [vmem:[%s1987 + $0xe0] sm:%s1979] %v2016
                %v2018 = vld [vmem:[%s1986 + $0x78] sm:%s1979]
                %2019 = vst [vmem:[%s1987 + $0xe8] sm:%s1979] %v2018
                %v2020 = vld [vmem:[%s1986 + $0x80] sm:%s1979]
                %2021 = vst [vmem:[%s1987 + $0x100] sm:%s1979] %v2020
                %v2022 = vld [vmem:[%s1986 + $0x88] sm:%s1979]
                %2023 = vst [vmem:[%s1987 + $0x108] sm:%s1979] %v2022
                %v2024 = vld [vmem:[%s1986 + $0x90] sm:%s1979]
                %2025 = vst [vmem:[%s1987 + $0x120] sm:%s1979] %v2024
                %v2026 = vld [vmem:[%s1986 + $0x98] sm:%s1979]
                %2027 = vst [vmem:[%s1987 + $0x128] sm:%s1979] %v2026
                %v2028 = vld [vmem:[%s1986 + $0xa0] sm:%s1979]
                %2029 = vst [vmem:[%s1987 + $0x140] sm:%s1979] %v2028
                %v2030 = vld [vmem:[%s1986 + $0xa8] sm:%s1979]
                %2031 = vst [vmem:[%s1987 + $0x148] sm:%s1979] %v2030
                %v2032 = vld [vmem:[%s1986 + $0xb0] sm:%s1979]
                %2033 = vst [vmem:[%s1987 + $0x160] sm:%s1979] %v2032
                %v2034 = vld [vmem:[%s1986 + $0xb8] sm:%s1979]
                %2035 = vst [vmem:[%s1987 + $0x168] sm:%s1979] %v2034
                %v2036 = vld [vmem:[%s1986 + $0xc0] sm:%s1979]
                %2037 = vst [vmem:[%s1987 + $0x180] sm:%s1979] %v2036
                %v2038 = vld [vmem:[%s1986 + $0xc8] sm:%s1979]
                %2039 = vst [vmem:[%s1987 + $0x188] sm:%s1979] %v2038
                %v2040 = vld [vmem:[%s1986 + $0xd0] sm:%s1979]
                %2041 = vst [vmem:[%s1987 + $0x1a0] sm:%s1979] %v2040
                %v2042 = vld [vmem:[%s1986 + $0xd8] sm:%s1979]
                %2043 = vst [vmem:[%s1987 + $0x1a8] sm:%s1979] %v2042
                %v2044 = vld [vmem:[%s1986 + $0xe0] sm:%s1979]
                %2045 = vst [vmem:[%s1987 + $0x1c0] sm:%s1979] %v2044
                %v2046 = vld [vmem:[%s1986 + $0xe8] sm:%s1979]
                %2047 = vst [vmem:[%s1987 + $0x1c8] sm:%s1979] %v2046
                %v2048 = vld [vmem:[%s1986 + $0xf0] sm:%s1979]
                %2049 = vst [vmem:[%s1987 + $0x1e0] sm:%s1979] %v2048
                %v2050 = vld [vmem:[%s1986 + $0xf8] sm:%s1979]
                %2051 = vst [vmem:[%s1987 + $0x1e8] sm:%s1979] %v2050
              $region98: #{run.5} parent=92 // loop_footer
                %s1985 = sadd.s32 1, %s1981
              $region99: #{run.5} parent=92 // loop_footer_branch
                %1980 = sbr.rel target = $region95
              $region100: #{run.5} parent=92 // loop_exit
                _
            $region93: #{run.5} parent=84 // pred_fallthru
              _
          $region85: #{run.5} parent=80 // pred_fallthru
            _
          %2128 = vnop
        $region81: #{run.5} parent=72 // pred_fallthru
          _
      $region73: #{run.5} parent=5 // pred_fallthru
        _
      %p2129 = scmp.le.s32.totalorder 2, %s10
      // Predicated region
      $region116: #{run.5} parent=5 // pred_check
        %p2130 = pneg %p2129
      $region117: #{run.5} parent=5 // pred_check_branch
        %2132 = sbr.rel (%p2130) target = $region119
      $region118: #{run.5} parent=5 // pred_region
        %s2133 = ssub.s32 %s10, 2
        // Predicated region
        $region120: #{run.5} parent=118 // pred_check
          %p2134 = pneg %p128
        $region121: #{run.5} parent=118 // pred_check_branch
          %2136 = sbr.rel (%p2134) target = $region123
        $region122: #{run.5} parent=118 // pred_region
          %s2137 = sand.u32 %s113, 1
          %s2138 = sand.u32 %s113, 1
          %s2139 = smul.addr %s2138, 256
          %s2140 = scalar_lea.vmem [#allocation3], %s2139
        $region123: #{run.5} parent=118 // pred_fallthru
          _
      $region119: #{run.5} parent=5 // pred_fallthru
        _
    $region6: #{run.5} parent=1 // loop_footer
      %s14 = sadd.s32 1, %s10
    $region7: #{run.5} parent=1 // loop_footer_branch
      %9 = sbr.rel target = $region3
    $region8: #{run.5} parent=1 // loop_exit
      _

</llo_original>
